<compile_context>
chip_gen: v7x
topology: tpu7x:2x2x1
jax: 0.10.0
libtpu: 0.0.40
codegen_flags: <defaults>
</compile_context>

<pallas_src>
import jax
import jax.numpy as jnp
from jax.experimental import pallas as pl
from jax.experimental.pallas import tpu as pltpu

INPUT_DIM = 32 * 32 * 3   # 3072
HIDDEN_DIM = 256
OUTPUT_DIM = 10           # number of classes (synthetic; CSV not available)
PAD_OUT = 128             # lane-dense padded class dimension
BN_EPS = 1e-5
TILE_B = 128              # batch tile: full MXU systolic row occupancy


def fnn_kernel(x_ref,
               w1_ref, b1_ref,
               w2_ref, b2_ref,
               w3_ref, b3_ref,
               w4_ref, b4_ref,
               o_ref):
    """One batch tile: 4 fused Linear layers (BN pre-folded, dropout identity)."""
    compute_dtype = w1_ref.dtype  # f32 or bf16; accumulation is always f32

    # Block 1: fc1 (+folded bn1) -> relu
    h = jnp.dot(x_ref[...], w1_ref[...], preferred_element_type=jnp.float32)
    h = jnp.maximum(h + b1_ref[...], 0.0)

    # Block 2: fc2 (+folded bn2) -> relu
    h = jnp.dot(h.astype(compute_dtype), w2_ref[...],
                preferred_element_type=jnp.float32)
    h = jnp.maximum(h + b2_ref[...], 0.0)

    # Block 3: fc3 (+folded bn3) -> relu
    h = jnp.dot(h.astype(compute_dtype), w3_ref[...],
                preferred_element_type=jnp.float32)
    h = jnp.maximum(h + b3_ref[...], 0.0)

    # Output projection: fc4 (class dim padded to 128 lanes)
    out = jnp.dot(h.astype(compute_dtype), w4_ref[...],
                  preferred_element_type=jnp.float32)
    out = out + b4_ref[...]
    o_ref[...] = out.astype(o_ref.dtype)


def fnn_forward(x, params, *, use_bf16=False, tile_b=TILE_B):
    """x: (B, INPUT_DIM) float32. params: dict of weights / BN stats."""
    B = x.shape[0]

    # --- Fold BatchNorm (running stats, eval mode) into weights / biases (f32).
    def fold(w, b, gamma, beta, mean, var):
        scale = gamma * jax.lax.rsqrt(var + BN_EPS)          # (H,)
        shift = beta - mean * scale                           # (H,)
        return w * scale[None, :], b * scale + shift

    w1, b1 = fold(params["w1"], params["b1"],
                  params["g1"], params["be1"], params["m1"], params["v1"])
    w2, b2 = fold(params["w2"], params["b2"],
                  params["g2"], params["be2"], params["m2"], params["v2"])
    w3, b3 = fold(params["w3"], params["b3"],
                  params["g3"], params["be3"], params["m3"], params["v3"])

    # Pad the final projection to a lane-dense (128-wide) output slab.
    w4 = jnp.zeros((HIDDEN_DIM, PAD_OUT), jnp.float32)
    w4 = w4.at[:, :OUTPUT_DIM].set(params["w4"])
    b4 = jnp.zeros((PAD_OUT,), jnp.float32).at[:OUTPUT_DIM].set(params["b4"])

    # --- dtype handling: fold in f32 first, then (optionally) cast to bf16.
    compute_dtype = jnp.bfloat16 if use_bf16 else jnp.float32
    x_c = x.astype(compute_dtype)
    w1c, w2c, w3c, w4c = (w.astype(compute_dtype) for w in (w1, w2, w3, w4))
    # Biases stay f32; they are added to the f32 MXU accumulator.
    b1r, b2r, b3r, b4r = (b.reshape(1, -1) for b in (b1, b2, b3, b4))

    # --- Pad the batch up to a multiple of the batch tile.
    b_pad = pl.cdiv(B, tile_b) * tile_b
    if b_pad != B:
        x_c = jnp.pad(x_c, ((0, b_pad - B), (0, 0)))

    grid = (b_pad // tile_b,)

    def const_spec(shape):
        # Weights / biases: same block every grid step -> stay VMEM-resident.
        return pl.BlockSpec(shape, lambda i: (0, 0))

    out_padded = pl.pallas_call(
        fnn_kernel,
        out_shape=jax.ShapeDtypeStruct((b_pad, PAD_OUT), jnp.float32),
        grid=grid,
        in_specs=[
            pl.BlockSpec((tile_b, INPUT_DIM), lambda i: (i, 0)),   # x tile
            const_spec((INPUT_DIM, HIDDEN_DIM)), const_spec((1, HIDDEN_DIM)),
            const_spec((HIDDEN_DIM, HIDDEN_DIM)), const_spec((1, HIDDEN_DIM)),
            const_spec((HIDDEN_DIM, HIDDEN_DIM)), const_spec((1, HIDDEN_DIM)),
            const_spec((HIDDEN_DIM, PAD_OUT)), const_spec((1, PAD_OUT)),
        ],
        out_specs=pl.BlockSpec((tile_b, PAD_OUT), lambda i: (i, 0)),
        compiler_params=pltpu.CompilerParams(
            dimension_semantics=("parallel",),   # shard batch tiles across TCs
            vmem_limit_bytes=32 << 20,           # safe headroom on v7x (64 MiB)
        ),
    )(x_c, w1c, b1r, w2c, b2r, w3c, b3r, w4c, b4r)

    return out_padded[:B, :OUTPUT_DIM]


def init_params(key):
    """Deterministic parameter init matching the module's shapes.

    Weights are stored as (in_features, out_features) so the kernel computes
    x @ W, equivalent to PyTorch's x @ W_pt.T.
    """
    ks = jax.random.split(key, 8)
    p = {}
    p["w1"] = jax.random.normal(ks[0], (INPUT_DIM, HIDDEN_DIM), jnp.float32) * 0.02
    p["b1"] = jax.random.normal(ks[1], (HIDDEN_DIM,), jnp.float32) * 0.01
    p["w2"] = jax.random.normal(ks[2], (HIDDEN_DIM, HIDDEN_DIM), jnp.float32) * 0.02
    p["b2"] = jax.random.normal(ks[3], (HIDDEN_DIM,), jnp.float32) * 0.01
    p["w3"] = jax.random.normal(ks[4], (HIDDEN_DIM, HIDDEN_DIM), jnp.float32) * 0.02
    p["b3"] = jax.random.normal(ks[5], (HIDDEN_DIM,), jnp.float32) * 0.01
    p["w4"] = jax.random.normal(ks[6], (HIDDEN_DIM, OUTPUT_DIM), jnp.float32) * 0.02
    p["b4"] = jax.random.normal(ks[7], (OUTPUT_DIM,), jnp.float32) * 0.01

    # BatchNorm1d params / running stats (deterministic, non-trivial values).
    for i in (1, 2, 3):
        idx = jnp.arange(HIDDEN_DIM, dtype=jnp.float32)
        p[f"g{i}"] = 1.0 + 0.01 * i + 0.001 * jnp.cos(idx)       # weight (gamma)
        p[f"be{i}"] = 0.05 * i + 0.001 * jnp.sin(idx)            # bias (beta)
        p[f"m{i}"] = 0.02 * i + 0.001 * jnp.sin(0.5 * idx)       # running_mean
        p[f"v{i}"] = 1.0 + 0.1 * i + 0.01 * jnp.cos(0.3 * idx)   # running_var
    return p


def reference_forward(x, params):
    """Pure-JAX reference (un-folded BN) for a sanity check."""
    def bn(h, g, b, m, v):
        return (h - m) * jax.lax.rsqrt(v + BN_EPS) * g + b

    h = x @ params["w1"] + params["b1"]
    h = jnp.maximum(bn(h, params["g1"], params["be1"], params["m1"], params["v1"]), 0.0)
    h = h @ params["w2"] + params["b2"]
    h = jnp.maximum(bn(h, params["g2"], params["be2"], params["m2"], params["v2"]), 0.0)
    h = h @ params["w3"] + params["b3"]
    h = jnp.maximum(bn(h, params["g3"], params["be3"], params["m3"], params["v3"]), 0.0)
    return h @ params["w4"] + params["b4"]


if __name__ == "__main__":
    key = jax.random.PRNGKey(0)
    k_x, k_p = jax.random.split(key)

    B = 8  # small batch; features match the module (32*32*3 flattened images)
    x = jax.random.normal(k_x, (B, INPUT_DIM), jnp.float32)
    params = init_params(k_p)
    ref = reference_forward(x, params)

    # f32 path (exact eval-mode semantics).
    out_f32 = jax.block_until_ready(fnn_forward(x, params, use_bf16=False))
    assert out_f32.shape == (B, OUTPUT_DIM)
    assert jnp.allclose(out_f32, ref, atol=5e-4, rtol=5e-4), "f32 mismatch vs. JAX reference"

    # bf16 path (HBM-roofline optimization on v6e/v7x); looser tolerance.
    out_bf16 = jax.block_until_ready(fnn_forward(x, params, use_bf16=True))
    assert out_bf16.shape == (B, OUTPUT_DIM)
    assert jnp.allclose(out_bf16, ref, atol=3e-2, rtol=3e-2), "bf16 mismatch vs. JAX reference"

    print("KERNEL_OK")
</pallas_src>

<mosaic_0001>
module attributes {stable_mosaic.version = 11 : i64} {
  func.func @fnn_kernel(%arg0: i32, %arg1: memref<128x3072xf32, #tpu.memory_space<vmem>>, %arg2: memref<3072x256xf32, #tpu.memory_space<vmem>>, %arg3: memref<1x256xf32, #tpu.memory_space<vmem>>, %arg4: memref<256x256xf32, #tpu.memory_space<vmem>>, %arg5: memref<1x256xf32, #tpu.memory_space<vmem>>, %arg6: memref<256x256xf32, #tpu.memory_space<vmem>>, %arg7: memref<1x256xf32, #tpu.memory_space<vmem>>, %arg8: memref<256x128xf32, #tpu.memory_space<vmem>>, %arg9: memref<1x128xf32, #tpu.memory_space<vmem>>, %arg10: memref<128x128xf32, #tpu.memory_space<vmem>>) attributes {dimension_semantics = [#tpu.dimension_semantics<parallel>], iteration_bounds = array<i64: 1>, scalar_prefetch = 0 : i64, scratch_operands = 0 : i64, tpu.core_type = #tpu.core_type<tc>, window_params = [{transform_indices = @transform_0, window_bounds = array<i64: 128, 3072>}, {pipeline_mode = #tpu.pipeline_mode<synchronous>, transform_indices = @transform_1, window_bounds = array<i64: 3072, 256>}, {pipeline_mode = #tpu.pipeline_mode<synchronous>, transform_indices = @transform_2, window_bounds = array<i64: 1, 256>}, {pipeline_mode = #tpu.pipeline_mode<synchronous>, transform_indices = @transform_3, window_bounds = array<i64: 256, 256>}, {pipeline_mode = #tpu.pipeline_mode<synchronous>, transform_indices = @transform_4, window_bounds = array<i64: 1, 256>}, {pipeline_mode = #tpu.pipeline_mode<synchronous>, transform_indices = @transform_5, window_bounds = array<i64: 256, 256>}, {pipeline_mode = #tpu.pipeline_mode<synchronous>, transform_indices = @transform_6, window_bounds = array<i64: 1, 256>}, {pipeline_mode = #tpu.pipeline_mode<synchronous>, transform_indices = @transform_7, window_bounds = array<i64: 256, 128>}, {pipeline_mode = #tpu.pipeline_mode<synchronous>, transform_indices = @transform_8, window_bounds = array<i64: 1, 128>}, {transform_indices = @transform_9, window_bounds = array<i64: 128, 128>}]} {
    %c0 = arith.constant 0 : index
    %c0_0 = arith.constant 0 : index
    %0 = vector.load %arg1[%c0, %c0_0] : memref<128x3072xf32, #tpu.memory_space<vmem>>, vector<128x3072xf32>
    %c0_1 = arith.constant 0 : index
    %c0_2 = arith.constant 0 : index
    %1 = vector.load %arg2[%c0_1, %c0_2] : memref<3072x256xf32, #tpu.memory_space<vmem>>, vector<3072x256xf32>
    %cst = arith.constant dense<0.000000e+00> : vector<128x256xf32>
    %2 = tpu.matmul %0, %1, %cst {dimension_numbers = #tpu.dot_dimension_numbers<[1], [0], [0], [1], [0, 0, 1, 1], [], []>} : vector<128x3072xf32>, vector<3072x256xf32>, vector<128x256xf32> -> vector<128x256xf32>
    %c0_3 = arith.constant 0 : index
    %c0_4 = arith.constant 0 : index
    %3 = vector.load %arg3[%c0_3, %c0_4] : memref<1x256xf32, #tpu.memory_space<vmem>>, vector<1x256xf32>
    %4 = vector.broadcast %3 : vector<1x256xf32> to vector<128x256xf32>
    %5 = arith.addf %2, %4 : vector<128x256xf32>
    %cst_5 = arith.constant 0.000000e+00 : f32
    %6 = vector.broadcast %cst_5 : f32 to vector<128x256xf32>
    %7 = arith.maximumf %5, %6 : vector<128x256xf32>
    %c0_6 = arith.constant 0 : index
    %c0_7 = arith.constant 0 : index
    %8 = vector.load %arg4[%c0_6, %c0_7] : memref<256x256xf32, #tpu.memory_space<vmem>>, vector<256x256xf32>
    %cst_8 = arith.constant dense<0.000000e+00> : vector<128x256xf32>
    %9 = tpu.matmul %7, %8, %cst_8 {dimension_numbers = #tpu.dot_dimension_numbers<[1], [0], [0], [1], [0, 0, 1, 1], [], []>} : vector<128x256xf32>, vector<256x256xf32>, vector<128x256xf32> -> vector<128x256xf32>
    %c0_9 = arith.constant 0 : index
    %c0_10 = arith.constant 0 : index
    %10 = vector.load %arg5[%c0_9, %c0_10] : memref<1x256xf32, #tpu.memory_space<vmem>>, vector<1x256xf32>
    %11 = vector.broadcast %10 : vector<1x256xf32> to vector<128x256xf32>
    %12 = arith.addf %9, %11 : vector<128x256xf32>
    %cst_11 = arith.constant 0.000000e+00 : f32
    %13 = vector.broadcast %cst_11 : f32 to vector<128x256xf32>
    %14 = arith.maximumf %12, %13 : vector<128x256xf32>
    %c0_12 = arith.constant 0 : index
    %c0_13 = arith.constant 0 : index
    %15 = vector.load %arg6[%c0_12, %c0_13] : memref<256x256xf32, #tpu.memory_space<vmem>>, vector<256x256xf32>
    %cst_14 = arith.constant dense<0.000000e+00> : vector<128x256xf32>
    %16 = tpu.matmul %14, %15, %cst_14 {dimension_numbers = #tpu.dot_dimension_numbers<[1], [0], [0], [1], [0, 0, 1, 1], [], []>} : vector<128x256xf32>, vector<256x256xf32>, vector<128x256xf32> -> vector<128x256xf32>
    %c0_15 = arith.constant 0 : index
    %c0_16 = arith.constant 0 : index
    %17 = vector.load %arg7[%c0_15, %c0_16] : memref<1x256xf32, #tpu.memory_space<vmem>>, vector<1x256xf32>
    %18 = vector.broadcast %17 : vector<1x256xf32> to vector<128x256xf32>
    %19 = arith.addf %16, %18 : vector<128x256xf32>
    %cst_17 = arith.constant 0.000000e+00 : f32
    %20 = vector.broadcast %cst_17 : f32 to vector<128x256xf32>
    %21 = arith.maximumf %19, %20 : vector<128x256xf32>
    %c0_18 = arith.constant 0 : index
    %c0_19 = arith.constant 0 : index
    %22 = vector.load %arg8[%c0_18, %c0_19] : memref<256x128xf32, #tpu.memory_space<vmem>>, vector<256x128xf32>
    %cst_20 = arith.constant dense<0.000000e+00> : vector<128x128xf32>
    %23 = tpu.matmul %21, %22, %cst_20 {dimension_numbers = #tpu.dot_dimension_numbers<[1], [0], [0], [1], [0, 0, 1, 1], [], []>} : vector<128x256xf32>, vector<256x128xf32>, vector<128x128xf32> -> vector<128x128xf32>
    %c0_21 = arith.constant 0 : index
    %c0_22 = arith.constant 0 : index
    %24 = vector.load %arg9[%c0_21, %c0_22] : memref<1x128xf32, #tpu.memory_space<vmem>>, vector<1x128xf32>
    %25 = vector.broadcast %24 : vector<1x128xf32> to vector<128x128xf32>
    %26 = arith.addf %23, %25 : vector<128x128xf32>
    %c0_23 = arith.constant 0 : index
    %c0_24 = arith.constant 0 : index
    %27 = vector.load %arg10[%c0_23, %c0_24] : memref<128x128xf32, #tpu.memory_space<vmem>>, vector<128x128xf32>
    tpu.vector_store %arg10[%c0_23, %c0_24], %26 {strides = array<i32>} : memref<128x128xf32, #tpu.memory_space<vmem>>, vector<128x128xf32>,
    return
  }
  func.func @transform_0(%arg0: i32) -> (i32, i32) {
    %c0_i32 = arith.constant 0 : i32
    %c0_i32_0 = arith.constant 0 : i32
    return %arg0, %c0_i32 : i32, i32
  }
  func.func @transform_1(%arg0: i32) -> (i32, i32) {
    %c0_i32 = arith.constant 0 : i32
    %c0_i32_0 = arith.constant 0 : i32
    %c0_i32_1 = arith.constant 0 : i32
    return %c0_i32, %c0_i32_0 : i32, i32
  }
  func.func @transform_2(%arg0: i32) -> (i32, i32) {
    %c0_i32 = arith.constant 0 : i32
    %c0_i32_0 = arith.constant 0 : i32
    %c0_i32_1 = arith.constant 0 : i32
    return %c0_i32, %c0_i32_0 : i32, i32
  }
  func.func @transform_3(%arg0: i32) -> (i32, i32) {
    %c0_i32 = arith.constant 0 : i32
    %c0_i32_0 = arith.constant 0 : i32
    %c0_i32_1 = arith.constant 0 : i32
    return %c0_i32, %c0_i32_0 : i32, i32
  }
  func.func @transform_4(%arg0: i32) -> (i32, i32) {
    %c0_i32 = arith.constant 0 : i32
    %c0_i32_0 = arith.constant 0 : i32
    %c0_i32_1 = arith.constant 0 : i32
    return %c0_i32, %c0_i32_0 : i32, i32
  }
  func.func @transform_5(%arg0: i32) -> (i32, i32) {
    %c0_i32 = arith.constant 0 : i32
    %c0_i32_0 = arith.constant 0 : i32
    %c0_i32_1 = arith.constant 0 : i32
    return %c0_i32, %c0_i32_0 : i32, i32
  }
  func.func @transform_6(%arg0: i32) -> (i32, i32) {
    %c0_i32 = arith.constant 0 : i32
    %c0_i32_0 = arith.constant 0 : i32
    %c0_i32_1 = arith.constant 0 : i32
    return %c0_i32, %c0_i32_0 : i32, i32
  }
  func.func @transform_7(%arg0: i32) -> (i32, i32) {
    %c0_i32 = arith.constant 0 : i32
    %c0_i32_0 = arith.constant 0 : i32
    %c0_i32_1 = arith.constant 0 : i32
    return %c0_i32, %c0_i32_0 : i32, i32
  }
  func.func @transform_8(%arg0: i32) -> (i32, i32) {
    %c0_i32 = arith.constant 0 : i32
    %c0_i32_0 = arith.constant 0 : i32
    %c0_i32_1 = arith.constant 0 : i32
    return %c0_i32, %c0_i32_0 : i32, i32
  }
  func.func @transform_9(%arg0: i32) -> (i32, i32) {
    %c0_i32 = arith.constant 0 : i32
    %c0_i32_0 = arith.constant 0 : i32
    return %arg0, %c0_i32 : i32, i32
  }
}

</mosaic_0001>

<llo_original>
// kernel: tpu_custom_call.1
$region0: #{tpu_custom_call.1}
  #allocation0 [shape = 'u32[]', space=smem, size = 0x4, offset = 0x4, fixed_abs, tag = 'smem constant byte address 0x4 - core index']
  #allocation1 [shape = 'u32[144,128]{1,0:T(1,128)}', space=vmem, size = 0x12000, scoped, tag = 'internal scratch']
  %s0 = inlined_call_operand.hbm [shape: f32[128,3072], index: 0, kind: input, shape index: {}]
  %s1 = inlined_call_operand.hbm [shape: f32[3072,256], index: 1, kind: input, shape index: {}]
  %s2 = inlined_call_operand.hbm [shape: f32[1,256], index: 2, kind: input, shape index: {}]
  %s3 = inlined_call_operand.hbm [shape: f32[256,256], index: 3, kind: input, shape index: {}]
  %s4 = inlined_call_operand.hbm [shape: f32[1,256], index: 4, kind: input, shape index: {}]
  %s5 = inlined_call_operand.hbm [shape: f32[256,256], index: 5, kind: input, shape index: {}]
  %s6 = inlined_call_operand.hbm [shape: f32[1,256], index: 6, kind: input, shape index: {}]
  %s7 = inlined_call_operand.hbm [shape: f32[256,128], index: 7, kind: input, shape index: {}]
  %s8 = inlined_call_operand.hbm [shape: f32[1,128], index: 8, kind: input, shape index: {}]
  %s9 = inlined_call_operand.hbm [shape: f32[128,128], index: 9, kind: output, shape index: {}]
  %s10 = sld [smem:[#allocation0]]
  $region82: #{tpu_custom_call.1} parent=0
    _
  %s12 = ssub.s32 1, %s10
  %s13 = scalar_select 0, %s12, %s10
  $region1: #{tpu_custom_call.1} parent=0
    #allocation2 [shape = 'u8[1572864]{0}', space=vmem, size = 0x180000, scoped, tag = 'input window, operand 0, single buffered']
    #allocation3 [shape = 's32[1]{0}', space=sflag, size = 0x4, scoped, tag = 'scoped memory for tpu_custom_call.1']
    #allocation4 [shape = 's32[1]{0}', space=sflag, size = 0x4, scoped, tag = 'scoped memory for tpu_custom_call.1']
    #allocation5 [shape = 'u8[3145728]{0}', space=vmem, size = 0x300000, scoped, tag = 'input window, operand 1, single buffered']
    #allocation6 [shape = 's32[1]{0}', space=sflag, size = 0x4, scoped, tag = 'scoped memory for tpu_custom_call.1']
    #allocation7 [shape = 'u8[1024]{0}', space=vmem, size = 0x400, scoped, tag = 'input window, operand 2, single buffered']
    #allocation8 [shape = 'u8[262144]{0}', space=vmem, size = 0x40000, scoped, tag = 'input window, operand 3, single buffered']
    #allocation9 [shape = 's32[1]{0}', space=sflag, size = 0x4, scoped, tag = 'scoped memory for tpu_custom_call.1']
    #allocation10 [shape = 'u8[1024]{0}', space=vmem, size = 0x400, scoped, tag = 'input window, operand 4, single buffered']
    #allocation11 [shape = 'u8[262144]{0}', space=vmem, size = 0x40000, scoped, tag = 'input window, operand 5, single buffered']
    #allocation12 [shape = 's32[1]{0}', space=sflag, size = 0x4, scoped, tag = 'scoped memory for tpu_custom_call.1']
    #allocation13 [shape = 'u8[1024]{0}', space=vmem, size = 0x400, scoped, tag = 'input window, operand 6, single buffered']
    #allocation14 [shape = 'u8[131072]{0}', space=vmem, size = 0x20000, scoped, tag = 'input window, operand 7, single buffered']
    #allocation15 [shape = 's32[1]{0}', space=sflag, size = 0x4, scoped, tag = 'scoped memory for tpu_custom_call.1']
    #allocation16 [shape = 'u8[512]{0}', space=vmem, size = 0x400, scoped, tag = 'input window, operand 8, single buffered']
    #allocation17 [shape = 'u8[65536]{0}', space=vmem, size = 0x10000, scoped, tag = 'output window, operand 0, single buffered']
    %14 = vsyncpa [#allocation3], 0
    %15 = vsyncpa [#allocation6], 0
    %16 = vsyncpa [#allocation9], 0
    %17 = vsyncpa [#allocation12], 0
    %18 = vsyncpa [#allocation15], 0
    %19 = vsyncpa [#allocation4], 0
    // Predicated region
    $region2: #{tpu_custom_call.1} parent=1 // pred_check
      _
    $region3: #{tpu_custom_call.1} parent=1 // pred_check_branch
      %21 = sbr.rel (0) target = $region5
    $region4: #{tpu_custom_call.1} parent=1 // pred_region
      %s23 = ssub.s32 49152, 49152
      %24 = vsyncadd [#allocation3], %s23
      %s25 = sshll.u32 [#allocation2], 4
      %s26 = int_to_ptr.vmem [resolvable:$true] %s25
      %31 = dma.hbm_to_vmem [thread:$0]  %s0, 49152, %s26, [#allocation3], 3072, 3072, 192
    $region5: #{tpu_custom_call.1} parent=1 // pred_fallthru
      _
    // Predicated region
    $region6: #{tpu_custom_call.1} parent=1 // pred_check
      _
    $region7: #{tpu_custom_call.1} parent=1 // pred_check_branch
      %33 = sbr.rel (0) target = $region9
    $region8: #{tpu_custom_call.1} parent=1 // pred_region
      %s35 = ssub.s32 98304, 98304
      %36 = vsyncadd [#allocation6], %s35
      %s37 = sshll.u32 [#allocation5], 4
      %s38 = int_to_ptr.vmem [resolvable:$true] %s37
      %43 = dma.hbm_to_vmem [thread:$0]  %s1, 98304, %s38, [#allocation6], 256, 256, 16
    $region9: #{tpu_custom_call.1} parent=1 // pred_fallthru
      _
    // Predicated region
    $region10: #{tpu_custom_call.1} parent=1 // pred_check
      _
    $region11: #{tpu_custom_call.1} parent=1 // pred_check_branch
      %45 = sbr.rel (0) target = $region13
    $region12: #{tpu_custom_call.1} parent=1 // pred_region
      %s47 = ssub.s32 32, 32
      %48 = vsyncadd [#allocation6], %s47
      %s50 = sshll.u32 [#allocation7], 4
      %s51 = int_to_ptr.vmem [resolvable:$true] %s50
      %53 = dma.hbm_to_vmem [thread:$0]  %s2, 32, %s51, [#allocation6]
    $region13: #{tpu_custom_call.1} parent=1 // pred_fallthru
      _
    // Predicated region
    $region14: #{tpu_custom_call.1} parent=1 // pred_check
      _
    $region15: #{tpu_custom_call.1} parent=1 // pred_check_branch
      %55 = sbr.rel (0) target = $region17
    $region16: #{tpu_custom_call.1} parent=1 // pred_region
      %s57 = ssub.s32 8192, 8192
      %58 = vsyncadd [#allocation9], %s57
      %s59 = sshll.u32 [#allocation8], 4
      %s60 = int_to_ptr.vmem [resolvable:$true] %s59
      %65 = dma.hbm_to_vmem [thread:$0]  %s3, 8192, %s60, [#allocation9], 256, 256, 16
    $region17: #{tpu_custom_call.1} parent=1 // pred_fallthru
      _
    // Predicated region
    $region18: #{tpu_custom_call.1} parent=1 // pred_check
      _
    $region19: #{tpu_custom_call.1} parent=1 // pred_check_branch
      %67 = sbr.rel (0) target = $region21
    $region20: #{tpu_custom_call.1} parent=1 // pred_region
      %s69 = ssub.s32 32, 32
      %70 = vsyncadd [#allocation9], %s69
      %s72 = sshll.u32 [#allocation10], 4
      %s73 = int_to_ptr.vmem [resolvable:$true] %s72
      %75 = dma.hbm_to_vmem [thread:$0]  %s4, 32, %s73, [#allocation9]
    $region21: #{tpu_custom_call.1} parent=1 // pred_fallthru
      _
    // Predicated region
    $region22: #{tpu_custom_call.1} parent=1 // pred_check
      _
    $region23: #{tpu_custom_call.1} parent=1 // pred_check_branch
      %77 = sbr.rel (0) target = $region25
    $region24: #{tpu_custom_call.1} parent=1 // pred_region
      %s79 = ssub.s32 8192, 8192
      %80 = vsyncadd [#allocation12], %s79
      %s81 = sshll.u32 [#allocation11], 4
      %s82 = int_to_ptr.vmem [resolvable:$true] %s81
      %87 = dma.hbm_to_vmem [thread:$0]  %s5, 8192, %s82, [#allocation12], 256, 256, 16
    $region25: #{tpu_custom_call.1} parent=1 // pred_fallthru
      _
    // Predicated region
    $region26: #{tpu_custom_call.1} parent=1 // pred_check
      _
    $region27: #{tpu_custom_call.1} parent=1 // pred_check_branch
      %89 = sbr.rel (0) target = $region29
    $region28: #{tpu_custom_call.1} parent=1 // pred_region
      %s91 = ssub.s32 32, 32
      %92 = vsyncadd [#allocation12], %s91
      %s94 = sshll.u32 [#allocation13], 4
      %s95 = int_to_ptr.vmem [resolvable:$true] %s94
      %97 = dma.hbm_to_vmem [thread:$0]  %s6, 32, %s95, [#allocation12]
    $region29: #{tpu_custom_call.1} parent=1 // pred_fallthru
      _
    // Predicated region
    $region30: #{tpu_custom_call.1} parent=1 // pred_check
      _
    $region31: #{tpu_custom_call.1} parent=1 // pred_check_branch
      %99 = sbr.rel (0) target = $region33
    $region32: #{tpu_custom_call.1} parent=1 // pred_region
      %s101 = ssub.s32 4096, 4096
      %102 = vsyncadd [#allocation15], %s101
      %s103 = sshll.u32 [#allocation14], 4
      %s104 = int_to_ptr.vmem [resolvable:$true] %s103
      %109 = dma.hbm_to_vmem [thread:$0]  %s7, 4096, %s104, [#allocation15], 128, 128, 8
    $region33: #{tpu_custom_call.1} parent=1 // pred_fallthru
      _
    // Predicated region
    $region34: #{tpu_custom_call.1} parent=1 // pred_check
      _
    $region35: #{tpu_custom_call.1} parent=1 // pred_check_branch
      %111 = sbr.rel (0) target = $region37
    $region36: #{tpu_custom_call.1} parent=1 // pred_region
      %s113 = ssub.s32 16, 16
      %114 = vsyncadd [#allocation15], %s113
      %s116 = sshll.u32 [#allocation16], 4
      %s117 = int_to_ptr.vmem [resolvable:$true] %s116
      %119 = dma.hbm_to_vmem [thread:$0]  %s8, 16, %s117, [#allocation15]
    $region37: #{tpu_custom_call.1} parent=1 // pred_fallthru
      _
    // Predicated region
    $region38: #{tpu_custom_call.1} parent=1 // pred_check
      _
    $region39: #{tpu_custom_call.1} parent=1 // pred_check_branch
      %121 = sbr.rel (0) target = $region41
    $region40: #{tpu_custom_call.1} parent=1 // pred_region
      %122 = dma.done [#allocation3], 49152
    $region41: #{tpu_custom_call.1} parent=1 // pred_fallthru
      _
    // Predicated region
    $region42: #{tpu_custom_call.1} parent=1 // pred_check
      _
    $region43: #{tpu_custom_call.1} parent=1 // pred_check_branch
      %124 = sbr.rel (0) target = $region45
    $region44: #{tpu_custom_call.1} parent=1 // pred_region
      %125 = dma.done [#allocation6], 98304
    $region45: #{tpu_custom_call.1} parent=1 // pred_fallthru
      _
    // Predicated region
    $region46: #{tpu_custom_call.1} parent=1 // pred_check
      _
    $region47: #{tpu_custom_call.1} parent=1 // pred_check_branch
      %127 = sbr.rel (0) target = $region49
    $region48: #{tpu_custom_call.1} parent=1 // pred_region
      %128 = dma.done [#allocation6], 32
    $region49: #{tpu_custom_call.1} parent=1 // pred_fallthru
      _
    // Predicated region
    $region50: #{tpu_custom_call.1} parent=1 // pred_check
      _
    $region51: #{tpu_custom_call.1} parent=1 // pred_check_branch
      %130 = sbr.rel (0) target = $region53
    $region52: #{tpu_custom_call.1} parent=1 // pred_region
      %131 = dma.done [#allocation9], 8192
    $region53: #{tpu_custom_call.1} parent=1 // pred_fallthru
      _
    // Predicated region
    $region54: #{tpu_custom_call.1} parent=1 // pred_check
      _
    $region55: #{tpu_custom_call.1} parent=1 // pred_check_branch
      %133 = sbr.rel (0) target = $region57
    $region56: #{tpu_custom_call.1} parent=1 // pred_region
      %134 = dma.done [#allocation9], 32
    $region57: #{tpu_custom_call.1} parent=1 // pred_fallthru
      _
    // Predicated region
    $region58: #{tpu_custom_call.1} parent=1 // pred_check
      _
    $region59: #{tpu_custom_call.1} parent=1 // pred_check_branch
      %136 = sbr.rel (0) target = $region61
    $region60: #{tpu_custom_call.1} parent=1 // pred_region
      %137 = dma.done [#allocation12], 8192
    $region61: #{tpu_custom_call.1} parent=1 // pred_fallthru
      _
    // Predicated region
    $region62: #{tpu_custom_call.1} parent=1 // pred_check
      _
    $region63: #{tpu_custom_call.1} parent=1 // pred_check_branch
      %139 = sbr.rel (0) target = $region65
    $region64: #{tpu_custom_call.1} parent=1 // pred_region
      %140 = dma.done [#allocation12], 32
    $region65: #{tpu_custom_call.1} parent=1 // pred_fallthru
      _
    // Predicated region
    $region66: #{tpu_custom_call.1} parent=1 // pred_check
      _
    $region67: #{tpu_custom_call.1} parent=1 // pred_check_branch
      %142 = sbr.rel (0) target = $region69
    $region68: #{tpu_custom_call.1} parent=1 // pred_region
      %143 = dma.done [#allocation15], 4096
    $region69: #{tpu_custom_call.1} parent=1 // pred_fallthru
      _
    // Predicated region
    $region70: #{tpu_custom_call.1} parent=1 // pred_check
      _
    $region71: #{tpu_custom_call.1} parent=1 // pred_check_branch
      %145 = sbr.rel (0) target = $region73
    $region72: #{tpu_custom_call.1} parent=1 // pred_region
      %146 = dma.done [#allocation15], 16
    $region73: #{tpu_custom_call.1} parent=1 // pred_fallthru
      _
    %v147 = vld [vmem:[#allocation2] sm:$0xff]
    %v148 = vld [vmem:[#allocation2 + $0x8] sm:$0xff]
    %v149 = vld [vmem:[#allocation2 + $0x10] sm:$0xff]
    %v150 = vld [vmem:[#allocation2 + $0x18] sm:$0xff]
    %v151 = vld [vmem:[#allocation2 + $0x20] sm:$0xff]
    %v152 = vld [vmem:[#allocation2 + $0x28] sm:$0xff]
    %v153 = vld [vmem:[#allocation2 + $0x30] sm:$0xff]
    %v154 = vld [vmem:[#allocation2 + $0x38] sm:$0xff]
    %v155 = vld [vmem:[#allocation2 + $0x40] sm:$0xff]
    %v156 = vld [vmem:[#allocation2 + $0x48] sm:$0xff]
    %v157 = vld [vmem:[#allocation2 + $0x50] sm:$0xff]
    %v158 = vld [vmem:[#allocation2 + $0x58] sm:$0xff]
    %v159 = vld [vmem:[#allocation2 + $0x60] sm:$0xff]
    %v160 = vld [vmem:[#allocation2 + $0x68] sm:$0xff]
    %v161 = vld [vmem:[#allocation2 + $0x70] sm:$0xff]
    %v162 = vld [vmem:[#allocation2 + $0x78] sm:$0xff]
    %v163 = vld [vmem:[#allocation2 + $0x80] sm:$0xff]
    %v164 = vld [vmem:[#allocation2 + $0x88] sm:$0xff]
    %v165 = vld [vmem:[#allocation2 + $0x90] sm:$0xff]
    %v166 = vld [vmem:[#allocation2 + $0x98] sm:$0xff]
    %v167 = vld [vmem:[#allocation2 + $0xa0] sm:$0xff]
    %v168 = vld [vmem:[#allocation2 + $0xa8] sm:$0xff]
    %v169 = vld [vmem:[#allocation2 + $0xb0] sm:$0xff]
    %v170 = vld [vmem:[#allocation2 + $0xb8] sm:$0xff]
    %v171 = vld [vmem:[#allocation2 + $0xc0] sm:$0xff]
    %v172 = vld [vmem:[#allocation2 + $0xc8] sm:$0xff]
    %v173 = vld [vmem:[#allocation2 + $0xd0] sm:$0xff]
    %v174 = vld [vmem:[#allocation2 + $0xd8] sm:$0xff]
    %v175 = vld [vmem:[#allocation2 + $0xe0] sm:$0xff]
    %v176 = vld [vmem:[#allocation2 + $0xe8] sm:$0xff]
    %v177 = vld [vmem:[#allocation2 + $0xf0] sm:$0xff]
    %v178 = vld [vmem:[#allocation2 + $0xf8] sm:$0xff]
    %v179 = vld [vmem:[#allocation2 + $0x100] sm:$0xff]
    %v180 = vld [vmem:[#allocation2 + $0x108] sm:$0xff]
    %v181 = vld [vmem:[#allocation2 + $0x110] sm:$0xff]
    %v182 = vld [vmem:[#allocation2 + $0x118] sm:$0xff]
    %v183 = vld [vmem:[#allocation2 + $0x120] sm:$0xff]
    %v184 = vld [vmem:[#allocation2 + $0x128] sm:$0xff]
    %v185 = vld [vmem:[#allocation2 + $0x130] sm:$0xff]
    %v186 = vld [vmem:[#allocation2 + $0x138] sm:$0xff]
    %v187 = vld [vmem:[#allocation2 + $0x140] sm:$0xff]
    %v188 = vld [vmem:[#allocation2 + $0x148] sm:$0xff]
    %v189 = vld [vmem:[#allocation2 + $0x150] sm:$0xff]
    %v190 = vld [vmem:[#allocation2 + $0x158] sm:$0xff]
    %v191 = vld [vmem:[#allocation2 + $0x160] sm:$0xff]
    %v192 = vld [vmem:[#allocation2 + $0x168] sm:$0xff]
    %v193 = vld [vmem:[#allocation2 + $0x170] sm:$0xff]
    %v194 = vld [vmem:[#allocation2 + $0x178] sm:$0xff]
    %v195 = vld [vmem:[#allocation2 + $0x180] sm:$0xff]
    %v196 = vld [vmem:[#allocation2 + $0x188] sm:$0xff]
    %v197 = vld [vmem:[#allocation2 + $0x190] sm:$0xff]
    %v198 = vld [vmem:[#allocation2 + $0x198] sm:$0xff]
    %v199 = vld [vmem:[#allocation2 + $0x1a0] sm:$0xff]
    %v200 = vld [vmem:[#allocation2 + $0x1a8] sm:$0xff]
    %v201 = vld [vmem:[#allocation2 + $0x1b0] sm:$0xff]
    %v202 = vld [vmem:[#allocation2 + $0x1b8] sm:$0xff]
    %v203 = vld [vmem:[#allocation2 + $0x1c0] sm:$0xff]
    %v204 = vld [vmem:[#allocation2 + $0x1c8] sm:$0xff]
    %v205 = vld [vmem:[#allocation2 + $0x1d0] sm:$0xff]
    %v206 = vld [vmem:[#allocation2 + $0x1d8] sm:$0xff]
    %v207 = vld [vmem:[#allocation2 + $0x1e0] sm:$0xff]
    %v208 = vld [vmem:[#allocation2 + $0x1e8] sm:$0xff]
    %v209 = vld [vmem:[#allocation2 + $0x1f0] sm:$0xff]
    %v210 = vld [vmem:[#allocation2 + $0x1f8] sm:$0xff]
    %v211 = vld [vmem:[#allocation2 + $0x200] sm:$0xff]
    %v212 = vld [vmem:[#allocation2 + $0x208] sm:$0xff]
    %v213 = vld [vmem:[#allocation2 + $0x210] sm:$0xff]
    %v214 = vld [vmem:[#allocation2 + $0x218] sm:$0xff]
    %v215 = vld [vmem:[#allocation2 + $0x220] sm:$0xff]
    %v216 = vld [vmem:[#allocation2 + $0x228] sm:$0xff]
    %v217 = vld [vmem:[#allocation2 + $0x230] sm:$0xff]
    %v218 = vld [vmem:[#allocation2 + $0x238] sm:$0xff]
    %v219 = vld [vmem:[#allocation2 + $0x240] sm:$0xff]
    %v220 = vld [vmem:[#allocation2 + $0x248] sm:$0xff]
    %v221 = vld [vmem:[#allocation2 + $0x250] sm:$0xff]
    %v222 = vld [vmem:[#allocation2 + $0x258] sm:$0xff]
    %v223 = vld [vmem:[#allocation2 + $0x260] sm:$0xff]
    %v224 = vld [vmem:[#allocation2 + $0x268] sm:$0xff]
    %v225 = vld [vmem:[#allocation2 + $0x270] sm:$0xff]
    %v226 = vld [vmem:[#allocation2 + $0x278] sm:$0xff]
    %v227 = vld [vmem:[#allocation2 + $0x280] sm:$0xff]
    %v228 = vld [vmem:[#allocation2 + $0x288] sm:$0xff]
    %v229 = vld [vmem:[#allocation2 + $0x290] sm:$0xff]
    %v230 = vld [vmem:[#allocation2 + $0x298] sm:$0xff]
    %v231 = vld [vmem:[#allocation2 + $0x2a0] sm:$0xff]
    %v232 = vld [vmem:[#allocation2 + $0x2a8] sm:$0xff]
    %v233 = vld [vmem:[#allocation2 + $0x2b0] sm:$0xff]
    %v234 = vld [vmem:[#allocation2 + $0x2b8] sm:$0xff]
    %v235 = vld [vmem:[#allocation2 + $0x2c0] sm:$0xff]
    %v236 = vld [vmem:[#allocation2 + $0x2c8] sm:$0xff]
    %v237 = vld [vmem:[#allocation2 + $0x2d0] sm:$0xff]
    %v238 = vld [vmem:[#allocation2 + $0x2d8] sm:$0xff]
    %v239 = vld [vmem:[#allocation2 + $0x2e0] sm:$0xff]
    %v240 = vld [vmem:[#allocation2 + $0x2e8] sm:$0xff]
    %v241 = vld [vmem:[#allocation2 + $0x2f0] sm:$0xff]
    %v242 = vld [vmem:[#allocation2 + $0x2f8] sm:$0xff]
    %v243 = vld [vmem:[#allocation2 + $0x300] sm:$0xff]
    %v244 = vld [vmem:[#allocation2 + $0x308] sm:$0xff]
    %v245 = vld [vmem:[#allocation2 + $0x310] sm:$0xff]
    %v246 = vld [vmem:[#allocation2 + $0x318] sm:$0xff]
    %v247 = vld [vmem:[#allocation2 + $0x320] sm:$0xff]
    %v248 = vld [vmem:[#allocation2 + $0x328] sm:$0xff]
    %v249 = vld [vmem:[#allocation2 + $0x330] sm:$0xff]
    %v250 = vld [vmem:[#allocation2 + $0x338] sm:$0xff]
    %v251 = vld [vmem:[#allocation2 + $0x340] sm:$0xff]
    %v252 = vld [vmem:[#allocation2 + $0x348] sm:$0xff]
    %v253 = vld [vmem:[#allocation2 + $0x350] sm:$0xff]
    %v254 = vld [vmem:[#allocation2 + $0x358] sm:$0xff]
    %v255 = vld [vmem:[#allocation2 + $0x360] sm:$0xff]
    %v256 = vld [vmem:[#allocation2 + $0x368] sm:$0xff]
    %v257 = vld [vmem:[#allocation2 + $0x370] sm:$0xff]
    %v258 = vld [vmem:[#allocation2 + $0x378] sm:$0xff]
    %v259 = vld [vmem:[#allocation2 + $0x380] sm:$0xff]
    %v260 = vld [vmem:[#allocation2 + $0x388] sm:$0xff]
    %v261 = vld [vmem:[#allocation2 + $0x390] sm:$0xff]
    %v262 = vld [vmem:[#allocation2 + $0x398] sm:$0xff]
    %v263 = vld [vmem:[#allocation2 + $0x3a0] sm:$0xff]
    %v264 = vld [vmem:[#allocation2 + $0x3a8] sm:$0xff]
    %v265 = vld [vmem:[#allocation2 + $0x3b0] sm:$0xff]
    %v266 = vld [vmem:[#allocation2 + $0x3b8] sm:$0xff]
    %v267 = vld [vmem:[#allocation2 + $0x3c0] sm:$0xff]
    %v268 = vld [vmem:[#allocation2 + $0x3c8] sm:$0xff]
    %v269 = vld [vmem:[#allocation2 + $0x3d0] sm:$0xff]
    %v270 = vld [vmem:[#allocation2 + $0x3d8] sm:$0xff]
    %v271 = vld [vmem:[#allocation2 + $0x3e0] sm:$0xff]
    %v272 = vld [vmem:[#allocation2 + $0x3e8] sm:$0xff]
    %v273 = vld [vmem:[#allocation2 + $0x3f0] sm:$0xff]
    %v274 = vld [vmem:[#allocation2 + $0x3f8] sm:$0xff]
    %v275 = vld [vmem:[#allocation2 + $0x400] sm:$0xff]
    %v276 = vld [vmem:[#allocation2 + $0x408] sm:$0xff]
    %v277 = vld [vmem:[#allocation2 + $0x410] sm:$0xff]
    %v278 = vld [vmem:[#allocation2 + $0x418] sm:$0xff]
    %v279 = vld [vmem:[#allocation2 + $0x420] sm:$0xff]
    %v280 = vld [vmem:[#allocation2 + $0x428] sm:$0xff]
    %v281 = vld [vmem:[#allocation2 + $0x430] sm:$0xff]
    %v282 = vld [vmem:[#allocation2 + $0x438] sm:$0xff]
    %v283 = vld [vmem:[#allocation2 + $0x440] sm:$0xff]
    %v284 = vld [vmem:[#allocation2 + $0x448] sm:$0xff]
    %v285 = vld [vmem:[#allocation2 + $0x450] sm:$0xff]
    %v286 = vld [vmem:[#allocation2 + $0x458] sm:$0xff]
    %v287 = vld [vmem:[#allocation2 + $0x460] sm:$0xff]
    %v288 = vld [vmem:[#allocation2 + $0x468] sm:$0xff]
    %v289 = vld [vmem:[#allocation2 + $0x470] sm:$0xff]
    %v290 = vld [vmem:[#allocation2 + $0x478] sm:$0xff]
    %v291 = vld [vmem:[#allocation2 + $0x480] sm:$0xff]
    %v292 = vld [vmem:[#allocation2 + $0x488] sm:$0xff]
    %v293 = vld [vmem:[#allocation2 + $0x490] sm:$0xff]
    %v294 = vld [vmem:[#allocation2 + $0x498] sm:$0xff]
    %v295 = vld [vmem:[#allocation2 + $0x4a0] sm:$0xff]
    %v296 = vld [vmem:[#allocation2 + $0x4a8] sm:$0xff]
    %v297 = vld [vmem:[#allocation2 + $0x4b0] sm:$0xff]
    %v298 = vld [vmem:[#allocation2 + $0x4b8] sm:$0xff]
    %v299 = vld [vmem:[#allocation2 + $0x4c0] sm:$0xff]
    %v300 = vld [vmem:[#allocation2 + $0x4c8] sm:$0xff]
    %v301 = vld [vmem:[#allocation2 + $0x4d0] sm:$0xff]
    %v302 = vld [vmem:[#allocation2 + $0x4d8] sm:$0xff]
    %v303 = vld [vmem:[#allocation2 + $0x4e0] sm:$0xff]
    %v304 = vld [vmem:[#allocation2 + $0x4e8] sm:$0xff]
    %v305 = vld [vmem:[#allocation2 + $0x4f0] sm:$0xff]
    %v306 = vld [vmem:[#allocation2 + $0x4f8] sm:$0xff]
    %v307 = vld [vmem:[#allocation2 + $0x500] sm:$0xff]
    %v308 = vld [vmem:[#allocation2 + $0x508] sm:$0xff]
    %v309 = vld [vmem:[#allocation2 + $0x510] sm:$0xff]
    %v310 = vld [vmem:[#allocation2 + $0x518] sm:$0xff]
    %v311 = vld [vmem:[#allocation2 + $0x520] sm:$0xff]
    %v312 = vld [vmem:[#allocation2 + $0x528] sm:$0xff]
    %v313 = vld [vmem:[#allocation2 + $0x530] sm:$0xff]
    %v314 = vld [vmem:[#allocation2 + $0x538] sm:$0xff]
    %v315 = vld [vmem:[#allocation2 + $0x540] sm:$0xff]
    %v316 = vld [vmem:[#allocation2 + $0x548] sm:$0xff]
    %v317 = vld [vmem:[#allocation2 + $0x550] sm:$0xff]
    %v318 = vld [vmem:[#allocation2 + $0x558] sm:$0xff]
    %v319 = vld [vmem:[#allocation2 + $0x560] sm:$0xff]
    %v320 = vld [vmem:[#allocation2 + $0x568] sm:$0xff]
    %v321 = vld [vmem:[#allocation2 + $0x570] sm:$0xff]
    %v322 = vld [vmem:[#allocation2 + $0x578] sm:$0xff]
    %v323 = vld [vmem:[#allocation2 + $0x580] sm:$0xff]
    %v324 = vld [vmem:[#allocation2 + $0x588] sm:$0xff]
    %v325 = vld [vmem:[#allocation2 + $0x590] sm:$0xff]
    %v326 = vld [vmem:[#allocation2 + $0x598] sm:$0xff]
    %v327 = vld [vmem:[#allocation2 + $0x5a0] sm:$0xff]
    %v328 = vld [vmem:[#allocation2 + $0x5a8] sm:$0xff]
    %v329 = vld [vmem:[#allocation2 + $0x5b0] sm:$0xff]
    %v330 = vld [vmem:[#allocation2 + $0x5b8] sm:$0xff]
    %v331 = vld [vmem:[#allocation2 + $0x5c0] sm:$0xff]
    %v332 = vld [vmem:[#allocation2 + $0x5c8] sm:$0xff]
    %v333 = vld [vmem:[#allocation2 + $0x5d0] sm:$0xff]
    %v334 = vld [vmem:[#allocation2 + $0x5d8] sm:$0xff]
    %v335 = vld [vmem:[#allocation2 + $0x5e0] sm:$0xff]
    %v336 = vld [vmem:[#allocation2 + $0x5e8] sm:$0xff]
    %v337 = vld [vmem:[#allocation2 + $0x5f0] sm:$0xff]
    %v338 = vld [vmem:[#allocation2 + $0x5f8] sm:$0xff]
    %v339 = vld [vmem:[#allocation2 + $0x600] sm:$0xff]
    %v340 = vld [vmem:[#allocation2 + $0x608] sm:$0xff]
    %v341 = vld [vmem:[#allocation2 + $0x610] sm:$0xff]
    %v342 = vld [vmem:[#allocation2 + $0x618] sm:$0xff]
    %v343 = vld [vmem:[#allocation2 + $0x620] sm:$0xff]
    %v344 = vld [vmem:[#allocation2 + $0x628] sm:$0xff]
    %v345 = vld [vmem:[#allocation2 + $0x630] sm:$0xff]
    %v346 = vld [vmem:[#allocation2 + $0x638] sm:$0xff]
    %v347 = vld [vmem:[#allocation2 + $0x640] sm:$0xff]
    %v348 = vld [vmem:[#allocation2 + $0x648] sm:$0xff]
    %v349 = vld [vmem:[#allocation2 + $0x650] sm:$0xff]
    %v350 = vld [vmem:[#allocation2 + $0x658] sm:$0xff]
    %v351 = vld [vmem:[#allocation2 + $0x660] sm:$0xff]
    %v352 = vld [vmem:[#allocation2 + $0x668] sm:$0xff]
    %v353 = vld [vmem:[#allocation2 + $0x670] sm:$0xff]
    %v354 = vld [vmem:[#allocation2 + $0x678] sm:$0xff]
    %v355 = vld [vmem:[#allocation2 + $0x680] sm:$0xff]
    %v356 = vld [vmem:[#allocation2 + $0x688] sm:$0xff]
    %v357 = vld [vmem:[#allocation2 + $0x690] sm:$0xff]
    %v358 = vld [vmem:[#allocation2 + $0x698] sm:$0xff]
    %v359 = vld [vmem:[#allocation2 + $0x6a0] sm:$0xff]
    %v360 = vld [vmem:[#allocation2 + $0x6a8] sm:$0xff]
    %v361 = vld [vmem:[#allocation2 + $0x6b0] sm:$0xff]
    %v362 = vld [vmem:[#allocation2 + $0x6b8] sm:$0xff]
    %v363 = vld [vmem:[#allocation2 + $0x6c0] sm:$0xff]
    %v364 = vld [vmem:[#allocation2 + $0x6c8] sm:$0xff]
    %v365 = vld [vmem:[#allocation2 + $0x6d0] sm:$0xff]
    %v366 = vld [vmem:[#allocation2 + $0x6d8] sm:$0xff]
    %v367 = vld [vmem:[#allocation2 + $0x6e0] sm:$0xff]
    %v368 = vld [vmem:[#allocation2 + $0x6e8] sm:$0xff]
    %v369 = vld [vmem:[#allocation2 + $0x6f0] sm:$0xff]
    %v370 = vld [vmem:[#allocation2 + $0x6f8] sm:$0xff]
    %v371 = vld [vmem:[#allocation2 + $0x700] sm:$0xff]
    %v372 = vld [vmem:[#allocation2 + $0x708] sm:$0xff]
    %v373 = vld [vmem:[#allocation2 + $0x710] sm:$0xff]
    %v374 = vld [vmem:[#allocation2 + $0x718] sm:$0xff]
    %v375 = vld [vmem:[#allocation2 + $0x720] sm:$0xff]
    %v376 = vld [vmem:[#allocation2 + $0x728] sm:$0xff]
    %v377 = vld [vmem:[#allocation2 + $0x730] sm:$0xff]
    %v378 = vld [vmem:[#allocation2 + $0x738] sm:$0xff]
    %v379 = vld [vmem:[#allocation2 + $0x740] sm:$0xff]
    %v380 = vld [vmem:[#allocation2 + $0x748] sm:$0xff]
    %v381 = vld [vmem:[#allocation2 + $0x750] sm:$0xff]
    %v382 = vld [vmem:[#allocation2 + $0x758] sm:$0xff]
    %v383 = vld [vmem:[#allocation2 + $0x760] sm:$0xff]
    %v384 = vld [vmem:[#allocation2 + $0x768] sm:$0xff]
    %v385 = vld [vmem:[#allocation2 + $0x770] sm:$0xff]
    %v386 = vld [vmem:[#allocation2 + $0x778] sm:$0xff]
    %v387 = vld [vmem:[#allocation2 + $0x780] sm:$0xff]
    %v388 = vld [vmem:[#allocation2 + $0x788] sm:$0xff]
    %v389 = vld [vmem:[#allocation2 + $0x790] sm:$0xff]
    %v390 = vld [vmem:[#allocation2 + $0x798] sm:$0xff]
    %v391 = vld [vmem:[#allocation2 + $0x7a0] sm:$0xff]
    %v392 = vld [vmem:[#allocation2 + $0x7a8] sm:$0xff]
    %v393 = vld [vmem:[#allocation2 + $0x7b0] sm:$0xff]
    %v394 = vld [vmem:[#allocation2 + $0x7b8] sm:$0xff]
    %v395 = vld [vmem:[#allocation2 + $0x7c0] sm:$0xff]
    %v396 = vld [vmem:[#allocation2 + $0x7c8] sm:$0xff]
    %v397 = vld [vmem:[#allocation2 + $0x7d0] sm:$0xff]
    %v398 = vld [vmem:[#allocation2 + $0x7d8] sm:$0xff]
    %v399 = vld [vmem:[#allocation2 + $0x7e0] sm:$0xff]
    %v400 = vld [vmem:[#allocation2 + $0x7e8] sm:$0xff]
    %v401 = vld [vmem:[#allocation2 + $0x7f0] sm:$0xff]
    %v402 = vld [vmem:[#allocation2 + $0x7f8] sm:$0xff]
    %v403 = vld [vmem:[#allocation2 + $0x800] sm:$0xff]
    %v404 = vld [vmem:[#allocation2 + $0x808] sm:$0xff]
    %v405 = vld [vmem:[#allocation2 + $0x810] sm:$0xff]
    %v406 = vld [vmem:[#allocation2 + $0x818] sm:$0xff]
    %v407 = vld [vmem:[#allocation2 + $0x820] sm:$0xff]
    %v408 = vld [vmem:[#allocation2 + $0x828] sm:$0xff]
    %v409 = vld [vmem:[#allocation2 + $0x830] sm:$0xff]
    %v410 = vld [vmem:[#allocation2 + $0x838] sm:$0xff]
    %v411 = vld [vmem:[#allocation2 + $0x840] sm:$0xff]
    %v412 = vld [vmem:[#allocation2 + $0x848] sm:$0xff]
    %v413 = vld [vmem:[#allocation2 + $0x850] sm:$0xff]
    %v414 = vld [vmem:[#allocation2 + $0x858] sm:$0xff]
    %v415 = vld [vmem:[#allocation2 + $0x860] sm:$0xff]
    %v416 = vld [vmem:[#allocation2 + $0x868] sm:$0xff]
    %v417 = vld [vmem:[#allocation2 + $0x870] sm:$0xff]
    %v418 = vld [vmem:[#allocation2 + $0x878] sm:$0xff]
    %v419 = vld [vmem:[#allocation2 + $0x880] sm:$0xff]
    %v420 = vld [vmem:[#allocation2 + $0x888] sm:$0xff]
    %v421 = vld [vmem:[#allocation2 + $0x890] sm:$0xff]
    %v422 = vld [vmem:[#allocation2 + $0x898] sm:$0xff]
    %v423 = vld [vmem:[#allocation2 + $0x8a0] sm:$0xff]
    %v424 = vld [vmem:[#allocation2 + $0x8a8] sm:$0xff]
    %v425 = vld [vmem:[#allocation2 + $0x8b0] sm:$0xff]
    %v426 = vld [vmem:[#allocation2 + $0x8b8] sm:$0xff]
    %v427 = vld [vmem:[#allocation2 + $0x8c0] sm:$0xff]
    %v428 = vld [vmem:[#allocation2 + $0x8c8] sm:$0xff]
    %v429 = vld [vmem:[#allocation2 + $0x8d0] sm:$0xff]
    %v430 = vld [vmem:[#allocation2 + $0x8d8] sm:$0xff]
    %v431 = vld [vmem:[#allocation2 + $0x8e0] sm:$0xff]
    %v432 = vld [vmem:[#allocation2 + $0x8e8] sm:$0xff]
    %v433 = vld [vmem:[#allocation2 + $0x8f0] sm:$0xff]
    %v434 = vld [vmem:[#allocation2 + $0x8f8] sm:$0xff]
    %v435 = vld [vmem:[#allocation2 + $0x900] sm:$0xff]
    %v436 = vld [vmem:[#allocation2 + $0x908] sm:$0xff]
    %v437 = vld [vmem:[#allocation2 + $0x910] sm:$0xff]
    %v438 = vld [vmem:[#allocation2 + $0x918] sm:$0xff]
    %v439 = vld [vmem:[#allocation2 + $0x920] sm:$0xff]
    %v440 = vld [vmem:[#allocation2 + $0x928] sm:$0xff]
    %v441 = vld [vmem:[#allocation2 + $0x930] sm:$0xff]
    %v442 = vld [vmem:[#allocation2 + $0x938] sm:$0xff]
    %v443 = vld [vmem:[#allocation2 + $0x940] sm:$0xff]
    %v444 = vld [vmem:[#allocation2 + $0x948] sm:$0xff]
    %v445 = vld [vmem:[#allocation2 + $0x950] sm:$0xff]
    %v446 = vld [vmem:[#allocation2 + $0x958] sm:$0xff]
    %v447 = vld [vmem:[#allocation2 + $0x960] sm:$0xff]
    %v448 = vld [vmem:[#allocation2 + $0x968] sm:$0xff]
    %v449 = vld [vmem:[#allocation2 + $0x970] sm:$0xff]
    %v450 = vld [vmem:[#allocation2 + $0x978] sm:$0xff]
    %v451 = vld [vmem:[#allocation2 + $0x980] sm:$0xff]
    %v452 = vld [vmem:[#allocation2 + $0x988] sm:$0xff]
    %v453 = vld [vmem:[#allocation2 + $0x990] sm:$0xff]
    %v454 = vld [vmem:[#allocation2 + $0x998] sm:$0xff]
    %v455 = vld [vmem:[#allocation2 + $0x9a0] sm:$0xff]
    %v456 = vld [vmem:[#allocation2 + $0x9a8] sm:$0xff]
    %v457 = vld [vmem:[#allocation2 + $0x9b0] sm:$0xff]
    %v458 = vld [vmem:[#allocation2 + $0x9b8] sm:$0xff]
    %v459 = vld [vmem:[#allocation2 + $0x9c0] sm:$0xff]
    %v460 = vld [vmem:[#allocation2 + $0x9c8] sm:$0xff]
    %v461 = vld [vmem:[#allocation2 + $0x9d0] sm:$0xff]
    %v462 = vld [vmem:[#allocation2 + $0x9d8] sm:$0xff]
    %v463 = vld [vmem:[#allocation2 + $0x9e0] sm:$0xff]
    %v464 = vld [vmem:[#allocation2 + $0x9e8] sm:$0xff]
    %v465 = vld [vmem:[#allocation2 + $0x9f0] sm:$0xff]
    %v466 = vld [vmem:[#allocation2 + $0x9f8] sm:$0xff]
    %v467 = vld [vmem:[#allocation2 + $0xa00] sm:$0xff]
    %v468 = vld [vmem:[#allocation2 + $0xa08] sm:$0xff]
    %v469 = vld [vmem:[#allocation2 + $0xa10] sm:$0xff]
    %v470 = vld [vmem:[#allocation2 + $0xa18] sm:$0xff]
    %v471 = vld [vmem:[#allocation2 + $0xa20] sm:$0xff]
    %v472 = vld [vmem:[#allocation2 + $0xa28] sm:$0xff]
    %v473 = vld [vmem:[#allocation2 + $0xa30] sm:$0xff]
    %v474 = vld [vmem:[#allocation2 + $0xa38] sm:$0xff]
    %v475 = vld [vmem:[#allocation2 + $0xa40] sm:$0xff]
    %v476 = vld [vmem:[#allocation2 + $0xa48] sm:$0xff]
    %v477 = vld [vmem:[#allocation2 + $0xa50] sm:$0xff]
    %v478 = vld [vmem:[#allocation2 + $0xa58] sm:$0xff]
    %v479 = vld [vmem:[#allocation2 + $0xa60] sm:$0xff]
    %v480 = vld [vmem:[#allocation2 + $0xa68] sm:$0xff]
    %v481 = vld [vmem:[#allocation2 + $0xa70] sm:$0xff]
    %v482 = vld [vmem:[#allocation2 + $0xa78] sm:$0xff]
    %v483 = vld [vmem:[#allocation2 + $0xa80] sm:$0xff]
    %v484 = vld [vmem:[#allocation2 + $0xa88] sm:$0xff]
    %v485 = vld [vmem:[#allocation2 + $0xa90] sm:$0xff]
    %v486 = vld [vmem:[#allocation2 + $0xa98] sm:$0xff]
    %v487 = vld [vmem:[#allocation2 + $0xaa0] sm:$0xff]
    %v488 = vld [vmem:[#allocation2 + $0xaa8] sm:$0xff]
    %v489 = vld [vmem:[#allocation2 + $0xab0] sm:$0xff]
    %v490 = vld [vmem:[#allocation2 + $0xab8] sm:$0xff]
    %v491 = vld [vmem:[#allocation2 + $0xac0] sm:$0xff]
    %v492 = vld [vmem:[#allocation2 + $0xac8] sm:$0xff]
    %v493 = vld [vmem:[#allocation2 + $0xad0] sm:$0xff]
    %v494 = vld [vmem:[#allocation2 + $0xad8] sm:$0xff]
    %v495 = vld [vmem:[#allocation2 + $0xae0] sm:$0xff]
    %v496 = vld [vmem:[#allocation2 + $0xae8] sm:$0xff]
    %v497 = vld [vmem:[#allocation2 + $0xaf0] sm:$0xff]
    %v498 = vld [vmem:[#allocation2 + $0xaf8] sm:$0xff]
    %v499 = vld [vmem:[#allocation2 + $0xb00] sm:$0xff]
    %v500 = vld [vmem:[#allocation2 + $0xb08] sm:$0xff]
    %v501 = vld [vmem:[#allocation2 + $0xb10] sm:$0xff]
    %v502 = vld [vmem:[#allocation2 + $0xb18] sm:$0xff]
    %v503 = vld [vmem:[#allocation2 + $0xb20] sm:$0xff]
    %v504 = vld [vmem:[#allocation2 + $0xb28] sm:$0xff]
    %v505 = vld [vmem:[#allocation2 + $0xb30] sm:$0xff]
    %v506 = vld [vmem:[#allocation2 + $0xb38] sm:$0xff]
    %v507 = vld [vmem:[#allocation2 + $0xb40] sm:$0xff]
    %v508 = vld [vmem:[#allocation2 + $0xb48] sm:$0xff]
    %v509 = vld [vmem:[#allocation2 + $0xb50] sm:$0xff]
    %v510 = vld [vmem:[#allocation2 + $0xb58] sm:$0xff]
    %v511 = vld [vmem:[#allocation2 + $0xb60] sm:$0xff]
    %v512 = vld [vmem:[#allocation2 + $0xb68] sm:$0xff]
    %v513 = vld [vmem:[#allocation2 + $0xb70] sm:$0xff]
    %v514 = vld [vmem:[#allocation2 + $0xb78] sm:$0xff]
    %v515 = vld [vmem:[#allocation2 + $0xb80] sm:$0xff]
    %v516 = vld [vmem:[#allocation2 + $0xb88] sm:$0xff]
    %v517 = vld [vmem:[#allocation2 + $0xb90] sm:$0xff]
    %v518 = vld [vmem:[#allocation2 + $0xb98] sm:$0xff]
    %v519 = vld [vmem:[#allocation2 + $0xba0] sm:$0xff]
    %v520 = vld [vmem:[#allocation2 + $0xba8] sm:$0xff]
    %v521 = vld [vmem:[#allocation2 + $0xbb0] sm:$0xff]
    %v522 = vld [vmem:[#allocation2 + $0xbb8] sm:$0xff]
    %v523 = vld [vmem:[#allocation2 + $0xbc0] sm:$0xff]
    %v524 = vld [vmem:[#allocation2 + $0xbc8] sm:$0xff]
    %v525 = vld [vmem:[#allocation2 + $0xbd0] sm:$0xff]
    %v526 = vld [vmem:[#allocation2 + $0xbd8] sm:$0xff]
    %v527 = vld [vmem:[#allocation2 + $0xbe0] sm:$0xff]
    %v528 = vld [vmem:[#allocation2 + $0xbe8] sm:$0xff]
    %v529 = vld [vmem:[#allocation2 + $0xbf0] sm:$0xff]
    %v530 = vld [vmem:[#allocation2 + $0xbf8] sm:$0xff]
    %v531 = vld [vmem:[#allocation5] sm:$0xff]
    %v532 = vld [vmem:[#allocation5 + $0x8] sm:$0xff]
    %v533 = vld [vmem:[#allocation5 + $0x10] sm:$0xff]
    %v534 = vld [vmem:[#allocation5 + $0x18] sm:$0xff]
    %v535 = vld [vmem:[#allocation5 + $0x20] sm:$0xff]
    %v536 = vld [vmem:[#allocation5 + $0x28] sm:$0xff]
    %v537 = vld [vmem:[#allocation5 + $0x30] sm:$0xff]
    %v538 = vld [vmem:[#allocation5 + $0x38] sm:$0xff]
    %v539 = vld [vmem:[#allocation5 + $0x40] sm:$0xff]
    %v540 = vld [vmem:[#allocation5 + $0x48] sm:$0xff]
    %v541 = vld [vmem:[#allocation5 + $0x50] sm:$0xff]
    %v542 = vld [vmem:[#allocation5 + $0x58] sm:$0xff]
    %v543 = vld [vmem:[#allocation5 + $0x60] sm:$0xff]
    %v544 = vld [vmem:[#allocation5 + $0x68] sm:$0xff]
    %v545 = vld [vmem:[#allocation5 + $0x70] sm:$0xff]
    %v546 = vld [vmem:[#allocation5 + $0x78] sm:$0xff]
    %v547 = vld [vmem:[#allocation5 + $0x80] sm:$0xff]
    %v548 = vld [vmem:[#allocation5 + $0x88] sm:$0xff]
    %v549 = vld [vmem:[#allocation5 + $0x90] sm:$0xff]
    %v550 = vld [vmem:[#allocation5 + $0x98] sm:$0xff]
    %v551 = vld [vmem:[#allocation5 + $0xa0] sm:$0xff]
    %v552 = vld [vmem:[#allocation5 + $0xa8] sm:$0xff]
    %v553 = vld [vmem:[#allocation5 + $0xb0] sm:$0xff]
    %v554 = vld [vmem:[#allocation5 + $0xb8] sm:$0xff]
    %v555 = vld [vmem:[#allocation5 + $0xc0] sm:$0xff]
    %v556 = vld [vmem:[#allocation5 + $0xc8] sm:$0xff]
    %v557 = vld [vmem:[#allocation5 + $0xd0] sm:$0xff]
    %v558 = vld [vmem:[#allocation5 + $0xd8] sm:$0xff]
    %v559 = vld [vmem:[#allocation5 + $0xe0] sm:$0xff]
    %v560 = vld [vmem:[#allocation5 + $0xe8] sm:$0xff]
    %v561 = vld [vmem:[#allocation5 + $0xf0] sm:$0xff]
    %v562 = vld [vmem:[#allocation5 + $0xf8] sm:$0xff]
    %v563 = vld [vmem:[#allocation5 + $0x100] sm:$0xff]
    %v564 = vld [vmem:[#allocation5 + $0x108] sm:$0xff]
    %v565 = vld [vmem:[#allocation5 + $0x110] sm:$0xff]
    %v566 = vld [vmem:[#allocation5 + $0x118] sm:$0xff]
    %v567 = vld [vmem:[#allocation5 + $0x120] sm:$0xff]
    %v568 = vld [vmem:[#allocation5 + $0x128] sm:$0xff]
    %v569 = vld [vmem:[#allocation5 + $0x130] sm:$0xff]
    %v570 = vld [vmem:[#allocation5 + $0x138] sm:$0xff]
    %v571 = vld [vmem:[#allocation5 + $0x140] sm:$0xff]
    %v572 = vld [vmem:[#allocation5 + $0x148] sm:$0xff]
    %v573 = vld [vmem:[#allocation5 + $0x150] sm:$0xff]
    %v574 = vld [vmem:[#allocation5 + $0x158] sm:$0xff]
    %v575 = vld [vmem:[#allocation5 + $0x160] sm:$0xff]
    %v576 = vld [vmem:[#allocation5 + $0x168] sm:$0xff]
    %v577 = vld [vmem:[#allocation5 + $0x170] sm:$0xff]
    %v578 = vld [vmem:[#allocation5 + $0x178] sm:$0xff]
    %v579 = vld [vmem:[#allocation5 + $0x180] sm:$0xff]
    %v580 = vld [vmem:[#allocation5 + $0x188] sm:$0xff]
    %v581 = vld [vmem:[#allocation5 + $0x190] sm:$0xff]
    %v582 = vld [vmem:[#allocation5 + $0x198] sm:$0xff]
    %v583 = vld [vmem:[#allocation5 + $0x1a0] sm:$0xff]
    %v584 = vld [vmem:[#allocation5 + $0x1a8] sm:$0xff]
    %v585 = vld [vmem:[#allocation5 + $0x1b0] sm:$0xff]
    %v586 = vld [vmem:[#allocation5 + $0x1b8] sm:$0xff]
    %v587 = vld [vmem:[#allocation5 + $0x1c0] sm:$0xff]
    %v588 = vld [vmem:[#allocation5 + $0x1c8] sm:$0xff]
    %v589 = vld [vmem:[#allocation5 + $0x1d0] sm:$0xff]
    %v590 = vld [vmem:[#allocation5 + $0x1d8] sm:$0xff]
    %v591 = vld [vmem:[#allocation5 + $0x1e0] sm:$0xff]
    %v592 = vld [vmem:[#allocation5 + $0x1e8] sm:$0xff]
    %v593 = vld [vmem:[#allocation5 + $0x1f0] sm:$0xff]
    %v594 = vld [vmem:[#allocation5 + $0x1f8] sm:$0xff]
    %v595 = vld [vmem:[#allocation5 + $0x200] sm:$0xff]
    %v596 = vld [vmem:[#allocation5 + $0x208] sm:$0xff]
    %v597 = vld [vmem:[#allocation5 + $0x210] sm:$0xff]
    %v598 = vld [vmem:[#allocation5 + $0x218] sm:$0xff]
    %v599 = vld [vmem:[#allocation5 + $0x220] sm:$0xff]
    %v600 = vld [vmem:[#allocation5 + $0x228] sm:$0xff]
    %v601 = vld [vmem:[#allocation5 + $0x230] sm:$0xff]
    %v602 = vld [vmem:[#allocation5 + $0x238] sm:$0xff]
    %v603 = vld [vmem:[#allocation5 + $0x240] sm:$0xff]
    %v604 = vld [vmem:[#allocation5 + $0x248] sm:$0xff]
    %v605 = vld [vmem:[#allocation5 + $0x250] sm:$0xff]
    %v606 = vld [vmem:[#allocation5 + $0x258] sm:$0xff]
    %v607 = vld [vmem:[#allocation5 + $0x260] sm:$0xff]
    %v608 = vld [vmem:[#allocation5 + $0x268] sm:$0xff]
    %v609 = vld [vmem:[#allocation5 + $0x270] sm:$0xff]
    %v610 = vld [vmem:[#allocation5 + $0x278] sm:$0xff]
    %v611 = vld [vmem:[#allocation5 + $0x280] sm:$0xff]
    %v612 = vld [vmem:[#allocation5 + $0x288] sm:$0xff]
    %v613 = vld [vmem:[#allocation5 + $0x290] sm:$0xff]
    %v614 = vld [vmem:[#allocation5 + $0x298] sm:$0xff]
    %v615 = vld [vmem:[#allocation5 + $0x2a0] sm:$0xff]
    %v616 = vld [vmem:[#allocation5 + $0x2a8] sm:$0xff]
    %v617 = vld [vmem:[#allocation5 + $0x2b0] sm:$0xff]
    %v618 = vld [vmem:[#allocation5 + $0x2b8] sm:$0xff]
    %v619 = vld [vmem:[#allocation5 + $0x2c0] sm:$0xff]
    %v620 = vld [vmem:[#allocation5 + $0x2c8] sm:$0xff]
    %v621 = vld [vmem:[#allocation5 + $0x2d0] sm:$0xff]
    %v622 = vld [vmem:[#allocation5 + $0x2d8] sm:$0xff]
    %v623 = vld [vmem:[#allocation5 + $0x2e0] sm:$0xff]
    %v624 = vld [vmem:[#allocation5 + $0x2e8] sm:$0xff]
    %v625 = vld [vmem:[#allocation5 + $0x2f0] sm:$0xff]
    %v626 = vld [vmem:[#allocation5 + $0x2f8] sm:$0xff]
    %v627 = vld [vmem:[#allocation5 + $0x300] sm:$0xff]
    %v628 = vld [vmem:[#allocation5 + $0x308] sm:$0xff]
    %v629 = vld [vmem:[#allocation5 + $0x310] sm:$0xff]
    %v630 = vld [vmem:[#allocation5 + $0x318] sm:$0xff]
    %v631 = vld [vmem:[#allocation5 + $0x320] sm:$0xff]
    %v632 = vld [vmem:[#allocation5 + $0x328] sm:$0xff]
    %v633 = vld [vmem:[#allocation5 + $0x330] sm:$0xff]
    %v634 = vld [vmem:[#allocation5 + $0x338] sm:$0xff]
    %v635 = vld [vmem:[#allocation5 + $0x340] sm:$0xff]
    %v636 = vld [vmem:[#allocation5 + $0x348] sm:$0xff]
    %v637 = vld [vmem:[#allocation5 + $0x350] sm:$0xff]
    %v638 = vld [vmem:[#allocation5 + $0x358] sm:$0xff]
    %v639 = vld [vmem:[#allocation5 + $0x360] sm:$0xff]
    %v640 = vld [vmem:[#allocation5 + $0x368] sm:$0xff]
    %v641 = vld [vmem:[#allocation5 + $0x370] sm:$0xff]
    %v642 = vld [vmem:[#allocation5 + $0x378] sm:$0xff]
    %v643 = vld [vmem:[#allocation5 + $0x380] sm:$0xff]
    %v644 = vld [vmem:[#allocation5 + $0x388] sm:$0xff]
    %v645 = vld [vmem:[#allocation5 + $0x390] sm:$0xff]
    %v646 = vld [vmem:[#allocation5 + $0x398] sm:$0xff]
    %v647 = vld [vmem:[#allocation5 + $0x3a0] sm:$0xff]
    %v648 = vld [vmem:[#allocation5 + $0x3a8] sm:$0xff]
    %v649 = vld [vmem:[#allocation5 + $0x3b0] sm:$0xff]
    %v650 = vld [vmem:[#allocation5 + $0x3b8] sm:$0xff]
    %v651 = vld [vmem:[#allocation5 + $0x3c0] sm:$0xff]
    %v652 = vld [vmem:[#allocation5 + $0x3c8] sm:$0xff]
    %v653 = vld [vmem:[#allocation5 + $0x3d0] sm:$0xff]
    %v654 = vld [vmem:[#allocation5 + $0x3d8] sm:$0xff]
    %v655 = vld [vmem:[#allocation5 + $0x3e0] sm:$0xff]
    %v656 = vld [vmem:[#allocation5 + $0x3e8] sm:$0xff]
    %v657 = vld [vmem:[#allocation5 + $0x3f0] sm:$0xff]
    %v658 = vld [vmem:[#allocation5 + $0x3f8] sm:$0xff]
    %v659 = vld [vmem:[#allocation5 + $0x400] sm:$0xff]
    %v660 = vld [vmem:[#allocation5 + $0x408] sm:$0xff]
    %v661 = vld [vmem:[#allocation5 + $0x410] sm:$0xff]
    %v662 = vld [vmem:[#allocation5 + $0x418] sm:$0xff]
    %v663 = vld [vmem:[#allocation5 + $0x420] sm:$0xff]
    %v664 = vld [vmem:[#allocation5 + $0x428] sm:$0xff]
    %v665 = vld [vmem:[#allocation5 + $0x430] sm:$0xff]
    %v666 = vld [vmem:[#allocation5 + $0x438] sm:$0xff]
    %v667 = vld [vmem:[#allocation5 + $0x440] sm:$0xff]
    %v668 = vld [vmem:[#allocation5 + $0x448] sm:$0xff]
    %v669 = vld [vmem:[#allocation5 + $0x450] sm:$0xff]
    %v670 = vld [vmem:[#allocation5 + $0x458] sm:$0xff]
    %v671 = vld [vmem:[#allocation5 + $0x460] sm:$0xff]
    %v672 = vld [vmem:[#allocation5 + $0x468] sm:$0xff]
    %v673 = vld [vmem:[#allocation5 + $0x470] sm:$0xff]
    %v674 = vld [vmem:[#allocation5 + $0x478] sm:$0xff]
    %v675 = vld [vmem:[#allocation5 + $0x480] sm:$0xff]
    %v676 = vld [vmem:[#allocation5 + $0x488] sm:$0xff]
    %v677 = vld [vmem:[#allocation5 + $0x490] sm:$0xff]
    %v678 = vld [vmem:[#allocation5 + $0x498] sm:$0xff]
    %v679 = vld [vmem:[#allocation5 + $0x4a0] sm:$0xff]
    %v680 = vld [vmem:[#allocation5 + $0x4a8] sm:$0xff]
    %v681 = vld [vmem:[#allocation5 + $0x4b0] sm:$0xff]
    %v682 = vld [vmem:[#allocation5 + $0x4b8] sm:$0xff]
    %v683 = vld [vmem:[#allocation5 + $0x4c0] sm:$0xff]
    %v684 = vld [vmem:[#allocation5 + $0x4c8] sm:$0xff]
    %v685 = vld [vmem:[#allocation5 + $0x4d0] sm:$0xff]
    %v686 = vld [vmem:[#allocation5 + $0x4d8] sm:$0xff]
    %v687 = vld [vmem:[#allocation5 + $0x4e0] sm:$0xff]
    %v688 = vld [vmem:[#allocation5 + $0x4e8] sm:$0xff]
    %v689 = vld [vmem:[#allocation5 + $0x4f0] sm:$0xff]
    %v690 = vld [vmem:[#allocation5 + $0x4f8] sm:$0xff]
    %v691 = vld [vmem:[#allocation5 + $0x500] sm:$0xff]
    %v692 = vld [vmem:[#allocation5 + $0x508] sm:$0xff]
    %v693 = vld [vmem:[#allocation5 + $0x510] sm:$0xff]
    %v694 = vld [vmem:[#allocation5 + $0x518] sm:$0xff]
    %v695 = vld [vmem:[#allocation5 + $0x520] sm:$0xff]
    %v696 = vld [vmem:[#allocation5 + $0x528] sm:$0xff]
    %v697 = vld [vmem:[#allocation5 + $0x530] sm:$0xff]
    %v698 = vld [vmem:[#allocation5 + $0x538] sm:$0xff]
    %v699 = vld [vmem:[#allocation5 + $0x540] sm:$0xff]
    %v700 = vld [vmem:[#allocation5 + $0x548] sm:$0xff]
    %v701 = vld [vmem:[#allocation5 + $0x550] sm:$0xff]
    %v702 = vld [vmem:[#allocation5 + $0x558] sm:$0xff]
    %v703 = vld [vmem:[#allocation5 + $0x560] sm:$0xff]
    %v704 = vld [vmem:[#allocation5 + $0x568] sm:$0xff]
    %v705 = vld [vmem:[#allocation5 + $0x570] sm:$0xff]
    %v706 = vld [vmem:[#allocation5 + $0x578] sm:$0xff]
    %v707 = vld [vmem:[#allocation5 + $0x580] sm:$0xff]
    %v708 = vld [vmem:[#allocation5 + $0x588] sm:$0xff]
    %v709 = vld [vmem:[#allocation5 + $0x590] sm:$0xff]
    %v710 = vld [vmem:[#allocation5 + $0x598] sm:$0xff]
    %v711 = vld [vmem:[#allocation5 + $0x5a0] sm:$0xff]
    %v712 = vld [vmem:[#allocation5 + $0x5a8] sm:$0xff]
    %v713 = vld [vmem:[#allocation5 + $0x5b0] sm:$0xff]
    %v714 = vld [vmem:[#allocation5 + $0x5b8] sm:$0xff]
    %v715 = vld [vmem:[#allocation5 + $0x5c0] sm:$0xff]
    %v716 = vld [vmem:[#allocation5 + $0x5c8] sm:$0xff]
    %v717 = vld [vmem:[#allocation5 + $0x5d0] sm:$0xff]
    %v718 = vld [vmem:[#allocation5 + $0x5d8] sm:$0xff]
    %v719 = vld [vmem:[#allocation5 + $0x5e0] sm:$0xff]
    %v720 = vld [vmem:[#allocation5 + $0x5e8] sm:$0xff]
    %v721 = vld [vmem:[#allocation5 + $0x5f0] sm:$0xff]
    %v722 = vld [vmem:[#allocation5 + $0x5f8] sm:$0xff]
    %v723 = vld [vmem:[#allocation5 + $0x600] sm:$0xff]
    %v724 = vld [vmem:[#allocation5 + $0x608] sm:$0xff]
    %v725 = vld [vmem:[#allocation5 + $0x610] sm:$0xff]
    %v726 = vld [vmem:[#allocation5 + $0x618] sm:$0xff]
    %v727 = vld [vmem:[#allocation5 + $0x620] sm:$0xff]
    %v728 = vld [vmem:[#allocation5 + $0x628] sm:$0xff]
    %v729 = vld [vmem:[#allocation5 + $0x630] sm:$0xff]
    %v730 = vld [vmem:[#allocation5 + $0x638] sm:$0xff]
    %v731 = vld [vmem:[#allocation5 + $0x640] sm:$0xff]
    %v732 = vld [vmem:[#allocation5 + $0x648] sm:$0xff]
    %v733 = vld [vmem:[#allocation5 + $0x650] sm:$0xff]
    %v734 = vld [vmem:[#allocation5 + $0x658] sm:$0xff]
    %v735 = vld [vmem:[#allocation5 + $0x660] sm:$0xff]
    %v736 = vld [vmem:[#allocation5 + $0x668] sm:$0xff]
    %v737 = vld [vmem:[#allocation5 + $0x670] sm:$0xff]
    %v738 = vld [vmem:[#allocation5 + $0x678] sm:$0xff]
    %v739 = vld [vmem:[#allocation5 + $0x680] sm:$0xff]
    %v740 = vld [vmem:[#allocation5 + $0x688] sm:$0xff]
    %v741 = vld [vmem:[#allocation5 + $0x690] sm:$0xff]
    %v742 = vld [vmem:[#allocation5 + $0x698] sm:$0xff]
    %v743 = vld [vmem:[#allocation5 + $0x6a0] sm:$0xff]
    %v744 = vld [vmem:[#allocation5 + $0x6a8] sm:$0xff]
    %v745 = vld [vmem:[#allocation5 + $0x6b0] sm:$0xff]
    %v746 = vld [vmem:[#allocation5 + $0x6b8] sm:$0xff]
    %v747 = vld [vmem:[#allocation5 + $0x6c0] sm:$0xff]
    %v748 = vld [vmem:[#allocation5 + $0x6c8] sm:$0xff]
    %v749 = vld [vmem:[#allocation5 + $0x6d0] sm:$0xff]
    %v750 = vld [vmem:[#allocation5 + $0x6d8] sm:$0xff]
    %v751 = vld [vmem:[#allocation5 + $0x6e0] sm:$0xff]
    %v752 = vld [vmem:[#allocation5 + $0x6e8] sm:$0xff]
    %v753 = vld [vmem:[#allocation5 + $0x6f0] sm:$0xff]
    %v754 = vld [vmem:[#allocation5 + $0x6f8] sm:$0xff]
    %v755 = vld [vmem:[#allocation5 + $0x700] sm:$0xff]
    %v756 = vld [vmem:[#allocation5 + $0x708] sm:$0xff]
    %v757 = vld [vmem:[#allocation5 + $0x710] sm:$0xff]
    %v758 = vld [vmem:[#allocation5 + $0x718] sm:$0xff]
    %v759 = vld [vmem:[#allocation5 + $0x720] sm:$0xff]
    %v760 = vld [vmem:[#allocation5 + $0x728] sm:$0xff]
    %v761 = vld [vmem:[#allocation5 + $0x730] sm:$0xff]
    %v762 = vld [vmem:[#allocation5 + $0x738] sm:$0xff]
    %v763 = vld [vmem:[#allocation5 + $0x740] sm:$0xff]
    %v764 = vld [vmem:[#allocation5 + $0x748] sm:$0xff]
    %v765 = vld [vmem:[#allocation5 + $0x750] sm:$0xff]
    %v766 = vld [vmem:[#allocation5 + $0x758] sm:$0xff]
    %v767 = vld [vmem:[#allocation5 + $0x760] sm:$0xff]
    %v768 = vld [vmem:[#allocation5 + $0x768] sm:$0xff]
    %v769 = vld [vmem:[#allocation5 + $0x770] sm:$0xff]
    %v770 = vld [vmem:[#allocation5 + $0x778] sm:$0xff]
    %v771 = vld [vmem:[#allocation5 + $0x780] sm:$0xff]
    %v772 = vld [vmem:[#allocation5 + $0x788] sm:$0xff]
    %v773 = vld [vmem:[#allocation5 + $0x790] sm:$0xff]
    %v774 = vld [vmem:[#allocation5 + $0x798] sm:$0xff]
    %v775 = vld [vmem:[#allocation5 + $0x7a0] sm:$0xff]
    %v776 = vld [vmem:[#allocation5 + $0x7a8] sm:$0xff]
    %v777 = vld [vmem:[#allocation5 + $0x7b0] sm:$0xff]
    %v778 = vld [vmem:[#allocation5 + $0x7b8] sm:$0xff]
    %v779 = vld [vmem:[#allocation5 + $0x7c0] sm:$0xff]
    %v780 = vld [vmem:[#allocation5 + $0x7c8] sm:$0xff]
    %v781 = vld [vmem:[#allocation5 + $0x7d0] sm:$0xff]
    %v782 = vld [vmem:[#allocation5 + $0x7d8] sm:$0xff]
    %v783 = vld [vmem:[#allocation5 + $0x7e0] sm:$0xff]
    %v784 = vld [vmem:[#allocation5 + $0x7e8] sm:$0xff]
    %v785 = vld [vmem:[#allocation5 + $0x7f0] sm:$0xff]
    %v786 = vld [vmem:[#allocation5 + $0x7f8] sm:$0xff]
    %v787 = vld [vmem:[#allocation5 + $0x800] sm:$0xff]
    %v788 = vld [vmem:[#allocation5 + $0x808] sm:$0xff]
    %v789 = vld [vmem:[#allocation5 + $0x810] sm:$0xff]
    %v790 = vld [vmem:[#allocation5 + $0x818] sm:$0xff]
    %v791 = vld [vmem:[#allocation5 + $0x820] sm:$0xff]
    %v792 = vld [vmem:[#allocation5 + $0x828] sm:$0xff]
    %v793 = vld [vmem:[#allocation5 + $0x830] sm:$0xff]
    %v794 = vld [vmem:[#allocation5 + $0x838] sm:$0xff]
    %v795 = vld [vmem:[#allocation5 + $0x840] sm:$0xff]
    %v796 = vld [vmem:[#allocation5 + $0x848] sm:$0xff]
    %v797 = vld [vmem:[#allocation5 + $0x850] sm:$0xff]
    %v798 = vld [vmem:[#allocation5 + $0x858] sm:$0xff]
    %v799 = vld [vmem:[#allocation5 + $0x860] sm:$0xff]
    %v800 = vld [vmem:[#allocation5 + $0x868] sm:$0xff]
    %v801 = vld [vmem:[#allocation5 + $0x870] sm:$0xff]
    %v802 = vld [vmem:[#allocation5 + $0x878] sm:$0xff]
    %v803 = vld [vmem:[#allocation5 + $0x880] sm:$0xff]
    %v804 = vld [vmem:[#allocation5 + $0x888] sm:$0xff]
    %v805 = vld [vmem:[#allocation5 + $0x890] sm:$0xff]
    %v806 = vld [vmem:[#allocation5 + $0x898] sm:$0xff]
    %v807 = vld [vmem:[#allocation5 + $0x8a0] sm:$0xff]
    %v808 = vld [vmem:[#allocation5 + $0x8a8] sm:$0xff]
    %v809 = vld [vmem:[#allocation5 + $0x8b0] sm:$0xff]
    %v810 = vld [vmem:[#allocation5 + $0x8b8] sm:$0xff]
    %v811 = vld [vmem:[#allocation5 + $0x8c0] sm:$0xff]
    %v812 = vld [vmem:[#allocation5 + $0x8c8] sm:$0xff]
    %v813 = vld [vmem:[#allocation5 + $0x8d0] sm:$0xff]
    %v814 = vld [vmem:[#allocation5 + $0x8d8] sm:$0xff]
    %v815 = vld [vmem:[#allocation5 + $0x8e0] sm:$0xff]
    %v816 = vld [vmem:[#allocation5 + $0x8e8] sm:$0xff]
    %v817 = vld [vmem:[#allocation5 + $0x8f0] sm:$0xff]
    %v818 = vld [vmem:[#allocation5 + $0x8f8] sm:$0xff]
    %v819 = vld [vmem:[#allocation5 + $0x900] sm:$0xff]
    %v820 = vld [vmem:[#allocation5 + $0x908] sm:$0xff]
    %v821 = vld [vmem:[#allocation5 + $0x910] sm:$0xff]
    %v822 = vld [vmem:[#allocation5 + $0x918] sm:$0xff]
    %v823 = vld [vmem:[#allocation5 + $0x920] sm:$0xff]
    %v824 = vld [vmem:[#allocation5 + $0x928] sm:$0xff]
    %v825 = vld [vmem:[#allocation5 + $0x930] sm:$0xff]
    %v826 = vld [vmem:[#allocation5 + $0x938] sm:$0xff]
    %v827 = vld [vmem:[#allocation5 + $0x940] sm:$0xff]
    %v828 = vld [vmem:[#allocation5 + $0x948] sm:$0xff]
    %v829 = vld [vmem:[#allocation5 + $0x950] sm:$0xff]
    %v830 = vld [vmem:[#allocation5 + $0x958] sm:$0xff]
    %v831 = vld [vmem:[#allocation5 + $0x960] sm:$0xff]
    %v832 = vld [vmem:[#allocation5 + $0x968] sm:$0xff]
    %v833 = vld [vmem:[#allocation5 + $0x970] sm:$0xff]
    %v834 = vld [vmem:[#allocation5 + $0x978] sm:$0xff]
    %v835 = vld [vmem:[#allocation5 + $0x980] sm:$0xff]
    %v836 = vld [vmem:[#allocation5 + $0x988] sm:$0xff]
    %v837 = vld [vmem:[#allocation5 + $0x990] sm:$0xff]
    %v838 = vld [vmem:[#allocation5 + $0x998] sm:$0xff]
    %v839 = vld [vmem:[#allocation5 + $0x9a0] sm:$0xff]
    %v840 = vld [vmem:[#allocation5 + $0x9a8] sm:$0xff]
    %v841 = vld [vmem:[#allocation5 + $0x9b0] sm:$0xff]
    %v842 = vld [vmem:[#allocation5 + $0x9b8] sm:$0xff]
    %v843 = vld [vmem:[#allocation5 + $0x9c0] sm:$0xff]
    %v844 = vld [vmem:[#allocation5 + $0x9c8] sm:$0xff]
    %v845 = vld [vmem:[#allocation5 + $0x9d0] sm:$0xff]
    %v846 = vld [vmem:[#allocation5 + $0x9d8] sm:$0xff]
    %v847 = vld [vmem:[#allocation5 + $0x9e0] sm:$0xff]
    %v848 = vld [vmem:[#allocation5 + $0x9e8] sm:$0xff]
    %v849 = vld [vmem:[#allocation5 + $0x9f0] sm:$0xff]
    %v850 = vld [vmem:[#allocation5 + $0x9f8] sm:$0xff]
    %v851 = vld [vmem:[#allocation5 + $0xa00] sm:$0xff]
    %v852 = vld [vmem:[#allocation5 + $0xa08] sm:$0xff]
    %v853 = vld [vmem:[#allocation5 + $0xa10] sm:$0xff]
    %v854 = vld [vmem:[#allocation5 + $0xa18] sm:$0xff]
    %v855 = vld [vmem:[#allocation5 + $0xa20] sm:$0xff]
    %v856 = vld [vmem:[#allocation5 + $0xa28] sm:$0xff]
    %v857 = vld [vmem:[#allocation5 + $0xa30] sm:$0xff]
    %v858 = vld [vmem:[#allocation5 + $0xa38] sm:$0xff]
    %v859 = vld [vmem:[#allocation5 + $0xa40] sm:$0xff]
    %v860 = vld [vmem:[#allocation5 + $0xa48] sm:$0xff]
    %v861 = vld [vmem:[#allocation5 + $0xa50] sm:$0xff]
    %v862 = vld [vmem:[#allocation5 + $0xa58] sm:$0xff]
    %v863 = vld [vmem:[#allocation5 + $0xa60] sm:$0xff]
    %v864 = vld [vmem:[#allocation5 + $0xa68] sm:$0xff]
    %v865 = vld [vmem:[#allocation5 + $0xa70] sm:$0xff]
    %v866 = vld [vmem:[#allocation5 + $0xa78] sm:$0xff]
    %v867 = vld [vmem:[#allocation5 + $0xa80] sm:$0xff]
    %v868 = vld [vmem:[#allocation5 + $0xa88] sm:$0xff]
    %v869 = vld [vmem:[#allocation5 + $0xa90] sm:$0xff]
    %v870 = vld [vmem:[#allocation5 + $0xa98] sm:$0xff]
    %v871 = vld [vmem:[#allocation5 + $0xaa0] sm:$0xff]
    %v872 = vld [vmem:[#allocation5 + $0xaa8] sm:$0xff]
    %v873 = vld [vmem:[#allocation5 + $0xab0] sm:$0xff]
    %v874 = vld [vmem:[#allocation5 + $0xab8] sm:$0xff]
    %v875 = vld [vmem:[#allocation5 + $0xac0] sm:$0xff]
    %v876 = vld [vmem:[#allocation5 + $0xac8] sm:$0xff]
    %v877 = vld [vmem:[#allocation5 + $0xad0] sm:$0xff]
    %v878 = vld [vmem:[#allocation5 + $0xad8] sm:$0xff]
    %v879 = vld [vmem:[#allocation5 + $0xae0] sm:$0xff]
    %v880 = vld [vmem:[#allocation5 + $0xae8] sm:$0xff]
    %v881 = vld [vmem:[#allocation5 + $0xaf0] sm:$0xff]
    %v882 = vld [vmem:[#allocation5 + $0xaf8] sm:$0xff]
    %v883 = vld [vmem:[#allocation5 + $0xb00] sm:$0xff]
    %v884 = vld [vmem:[#allocation5 + $0xb08] sm:$0xff]
    %v885 = vld [vmem:[#allocation5 + $0xb10] sm:$0xff]
    %v886 = vld [vmem:[#allocation5 + $0xb18] sm:$0xff]
    %v887 = vld [vmem:[#allocation5 + $0xb20] sm:$0xff]
    %v888 = vld [vmem:[#allocation5 + $0xb28] sm:$0xff]
    %v889 = vld [vmem:[#allocation5 + $0xb30] sm:$0xff]
    %v890 = vld [vmem:[#allocation5 + $0xb38] sm:$0xff]
    %v891 = vld [vmem:[#allocation5 + $0xb40] sm:$0xff]
    %v892 = vld [vmem:[#allocation5 + $0xb48] sm:$0xff]
    %v893 = vld [vmem:[#allocation5 + $0xb50] sm:$0xff]
    %v894 = vld [vmem:[#allocation5 + $0xb58] sm:$0xff]
    %v895 = vld [vmem:[#allocation5 + $0xb60] sm:$0xff]
    %v896 = vld [vmem:[#allocation5 + $0xb68] sm:$0xff]
    %v897 = vld [vmem:[#allocation5 + $0xb70] sm:$0xff]
    %v898 = vld [vmem:[#allocation5 + $0xb78] sm:$0xff]
    %v899 = vld [vmem:[#allocation5 + $0xb80] sm:$0xff]
    %v900 = vld [vmem:[#allocation5 + $0xb88] sm:$0xff]
    %v901 = vld [vmem:[#allocation5 + $0xb90] sm:$0xff]
    %v902 = vld [vmem:[#allocation5 + $0xb98] sm:$0xff]
    %v903 = vld [vmem:[#allocation5 + $0xba0] sm:$0xff]
    %v904 = vld [vmem:[#allocation5 + $0xba8] sm:$0xff]
    %v905 = vld [vmem:[#allocation5 + $0xbb0] sm:$0xff]
    %v906 = vld [vmem:[#allocation5 + $0xbb8] sm:$0xff]
    %v907 = vld [vmem:[#allocation5 + $0xbc0] sm:$0xff]
    %v908 = vld [vmem:[#allocation5 + $0xbc8] sm:$0xff]
    %v909 = vld [vmem:[#allocation5 + $0xbd0] sm:$0xff]
    %v910 = vld [vmem:[#allocation5 + $0xbd8] sm:$0xff]
    %v911 = vld [vmem:[#allocation5 + $0xbe0] sm:$0xff]
    %v912 = vld [vmem:[#allocation5 + $0xbe8] sm:$0xff]
    %v913 = vld [vmem:[#allocation5 + $0xbf0] sm:$0xff]
    %v914 = vld [vmem:[#allocation5 + $0xbf8] sm:$0xff]
    %v915 = vld [vmem:[#allocation5 + $0xc00] sm:$0xff]
    %v916 = vld [vmem:[#allocation5 + $0xc08] sm:$0xff]
    %v917 = vld [vmem:[#allocation5 + $0xc10] sm:$0xff]
    %v918 = vld [vmem:[#allocation5 + $0xc18] sm:$0xff]
    %v919 = vld [vmem:[#allocation5 + $0xc20] sm:$0xff]
    %v920 = vld [vmem:[#allocation5 + $0xc28] sm:$0xff]
    %v921 = vld [vmem:[#allocation5 + $0xc30] sm:$0xff]
    %v922 = vld [vmem:[#allocation5 + $0xc38] sm:$0xff]
    %v923 = vld [vmem:[#allocation5 + $0xc40] sm:$0xff]
    %v924 = vld [vmem:[#allocation5 + $0xc48] sm:$0xff]
    %v925 = vld [vmem:[#allocation5 + $0xc50] sm:$0xff]
    %v926 = vld [vmem:[#allocation5 + $0xc58] sm:$0xff]
    %v927 = vld [vmem:[#allocation5 + $0xc60] sm:$0xff]
    %v928 = vld [vmem:[#allocation5 + $0xc68] sm:$0xff]
    %v929 = vld [vmem:[#allocation5 + $0xc70] sm:$0xff]
    %v930 = vld [vmem:[#allocation5 + $0xc78] sm:$0xff]
    %v931 = vld [vmem:[#allocation5 + $0xc80] sm:$0xff]
    %v932 = vld [vmem:[#allocation5 + $0xc88] sm:$0xff]
    %v933 = vld [vmem:[#allocation5 + $0xc90] sm:$0xff]
    %v934 = vld [vmem:[#allocation5 + $0xc98] sm:$0xff]
    %v935 = vld [vmem:[#allocation5 + $0xca0] sm:$0xff]
    %v936 = vld [vmem:[#allocation5 + $0xca8] sm:$0xff]
    %v937 = vld [vmem:[#allocation5 + $0xcb0] sm:$0xff]
    %v938 = vld [vmem:[#allocation5 + $0xcb8] sm:$0xff]
    %v939 = vld [vmem:[#allocation5 + $0xcc0] sm:$0xff]
    %v940 = vld [vmem:[#allocation5 + $0xcc8] sm:$0xff]
    %v941 = vld [vmem:[#allocation5 + $0xcd0] sm:$0xff]
    %v942 = vld [vmem:[#allocation5 + $0xcd8] sm:$0xff]
    %v943 = vld [vmem:[#allocation5 + $0xce0] sm:$0xff]
    %v944 = vld [vmem:[#allocation5 + $0xce8] sm:$0xff]
    %v945 = vld [vmem:[#allocation5 + $0xcf0] sm:$0xff]
    %v946 = vld [vmem:[#allocation5 + $0xcf8] sm:$0xff]
    %v947 = vld [vmem:[#allocation5 + $0xd00] sm:$0xff]
    %v948 = vld [vmem:[#allocation5 + $0xd08] sm:$0xff]
    %v949 = vld [vmem:[#allocation5 + $0xd10] sm:$0xff]
    %v950 = vld [vmem:[#allocation5 + $0xd18] sm:$0xff]
    %v951 = vld [vmem:[#allocation5 + $0xd20] sm:$0xff]
    %v952 = vld [vmem:[#allocation5 + $0xd28] sm:$0xff]
    %v953 = vld [vmem:[#allocation5 + $0xd30] sm:$0xff]
    %v954 = vld [vmem:[#allocation5 + $0xd38] sm:$0xff]
    %v955 = vld [vmem:[#allocation5 + $0xd40] sm:$0xff]
    %v956 = vld [vmem:[#allocation5 + $0xd48] sm:$0xff]
    %v957 = vld [vmem:[#allocation5 + $0xd50] sm:$0xff]
    %v958 = vld [vmem:[#allocation5 + $0xd58] sm:$0xff]
    %v959 = vld [vmem:[#allocation5 + $0xd60] sm:$0xff]
    %v960 = vld [vmem:[#allocation5 + $0xd68] sm:$0xff]
    %v961 = vld [vmem:[#allocation5 + $0xd70] sm:$0xff]
    %v962 = vld [vmem:[#allocation5 + $0xd78] sm:$0xff]
    %v963 = vld [vmem:[#allocation5 + $0xd80] sm:$0xff]
    %v964 = vld [vmem:[#allocation5 + $0xd88] sm:$0xff]
    %v965 = vld [vmem:[#allocation5 + $0xd90] sm:$0xff]
    %v966 = vld [vmem:[#allocation5 + $0xd98] sm:$0xff]
    %v967 = vld [vmem:[#allocation5 + $0xda0] sm:$0xff]
    %v968 = vld [vmem:[#allocation5 + $0xda8] sm:$0xff]
    %v969 = vld [vmem:[#allocation5 + $0xdb0] sm:$0xff]
    %v970 = vld [vmem:[#allocation5 + $0xdb8] sm:$0xff]
    %v971 = vld [vmem:[#allocation5 + $0xdc0] sm:$0xff]
    %v972 = vld [vmem:[#allocation5 + $0xdc8] sm:$0xff]
    %v973 = vld [vmem:[#allocation5 + $0xdd0] sm:$0xff]
    %v974 = vld [vmem:[#allocation5 + $0xdd8] sm:$0xff]
    %v975 = vld [vmem:[#allocation5 + $0xde0] sm:$0xff]
    %v976 = vld [vmem:[#allocation5 + $0xde8] sm:$0xff]
    %v977 = vld [vmem:[#allocation5 + $0xdf0] sm:$0xff]
    %v978 = vld [vmem:[#allocation5 + $0xdf8] sm:$0xff]
    %v979 = vld [vmem:[#allocation5 + $0xe00] sm:$0xff]
    %v980 = vld [vmem:[#allocation5 + $0xe08] sm:$0xff]
    %v981 = vld [vmem:[#allocation5 + $0xe10] sm:$0xff]
    %v982 = vld [vmem:[#allocation5 + $0xe18] sm:$0xff]
    %v983 = vld [vmem:[#allocation5 + $0xe20] sm:$0xff]
    %v984 = vld [vmem:[#allocation5 + $0xe28] sm:$0xff]
    %v985 = vld [vmem:[#allocation5 + $0xe30] sm:$0xff]
    %v986 = vld [vmem:[#allocation5 + $0xe38] sm:$0xff]
    %v987 = vld [vmem:[#allocation5 + $0xe40] sm:$0xff]
    %v988 = vld [vmem:[#allocation5 + $0xe48] sm:$0xff]
    %v989 = vld [vmem:[#allocation5 + $0xe50] sm:$0xff]
    %v990 = vld [vmem:[#allocation5 + $0xe58] sm:$0xff]
    %v991 = vld [vmem:[#allocation5 + $0xe60] sm:$0xff]
    %v992 = vld [vmem:[#allocation5 + $0xe68] sm:$0xff]
    %v993 = vld [vmem:[#allocation5 + $0xe70] sm:$0xff]
    %v994 = vld [vmem:[#allocation5 + $0xe78] sm:$0xff]
    %v995 = vld [vmem:[#allocation5 + $0xe80] sm:$0xff]
    %v996 = vld [vmem:[#allocation5 + $0xe88] sm:$0xff]
    %v997 = vld [vmem:[#allocation5 + $0xe90] sm:$0xff]
    %v998 = vld [vmem:[#allocation5 + $0xe98] sm:$0xff]
    %v999 = vld [vmem:[#allocation5 + $0xea0] sm:$0xff]
    %v1000 = vld [vmem:[#allocation5 + $0xea8] sm:$0xff]
    %v1001 = vld [vmem:[#allocation5 + $0xeb0] sm:$0xff]
    %v1002 = vld [vmem:[#allocation5 + $0xeb8] sm:$0xff]
    %v1003 = vld [vmem:[#allocation5 + $0xec0] sm:$0xff]
    %v1004 = vld [vmem:[#allocation5 + $0xec8] sm:$0xff]
    %v1005 = vld [vmem:[#allocation5 + $0xed0] sm:$0xff]
    %v1006 = vld [vmem:[#allocation5 + $0xed8] sm:$0xff]
    %v1007 = vld [vmem:[#allocation5 + $0xee0] sm:$0xff]
    %v1008 = vld [vmem:[#allocation5 + $0xee8] sm:$0xff]
    %v1009 = vld [vmem:[#allocation5 + $0xef0] sm:$0xff]
    %v1010 = vld [vmem:[#allocation5 + $0xef8] sm:$0xff]
    %v1011 = vld [vmem:[#allocation5 + $0xf00] sm:$0xff]
    %v1012 = vld [vmem:[#allocation5 + $0xf08] sm:$0xff]
    %v1013 = vld [vmem:[#allocation5 + $0xf10] sm:$0xff]
    %v1014 = vld [vmem:[#allocation5 + $0xf18] sm:$0xff]
    %v1015 = vld [vmem:[#allocation5 + $0xf20] sm:$0xff]
    %v1016 = vld [vmem:[#allocation5 + $0xf28] sm:$0xff]
    %v1017 = vld [vmem:[#allocation5 + $0xf30] sm:$0xff]
    %v1018 = vld [vmem:[#allocation5 + $0xf38] sm:$0xff]
    %v1019 = vld [vmem:[#allocation5 + $0xf40] sm:$0xff]
    %v1020 = vld [vmem:[#allocation5 + $0xf48] sm:$0xff]
    %v1021 = vld [vmem:[#allocation5 + $0xf50] sm:$0xff]
    %v1022 = vld [vmem:[#allocation5 + $0xf58] sm:$0xff]
    %v1023 = vld [vmem:[#allocation5 + $0xf60] sm:$0xff]
    %v1024 = vld [vmem:[#allocation5 + $0xf68] sm:$0xff]
    %v1025 = vld [vmem:[#allocation5 + $0xf70] sm:$0xff]
    %v1026 = vld [vmem:[#allocation5 + $0xf78] sm:$0xff]
    %v1027 = vld [vmem:[#allocation5 + $0xf80] sm:$0xff]
    %v1028 = vld [vmem:[#allocation5 + $0xf88] sm:$0xff]
    %v1029 = vld [vmem:[#allocation5 + $0xf90] sm:$0xff]
    %v1030 = vld [vmem:[#allocation5 + $0xf98] sm:$0xff]
    %v1031 = vld [vmem:[#allocation5 + $0xfa0] sm:$0xff]
    %v1032 = vld [vmem:[#allocation5 + $0xfa8] sm:$0xff]
    %v1033 = vld [vmem:[#allocation5 + $0xfb0] sm:$0xff]
    %v1034 = vld [vmem:[#allocation5 + $0xfb8] sm:$0xff]
    %v1035 = vld [vmem:[#allocation5 + $0xfc0] sm:$0xff]
    %v1036 = vld [vmem:[#allocation5 + $0xfc8] sm:$0xff]
    %v1037 = vld [vmem:[#allocation5 + $0xfd0] sm:$0xff]
    %v1038 = vld [vmem:[#allocation5 + $0xfd8] sm:$0xff]
    %v1039 = vld [vmem:[#allocation5 + $0xfe0] sm:$0xff]
    %v1040 = vld [vmem:[#allocation5 + $0xfe8] sm:$0xff]
    %v1041 = vld [vmem:[#allocation5 + $0xff0] sm:$0xff]
    %v1042 = vld [vmem:[#allocation5 + $0xff8] sm:$0xff]
    %v1043 = vld [vmem:[#allocation5 + $0x1000] sm:$0xff]
    %v1044 = vld [vmem:[#allocation5 + $0x1008] sm:$0xff]
    %v1045 = vld [vmem:[#allocation5 + $0x1010] sm:$0xff]
    %v1046 = vld [vmem:[#allocation5 + $0x1018] sm:$0xff]
    %v1047 = vld [vmem:[#allocation5 + $0x1020] sm:$0xff]
    %v1048 = vld [vmem:[#allocation5 + $0x1028] sm:$0xff]
    %v1049 = vld [vmem:[#allocation5 + $0x1030] sm:$0xff]
    %v1050 = vld [vmem:[#allocation5 + $0x1038] sm:$0xff]
    %v1051 = vld [vmem:[#allocation5 + $0x1040] sm:$0xff]
    %v1052 = vld [vmem:[#allocation5 + $0x1048] sm:$0xff]
    %v1053 = vld [vmem:[#allocation5 + $0x1050] sm:$0xff]
    %v1054 = vld [vmem:[#allocation5 + $0x1058] sm:$0xff]
    %v1055 = vld [vmem:[#allocation5 + $0x1060] sm:$0xff]
    %v1056 = vld [vmem:[#allocation5 + $0x1068] sm:$0xff]
    %v1057 = vld [vmem:[#allocation5 + $0x1070] sm:$0xff]
    %v1058 = vld [vmem:[#allocation5 + $0x1078] sm:$0xff]
    %v1059 = vld [vmem:[#allocation5 + $0x1080] sm:$0xff]
    %v1060 = vld [vmem:[#allocation5 + $0x1088] sm:$0xff]
    %v1061 = vld [vmem:[#allocation5 + $0x1090] sm:$0xff]
    %v1062 = vld [vmem:[#allocation5 + $0x1098] sm:$0xff]
    %v1063 = vld [vmem:[#allocation5 + $0x10a0] sm:$0xff]
    %v1064 = vld [vmem:[#allocation5 + $0x10a8] sm:$0xff]
    %v1065 = vld [vmem:[#allocation5 + $0x10b0] sm:$0xff]
    %v1066 = vld [vmem:[#allocation5 + $0x10b8] sm:$0xff]
    %v1067 = vld [vmem:[#allocation5 + $0x10c0] sm:$0xff]
    %v1068 = vld [vmem:[#allocation5 + $0x10c8] sm:$0xff]
    %v1069 = vld [vmem:[#allocation5 + $0x10d0] sm:$0xff]
    %v1070 = vld [vmem:[#allocation5 + $0x10d8] sm:$0xff]
    %v1071 = vld [vmem:[#allocation5 + $0x10e0] sm:$0xff]
    %v1072 = vld [vmem:[#allocation5 + $0x10e8] sm:$0xff]
    %v1073 = vld [vmem:[#allocation5 + $0x10f0] sm:$0xff]
    %v1074 = vld [vmem:[#allocation5 + $0x10f8] sm:$0xff]
    %v1075 = vld [vmem:[#allocation5 + $0x1100] sm:$0xff]
    %v1076 = vld [vmem:[#allocation5 + $0x1108] sm:$0xff]
    %v1077 = vld [vmem:[#allocation5 + $0x1110] sm:$0xff]
    %v1078 = vld [vmem:[#allocation5 + $0x1118] sm:$0xff]
    %v1079 = vld [vmem:[#allocation5 + $0x1120] sm:$0xff]
    %v1080 = vld [vmem:[#allocation5 + $0x1128] sm:$0xff]
    %v1081 = vld [vmem:[#allocation5 + $0x1130] sm:$0xff]
    %v1082 = vld [vmem:[#allocation5 + $0x1138] sm:$0xff]
    %v1083 = vld [vmem:[#allocation5 + $0x1140] sm:$0xff]
    %v1084 = vld [vmem:[#allocation5 + $0x1148] sm:$0xff]
    %v1085 = vld [vmem:[#allocation5 + $0x1150] sm:$0xff]
    %v1086 = vld [vmem:[#allocation5 + $0x1158] sm:$0xff]
    %v1087 = vld [vmem:[#allocation5 + $0x1160] sm:$0xff]
    %v1088 = vld [vmem:[#allocation5 + $0x1168] sm:$0xff]
    %v1089 = vld [vmem:[#allocation5 + $0x1170] sm:$0xff]
    %v1090 = vld [vmem:[#allocation5 + $0x1178] sm:$0xff]
    %v1091 = vld [vmem:[#allocation5 + $0x1180] sm:$0xff]
    %v1092 = vld [vmem:[#allocation5 + $0x1188] sm:$0xff]
    %v1093 = vld [vmem:[#allocation5 + $0x1190] sm:$0xff]
    %v1094 = vld [vmem:[#allocation5 + $0x1198] sm:$0xff]
    %v1095 = vld [vmem:[#allocation5 + $0x11a0] sm:$0xff]
    %v1096 = vld [vmem:[#allocation5 + $0x11a8] sm:$0xff]
    %v1097 = vld [vmem:[#allocation5 + $0x11b0] sm:$0xff]
    %v1098 = vld [vmem:[#allocation5 + $0x11b8] sm:$0xff]
    %v1099 = vld [vmem:[#allocation5 + $0x11c0] sm:$0xff]
    %v1100 = vld [vmem:[#allocation5 + $0x11c8] sm:$0xff]
    %v1101 = vld [vmem:[#allocation5 + $0x11d0] sm:$0xff]
    %v1102 = vld [vmem:[#allocation5 + $0x11d8] sm:$0xff]
    %v1103 = vld [vmem:[#allocation5 + $0x11e0] sm:$0xff]
    %v1104 = vld [vmem:[#allocation5 + $0x11e8] sm:$0xff]
    %v1105 = vld [vmem:[#allocation5 + $0x11f0] sm:$0xff]
    %v1106 = vld [vmem:[#allocation5 + $0x11f8] sm:$0xff]
    %v1107 = vld [vmem:[#allocation5 + $0x1200] sm:$0xff]
    %v1108 = vld [vmem:[#allocation5 + $0x1208] sm:$0xff]
    %v1109 = vld [vmem:[#allocation5 + $0x1210] sm:$0xff]
    %v1110 = vld [vmem:[#allocation5 + $0x1218] sm:$0xff]
    %v1111 = vld [vmem:[#allocation5 + $0x1220] sm:$0xff]
    %v1112 = vld [vmem:[#allocation5 + $0x1228] sm:$0xff]
    %v1113 = vld [vmem:[#allocation5 + $0x1230] sm:$0xff]
    %v1114 = vld [vmem:[#allocation5 + $0x1238] sm:$0xff]
    %v1115 = vld [vmem:[#allocation5 + $0x1240] sm:$0xff]
    %v1116 = vld [vmem:[#allocation5 + $0x1248] sm:$0xff]
    %v1117 = vld [vmem:[#allocation5 + $0x1250] sm:$0xff]
    %v1118 = vld [vmem:[#allocation5 + $0x1258] sm:$0xff]
    %v1119 = vld [vmem:[#allocation5 + $0x1260] sm:$0xff]
    %v1120 = vld [vmem:[#allocation5 + $0x1268] sm:$0xff]
    %v1121 = vld [vmem:[#allocation5 + $0x1270] sm:$0xff]
    %v1122 = vld [vmem:[#allocation5 + $0x1278] sm:$0xff]
    %v1123 = vld [vmem:[#allocation5 + $0x1280] sm:$0xff]
    %v1124 = vld [vmem:[#allocation5 + $0x1288] sm:$0xff]
    %v1125 = vld [vmem:[#allocation5 + $0x1290] sm:$0xff]
    %v1126 = vld [vmem:[#allocation5 + $0x1298] sm:$0xff]
    %v1127 = vld [vmem:[#allocation5 + $0x12a0] sm:$0xff]
    %v1128 = vld [vmem:[#allocation5 + $0x12a8] sm:$0xff]
    %v1129 = vld [vmem:[#allocation5 + $0x12b0] sm:$0xff]
    %v1130 = vld [vmem:[#allocation5 + $0x12b8] sm:$0xff]
    %v1131 = vld [vmem:[#allocation5 + $0x12c0] sm:$0xff]
    %v1132 = vld [vmem:[#allocation5 + $0x12c8] sm:$0xff]
    %v1133 = vld [vmem:[#allocation5 + $0x12d0] sm:$0xff]
    %v1134 = vld [vmem:[#allocation5 + $0x12d8] sm:$0xff]
    %v1135 = vld [vmem:[#allocation5 + $0x12e0] sm:$0xff]
    %v1136 = vld [vmem:[#allocation5 + $0x12e8] sm:$0xff]
    %v1137 = vld [vmem:[#allocation5 + $0x12f0] sm:$0xff]
    %v1138 = vld [vmem:[#allocation5 + $0x12f8] sm:$0xff]
    %v1139 = vld [vmem:[#allocation5 + $0x1300] sm:$0xff]
    %v1140 = vld [vmem:[#allocation5 + $0x1308] sm:$0xff]
    %v1141 = vld [vmem:[#allocation5 + $0x1310] sm:$0xff]
    %v1142 = vld [vmem:[#allocation5 + $0x1318] sm:$0xff]
    %v1143 = vld [vmem:[#allocation5 + $0x1320] sm:$0xff]
    %v1144 = vld [vmem:[#allocation5 + $0x1328] sm:$0xff]
    %v1145 = vld [vmem:[#allocation5 + $0x1330] sm:$0xff]
    %v1146 = vld [vmem:[#allocation5 + $0x1338] sm:$0xff]
    %v1147 = vld [vmem:[#allocation5 + $0x1340] sm:$0xff]
    %v1148 = vld [vmem:[#allocation5 + $0x1348] sm:$0xff]
    %v1149 = vld [vmem:[#allocation5 + $0x1350] sm:$0xff]
    %v1150 = vld [vmem:[#allocation5 + $0x1358] sm:$0xff]
    %v1151 = vld [vmem:[#allocation5 + $0x1360] sm:$0xff]
    %v1152 = vld [vmem:[#allocation5 + $0x1368] sm:$0xff]
    %v1153 = vld [vmem:[#allocation5 + $0x1370] sm:$0xff]
    %v1154 = vld [vmem:[#allocation5 + $0x1378] sm:$0xff]
    %v1155 = vld [vmem:[#allocation5 + $0x1380] sm:$0xff]
    %v1156 = vld [vmem:[#allocation5 + $0x1388] sm:$0xff]
    %v1157 = vld [vmem:[#allocation5 + $0x1390] sm:$0xff]
    %v1158 = vld [vmem:[#allocation5 + $0x1398] sm:$0xff]
    %v1159 = vld [vmem:[#allocation5 + $0x13a0] sm:$0xff]
    %v1160 = vld [vmem:[#allocation5 + $0x13a8] sm:$0xff]
    %v1161 = vld [vmem:[#allocation5 + $0x13b0] sm:$0xff]
    %v1162 = vld [vmem:[#allocation5 + $0x13b8] sm:$0xff]
    %v1163 = vld [vmem:[#allocation5 + $0x13c0] sm:$0xff]
    %v1164 = vld [vmem:[#allocation5 + $0x13c8] sm:$0xff]
    %v1165 = vld [vmem:[#allocation5 + $0x13d0] sm:$0xff]
    %v1166 = vld [vmem:[#allocation5 + $0x13d8] sm:$0xff]
    %v1167 = vld [vmem:[#allocation5 + $0x13e0] sm:$0xff]
    %v1168 = vld [vmem:[#allocation5 + $0x13e8] sm:$0xff]
    %v1169 = vld [vmem:[#allocation5 + $0x13f0] sm:$0xff]
    %v1170 = vld [vmem:[#allocation5 + $0x13f8] sm:$0xff]
    %v1171 = vld [vmem:[#allocation5 + $0x1400] sm:$0xff]
    %v1172 = vld [vmem:[#allocation5 + $0x1408] sm:$0xff]
    %v1173 = vld [vmem:[#allocation5 + $0x1410] sm:$0xff]
    %v1174 = vld [vmem:[#allocation5 + $0x1418] sm:$0xff]
    %v1175 = vld [vmem:[#allocation5 + $0x1420] sm:$0xff]
    %v1176 = vld [vmem:[#allocation5 + $0x1428] sm:$0xff]
    %v1177 = vld [vmem:[#allocation5 + $0x1430] sm:$0xff]
    %v1178 = vld [vmem:[#allocation5 + $0x1438] sm:$0xff]
    %v1179 = vld [vmem:[#allocation5 + $0x1440] sm:$0xff]
    %v1180 = vld [vmem:[#allocation5 + $0x1448] sm:$0xff]
    %v1181 = vld [vmem:[#allocation5 + $0x1450] sm:$0xff]
    %v1182 = vld [vmem:[#allocation5 + $0x1458] sm:$0xff]
    %v1183 = vld [vmem:[#allocation5 + $0x1460] sm:$0xff]
    %v1184 = vld [vmem:[#allocation5 + $0x1468] sm:$0xff]
    %v1185 = vld [vmem:[#allocation5 + $0x1470] sm:$0xff]
    %v1186 = vld [vmem:[#allocation5 + $0x1478] sm:$0xff]
    %v1187 = vld [vmem:[#allocation5 + $0x1480] sm:$0xff]
    %v1188 = vld [vmem:[#allocation5 + $0x1488] sm:$0xff]
    %v1189 = vld [vmem:[#allocation5 + $0x1490] sm:$0xff]
    %v1190 = vld [vmem:[#allocation5 + $0x1498] sm:$0xff]
    %v1191 = vld [vmem:[#allocation5 + $0x14a0] sm:$0xff]
    %v1192 = vld [vmem:[#allocation5 + $0x14a8] sm:$0xff]
    %v1193 = vld [vmem:[#allocation5 + $0x14b0] sm:$0xff]
    %v1194 = vld [vmem:[#allocation5 + $0x14b8] sm:$0xff]
    %v1195 = vld [vmem:[#allocation5 + $0x14c0] sm:$0xff]
    %v1196 = vld [vmem:[#allocation5 + $0x14c8] sm:$0xff]
    %v1197 = vld [vmem:[#allocation5 + $0x14d0] sm:$0xff]
    %v1198 = vld [vmem:[#allocation5 + $0x14d8] sm:$0xff]
    %v1199 = vld [vmem:[#allocation5 + $0x14e0] sm:$0xff]
    %v1200 = vld [vmem:[#allocation5 + $0x14e8] sm:$0xff]
    %v1201 = vld [vmem:[#allocation5 + $0x14f0] sm:$0xff]
    %v1202 = vld [vmem:[#allocation5 + $0x14f8] sm:$0xff]
    %v1203 = vld [vmem:[#allocation5 + $0x1500] sm:$0xff]
    %v1204 = vld [vmem:[#allocation5 + $0x1508] sm:$0xff]
    %v1205 = vld [vmem:[#allocation5 + $0x1510] sm:$0xff]
    %v1206 = vld [vmem:[#allocation5 + $0x1518] sm:$0xff]
    %v1207 = vld [vmem:[#allocation5 + $0x1520] sm:$0xff]
    %v1208 = vld [vmem:[#allocation5 + $0x1528] sm:$0xff]
    %v1209 = vld [vmem:[#allocation5 + $0x1530] sm:$0xff]
    %v1210 = vld [vmem:[#allocation5 + $0x1538] sm:$0xff]
    %v1211 = vld [vmem:[#allocation5 + $0x1540] sm:$0xff]
    %v1212 = vld [vmem:[#allocation5 + $0x1548] sm:$0xff]
    %v1213 = vld [vmem:[#allocation5 + $0x1550] sm:$0xff]
    %v1214 = vld [vmem:[#allocation5 + $0x1558] sm:$0xff]
    %v1215 = vld [vmem:[#allocation5 + $0x1560] sm:$0xff]
    %v1216 = vld [vmem:[#allocation5 + $0x1568] sm:$0xff]
    %v1217 = vld [vmem:[#allocation5 + $0x1570] sm:$0xff]
    %v1218 = vld [vmem:[#allocation5 + $0x1578] sm:$0xff]
    %v1219 = vld [vmem:[#allocation5 + $0x1580] sm:$0xff]
    %v1220 = vld [vmem:[#allocation5 + $0x1588] sm:$0xff]
    %v1221 = vld [vmem:[#allocation5 + $0x1590] sm:$0xff]
    %v1222 = vld [vmem:[#allocation5 + $0x1598] sm:$0xff]
    %v1223 = vld [vmem:[#allocation5 + $0x15a0] sm:$0xff]
    %v1224 = vld [vmem:[#allocation5 + $0x15a8] sm:$0xff]
    %v1225 = vld [vmem:[#allocation5 + $0x15b0] sm:$0xff]
    %v1226 = vld [vmem:[#allocation5 + $0x15b8] sm:$0xff]
    %v1227 = vld [vmem:[#allocation5 + $0x15c0] sm:$0xff]
    %v1228 = vld [vmem:[#allocation5 + $0x15c8] sm:$0xff]
    %v1229 = vld [vmem:[#allocation5 + $0x15d0] sm:$0xff]
    %v1230 = vld [vmem:[#allocation5 + $0x15d8] sm:$0xff]
    %v1231 = vld [vmem:[#allocation5 + $0x15e0] sm:$0xff]
    %v1232 = vld [vmem:[#allocation5 + $0x15e8] sm:$0xff]
    %v1233 = vld [vmem:[#allocation5 + $0x15f0] sm:$0xff]
    %v1234 = vld [vmem:[#allocation5 + $0x15f8] sm:$0xff]
    %v1235 = vld [vmem:[#allocation5 + $0x1600] sm:$0xff]
    %v1236 = vld [vmem:[#allocation5 + $0x1608] sm:$0xff]
    %v1237 = vld [vmem:[#allocation5 + $0x1610] sm:$0xff]
    %v1238 = vld [vmem:[#allocation5 + $0x1618] sm:$0xff]
    %v1239 = vld [vmem:[#allocation5 + $0x1620] sm:$0xff]
    %v1240 = vld [vmem:[#allocation5 + $0x1628] sm:$0xff]
    %v1241 = vld [vmem:[#allocation5 + $0x1630] sm:$0xff]
    %v1242 = vld [vmem:[#allocation5 + $0x1638] sm:$0xff]
    %v1243 = vld [vmem:[#allocation5 + $0x1640] sm:$0xff]
    %v1244 = vld [vmem:[#allocation5 + $0x1648] sm:$0xff]
    %v1245 = vld [vmem:[#allocation5 + $0x1650] sm:$0xff]
    %v1246 = vld [vmem:[#allocation5 + $0x1658] sm:$0xff]
    %v1247 = vld [vmem:[#allocation5 + $0x1660] sm:$0xff]
    %v1248 = vld [vmem:[#allocation5 + $0x1668] sm:$0xff]
    %v1249 = vld [vmem:[#allocation5 + $0x1670] sm:$0xff]
    %v1250 = vld [vmem:[#allocation5 + $0x1678] sm:$0xff]
    %v1251 = vld [vmem:[#allocation5 + $0x1680] sm:$0xff]
    %v1252 = vld [vmem:[#allocation5 + $0x1688] sm:$0xff]
    %v1253 = vld [vmem:[#allocation5 + $0x1690] sm:$0xff]
    %v1254 = vld [vmem:[#allocation5 + $0x1698] sm:$0xff]
    %v1255 = vld [vmem:[#allocation5 + $0x16a0] sm:$0xff]
    %v1256 = vld [vmem:[#allocation5 + $0x16a8] sm:$0xff]
    %v1257 = vld [vmem:[#allocation5 + $0x16b0] sm:$0xff]
    %v1258 = vld [vmem:[#allocation5 + $0x16b8] sm:$0xff]
    %v1259 = vld [vmem:[#allocation5 + $0x16c0] sm:$0xff]
    %v1260 = vld [vmem:[#allocation5 + $0x16c8] sm:$0xff]
    %v1261 = vld [vmem:[#allocation5 + $0x16d0] sm:$0xff]
    %v1262 = vld [vmem:[#allocation5 + $0x16d8] sm:$0xff]
    %v1263 = vld [vmem:[#allocation5 + $0x16e0] sm:$0xff]
    %v1264 = vld [vmem:[#allocation5 + $0x16e8] sm:$0xff]
    %v1265 = vld [vmem:[#allocation5 + $0x16f0] sm:$0xff]
    %v1266 = vld [vmem:[#allocation5 + $0x16f8] sm:$0xff]
    %v1267 = vld [vmem:[#allocation5 + $0x1700] sm:$0xff]
    %v1268 = vld [vmem:[#allocation5 + $0x1708] sm:$0xff]
    %v1269 = vld [vmem:[#allocation5 + $0x1710] sm:$0xff]
    %v1270 = vld [vmem:[#allocation5 + $0x1718] sm:$0xff]
    %v1271 = vld [vmem:[#allocation5 + $0x1720] sm:$0xff]
    %v1272 = vld [vmem:[#allocation5 + $0x1728] sm:$0xff]
    %v1273 = vld [vmem:[#allocation5 + $0x1730] sm:$0xff]
    %v1274 = vld [vmem:[#allocation5 + $0x1738] sm:$0xff]
    %v1275 = vld [vmem:[#allocation5 + $0x1740] sm:$0xff]
    %v1276 = vld [vmem:[#allocation5 + $0x1748] sm:$0xff]
    %v1277 = vld [vmem:[#allocation5 + $0x1750] sm:$0xff]
    %v1278 = vld [vmem:[#allocation5 + $0x1758] sm:$0xff]
    %v1279 = vld [vmem:[#allocation5 + $0x1760] sm:$0xff]
    %v1280 = vld [vmem:[#allocation5 + $0x1768] sm:$0xff]
    %v1281 = vld [vmem:[#allocation5 + $0x1770] sm:$0xff]
    %v1282 = vld [vmem:[#allocation5 + $0x1778] sm:$0xff]
    %v1283 = vld [vmem:[#allocation5 + $0x1780] sm:$0xff]
    %v1284 = vld [vmem:[#allocation5 + $0x1788] sm:$0xff]
    %v1285 = vld [vmem:[#allocation5 + $0x1790] sm:$0xff]
    %v1286 = vld [vmem:[#allocation5 + $0x1798] sm:$0xff]
    %v1287 = vld [vmem:[#allocation5 + $0x17a0] sm:$0xff]
    %v1288 = vld [vmem:[#allocation5 + $0x17a8] sm:$0xff]
    %v1289 = vld [vmem:[#allocation5 + $0x17b0] sm:$0xff]
    %v1290 = vld [vmem:[#allocation5 + $0x17b8] sm:$0xff]
    %v1291 = vld [vmem:[#allocation5 + $0x17c0] sm:$0xff]
    %v1292 = vld [vmem:[#allocation5 + $0x17c8] sm:$0xff]
    %v1293 = vld [vmem:[#allocation5 + $0x17d0] sm:$0xff]
    %v1294 = vld [vmem:[#allocation5 + $0x17d8] sm:$0xff]
    %v1295 = vld [vmem:[#allocation5 + $0x17e0] sm:$0xff]
    %v1296 = vld [vmem:[#allocation5 + $0x17e8] sm:$0xff]
    %v1297 = vld [vmem:[#allocation5 + $0x17f0] sm:$0xff]
    %v1298 = vld [vmem:[#allocation5 + $0x17f8] sm:$0xff]
    %v1299 = vld [vmem:[#allocation7] sm:$0x3]
    %v1301 = vlaneseq
    %v1302 = vshrl.u32 %v1301, 7
    %v1303 = vsub.s32 0, %v1302
    %v1304 = vrot.slane %v1299, %v1303
    %v1305 = vlaneseq
    %v1306 = vshrl.u32 %v1305, 7
    %v1307 = vsub.s32 1, %v1306
    %v1308 = vrot.slane %v1299, %v1307
    %1311 = vmatprep.subr.mxu0 %v532
    %1312 = vmatpush1.msra.mxu0 %v531
    %1313 = vmatprep.subr.mxu0 %v534
    %1314 = vmatpush1.msra.mxu0 %v533
    %1315 = vmatprep.subr.mxu0 %v536
    %1316 = vmatpush1.msra.mxu0 %v535
    %1317 = vmatprep.subr.mxu0 %v538
    %1318 = vmatpush1.msra.mxu0 %v537
    %1319 = vmatprep.subr.mxu0 %v540
    %1320 = vmatpush1.msra.mxu0 %v539
    %1321 = vmatprep.subr.mxu0 %v542
    %1322 = vmatpush1.msra.mxu0 %v541
    %1323 = vmatprep.subr.mxu0 %v544
    %1324 = vmatpush1.msra.mxu0 %v543
    %1325 = vmatprep.subr.mxu0 %v546
    %1326 = vmatpush1.msra.mxu0 %v545
    %1327 = vmatprep.subr.mxu0 %v548
    %1328 = vmatpush1.msra.mxu0 %v547
    %1329 = vmatprep.subr.mxu0 %v550
    %1330 = vmatpush1.msra.mxu0 %v549
    %1331 = vmatprep.subr.mxu0 %v552
    %1332 = vmatpush1.msra.mxu0 %v551
    %1333 = vmatprep.subr.mxu0 %v554
    %1334 = vmatpush1.msra.mxu0 %v553
    %1335 = vmatprep.subr.mxu0 %v556
    %1336 = vmatpush1.msra.mxu0 %v555
    %1337 = vmatprep.subr.mxu0 %v558
    %1338 = vmatpush1.msra.mxu0 %v557
    %1339 = vmatprep.subr.mxu0 %v560
    %1340 = vmatpush1.msra.mxu0 %v559
    %1341 = vmatprep.subr.mxu0 %v562
    %1342 = vmatpush1.msra.mxu0 %v561
    %1343 = vmatprep.subr.mxu0 %v564
    %1344 = vmatpush1.msra.mxu0 %v563
    %1345 = vmatprep.subr.mxu0 %v566
    %1346 = vmatpush1.msra.mxu0 %v565
    %1347 = vmatprep.subr.mxu0 %v568
    %1348 = vmatpush1.msra.mxu0 %v567
    %1349 = vmatprep.subr.mxu0 %v570
    %1350 = vmatpush1.msra.mxu0 %v569
    %1351 = vmatprep.subr.mxu0 %v572
    %1352 = vmatpush1.msra.mxu0 %v571
    %1353 = vmatprep.subr.mxu0 %v574
    %1354 = vmatpush1.msra.mxu0 %v573
    %1355 = vmatprep.subr.mxu0 %v576
    %1356 = vmatpush1.msra.mxu0 %v575
    %1357 = vmatprep.subr.mxu0 %v578
    %1358 = vmatpush1.msra.mxu0 %v577
    %1359 = vmatprep.subr.mxu0 %v580
    %1360 = vmatpush1.msra.mxu0 %v579
    %1361 = vmatprep.subr.mxu0 %v582
    %1362 = vmatpush1.msra.mxu0 %v581
    %1363 = vmatprep.subr.mxu0 %v584
    %1364 = vmatpush1.msra.mxu0 %v583
    %1365 = vmatprep.subr.mxu0 %v586
    %1366 = vmatpush1.msra.mxu0 %v585
    %1367 = vmatprep.subr.mxu0 %v588
    %1368 = vmatpush1.msra.mxu0 %v587
    %1369 = vmatprep.subr.mxu0 %v590
    %1370 = vmatpush1.msra.mxu0 %v589
    %1371 = vmatprep.subr.mxu0 %v592
    %1372 = vmatpush1.msra.mxu0 %v591
    %1373 = vmatprep.subr.mxu0 %v594
    %1374 = vmatpush1.msra.mxu0 %v593
    %1375 = vmatprep.mubr.f32.mxu0 %v148
    %1376 = vmatmul.mubr.f32.gmra.mrb[0].mxu0 %v147
    %v1377 = vpop.f32.mrb[0].mxu0
    %v1378 = vadd.f32 %v1304, %v1377
    %v1379 = vpop.f32.mrb[0].mxu0
    %v1380 = vadd.f32 %v1308, %v1379
    %1381 = vmatprep.mubr.f32.mxu0 %v172
    %1382 = vmatmul.mubr.f32.gmra.mrb[0].mxu0 %v171
    %v1383 = vpop.f32.mrb[0].mxu0
    %v1384 = vadd.f32 %v1304, %v1383
    %v1385 = vpop.f32.mrb[0].mxu0
    %v1386 = vadd.f32 %v1308, %v1385
    %1387 = vmatprep.mubr.f32.mxu0 %v196
    %1388 = vmatmul.mubr.f32.gmra.mrb[0].mxu0 %v195
    %v1389 = vpop.f32.mrb[0].mxu0
    %v1390 = vadd.f32 %v1304, %v1389
    %v1391 = vpop.f32.mrb[0].mxu0
    %v1392 = vadd.f32 %v1308, %v1391
    %1393 = vmatprep.mubr.f32.mxu0 %v220
    %1394 = vmatmul.mubr.f32.gmra.mrb[0].mxu0 %v219
    %v1395 = vpop.f32.mrb[0].mxu0
    %v1396 = vadd.f32 %v1304, %v1395
    %v1397 = vpop.f32.mrb[0].mxu0
    %v1398 = vadd.f32 %v1308, %v1397
    %1399 = vmatprep.mubr.f32.mxu0 %v244
    %1400 = vmatmul.mubr.f32.gmra.mrb[0].mxu0 %v243
    %v1401 = vpop.f32.mrb[0].mxu0
    %v1402 = vadd.f32 %v1304, %v1401
    %v1403 = vpop.f32.mrb[0].mxu0
    %v1404 = vadd.f32 %v1308, %v1403
    %1405 = vmatprep.mubr.f32.mxu0 %v268
    %1406 = vmatmul.mubr.f32.gmra.mrb[0].mxu0 %v267
    %v1407 = vpop.f32.mrb[0].mxu0
    %v1408 = vadd.f32 %v1304, %v1407
    %v1409 = vpop.f32.mrb[0].mxu0
    %v1410 = vadd.f32 %v1308, %v1409
    %1411 = vmatprep.mubr.f32.mxu0 %v292
    %1412 = vmatmul.mubr.f32.gmra.mrb[0].mxu0 %v291
    %v1413 = vpop.f32.mrb[0].mxu0
    %v1414 = vadd.f32 %v1304, %v1413
    %v1415 = vpop.f32.mrb[0].mxu0
    %v1416 = vadd.f32 %v1308, %v1415
    %1417 = vmatprep.mubr.f32.mxu0 %v316
    %1418 = vmatmul.mubr.f32.gmra.mrb[0].mxu0 %v315
    %v1419 = vpop.f32.mrb[0].mxu0
    %v1420 = vadd.f32 %v1304, %v1419
    %v1421 = vpop.f32.mrb[0].mxu0
    %v1422 = vadd.f32 %v1308, %v1421
    %1423 = vmatprep.mubr.f32.mxu0 %v340
    %1424 = vmatmul.mubr.f32.gmra.mrb[0].mxu0 %v339
    %v1425 = vpop.f32.mrb[0].mxu0
    %v1426 = vadd.f32 %v1304, %v1425
    %v1427 = vpop.f32.mrb[0].mxu0
    %v1428 = vadd.f32 %v1308, %v1427
    %1429 = vmatprep.mubr.f32.mxu0 %v364
    %1430 = vmatmul.mubr.f32.gmra.mrb[0].mxu0 %v363
    %v1431 = vpop.f32.mrb[0].mxu0
    %v1432 = vadd.f32 %v1304, %v1431
    %v1433 = vpop.f32.mrb[0].mxu0
    %v1434 = vadd.f32 %v1308, %v1433
    %1435 = vmatprep.mubr.f32.mxu0 %v388
    %1436 = vmatmul.mubr.f32.gmra.mrb[0].mxu0 %v387
    %v1437 = vpop.f32.mrb[0].mxu0
    %v1438 = vadd.f32 %v1304, %v1437
    %v1439 = vpop.f32.mrb[0].mxu0
    %v1440 = vadd.f32 %v1308, %v1439
    %1441 = vmatprep.mubr.f32.mxu0 %v412
    %1442 = vmatmul.mubr.f32.gmra.mrb[0].mxu0 %v411
    %v1443 = vpop.f32.mrb[0].mxu0
    %v1444 = vadd.f32 %v1304, %v1443
    %v1445 = vpop.f32.mrb[0].mxu0
    %v1446 = vadd.f32 %v1308, %v1445
    %1447 = vmatprep.mubr.f32.mxu0 %v436
    %1448 = vmatmul.mubr.f32.gmra.mrb[0].mxu0 %v435
    %v1449 = vpop.f32.mrb[0].mxu0
    %v1450 = vadd.f32 %v1304, %v1449
    %v1451 = vpop.f32.mrb[0].mxu0
    %v1452 = vadd.f32 %v1308, %v1451
    %1453 = vmatprep.mubr.f32.mxu0 %v460
    %1454 = vmatmul.mubr.f32.gmra.mrb[0].mxu0 %v459
    %v1455 = vpop.f32.mrb[0].mxu0
    %v1456 = vadd.f32 %v1304, %v1455
    %v1457 = vpop.f32.mrb[0].mxu0
    %v1458 = vadd.f32 %v1308, %v1457
    %1459 = vmatprep.mubr.f32.mxu0 %v484
    %1460 = vmatmul.mubr.f32.gmra.mrb[0].mxu0 %v483
    %v1461 = vpop.f32.mrb[0].mxu0
    %v1462 = vadd.f32 %v1304, %v1461
    %v1463 = vpop.f32.mrb[0].mxu0
    %v1464 = vadd.f32 %v1308, %v1463
    %1465 = vmatprep.mubr.f32.mxu0 %v508
    %1466 = vmatmul.mubr.f32.gmra.mrb[0].mxu0 %v507
    %v1467 = vpop.f32.mrb[0].mxu0
    %v1468 = vadd.f32 %v1304, %v1467
    %v1469 = vpop.f32.mrb[0].mxu0
    %v1470 = vadd.f32 %v1308, %v1469
    %1471 = vdwg.mxu0
    %1472 = vmatprep.subr.mxu0 %v596
    %1473 = vmatpush1.msra.mxu0 %v595
    %1474 = vmatprep.subr.mxu0 %v598
    %1475 = vmatpush1.msra.mxu0 %v597
    %1476 = vmatprep.subr.mxu0 %v600
    %1477 = vmatpush1.msra.mxu0 %v599
    %1478 = vmatprep.subr.mxu0 %v602
    %1479 = vmatpush1.msra.mxu0 %v601
    %1480 = vmatprep.subr.mxu0 %v604
    %1481 = vmatpush1.msra.mxu0 %v603
    %1482 = vmatprep.subr.mxu0 %v606
    %1483 = vmatpush1.msra.mxu0 %v605
    %1484 = vmatprep.subr.mxu0 %v608
    %1485 = vmatpush1.msra.mxu0 %v607
    %1486 = vmatprep.subr.mxu0 %v610
    %1487 = vmatpush1.msra.mxu0 %v609
    %1488 = vmatprep.subr.mxu0 %v612
    %1489 = vmatpush1.msra.mxu0 %v611
    %1490 = vmatprep.subr.mxu0 %v614
    %1491 = vmatpush1.msra.mxu0 %v613
    %1492 = vmatprep.subr.mxu0 %v616
    %1493 = vmatpush1.msra.mxu0 %v615
    %1494 = vmatprep.subr.mxu0 %v618
    %1495 = vmatpush1.msra.mxu0 %v617
    %1496 = vmatprep.subr.mxu0 %v620
    %1497 = vmatpush1.msra.mxu0 %v619
    %1498 = vmatprep.subr.mxu0 %v622
    %1499 = vmatpush1.msra.mxu0 %v621
    %1500 = vmatprep.subr.mxu0 %v624
    %1501 = vmatpush1.msra.mxu0 %v623
    %1502 = vmatprep.subr.mxu0 %v626
    %1503 = vmatpush1.msra.mxu0 %v625
    %1504 = vmatprep.subr.mxu0 %v628
    %1505 = vmatpush1.msra.mxu0 %v627
    %1506 = vmatprep.subr.mxu0 %v630
    %1507 = vmatpush1.msra.mxu0 %v629
    %1508 = vmatprep.subr.mxu0 %v632
    %1509 = vmatpush1.msra.mxu0 %v631
    %1510 = vmatprep.subr.mxu0 %v634
    %1511 = vmatpush1.msra.mxu0 %v633
    %1512 = vmatprep.subr.mxu0 %v636
    %1513 = vmatpush1.msra.mxu0 %v635
    %1514 = vmatprep.subr.mxu0 %v638
    %1515 = vmatpush1.msra.mxu0 %v637
    %1516 = vmatprep.subr.mxu0 %v640
    %1517 = vmatpush1.msra.mxu0 %v639
    %1518 = vmatprep.subr.mxu0 %v642
    %1519 = vmatpush1.msra.mxu0 %v641
    %1520 = vmatprep.subr.mxu0 %v644
    %1521 = vmatpush1.msra.mxu0 %v643
    %1522 = vmatprep.subr.mxu0 %v646
    %1523 = vmatpush1.msra.mxu0 %v645
    %1524 = vmatprep.subr.mxu0 %v648
    %1525 = vmatpush1.msra.mxu0 %v647
    %1526 = vmatprep.subr.mxu0 %v650
    %1527 = vmatpush1.msra.mxu0 %v649
    %1528 = vmatprep.subr.mxu0 %v652
    %1529 = vmatpush1.msra.mxu0 %v651
    %1530 = vmatprep.subr.mxu0 %v654
    %1531 = vmatpush1.msra.mxu0 %v653
    %1532 = vmatprep.subr.mxu0 %v656
    %1533 = vmatpush1.msra.mxu0 %v655
    %1534 = vmatprep.subr.mxu0 %v658
    %1535 = vmatpush1.msra.mxu0 %v657
    %1536 = vmatprep.mubr.f32.mxu0 %v150
    %1537 = vmatmul.mubr.f32.gmra.mrb[0].mxu0 %v149
    %v1538 = vpop.f32.mrb[0].mxu0
    %v1539 = vadd.f32 %v1378, %v1538
    %v1540 = vpop.f32.mrb[0].mxu0
    %v1541 = vadd.f32 %v1380, %v1540
    %1542 = vmatprep.mubr.f32.mxu0 %v174
    %1543 = vmatmul.mubr.f32.gmra.mrb[0].mxu0 %v173
    %v1544 = vpop.f32.mrb[0].mxu0
    %v1545 = vadd.f32 %v1384, %v1544
    %v1546 = vpop.f32.mrb[0].mxu0
    %v1547 = vadd.f32 %v1386, %v1546
    %1548 = vmatprep.mubr.f32.mxu0 %v198
    %1549 = vmatmul.mubr.f32.gmra.mrb[0].mxu0 %v197
    %v1550 = vpop.f32.mrb[0].mxu0
    %v1551 = vadd.f32 %v1390, %v1550
    %v1552 = vpop.f32.mrb[0].mxu0
    %v1553 = vadd.f32 %v1392, %v1552
    %1554 = vmatprep.mubr.f32.mxu0 %v222
    %1555 = vmatmul.mubr.f32.gmra.mrb[0].mxu0 %v221
    %v1556 = vpop.f32.mrb[0].mxu0
    %v1557 = vadd.f32 %v1396, %v1556
    %v1558 = vpop.f32.mrb[0].mxu0
    %v1559 = vadd.f32 %v1398, %v1558
    %1560 = vmatprep.mubr.f32.mxu0 %v246
    %1561 = vmatmul.mubr.f32.gmra.mrb[0].mxu0 %v245
    %v1562 = vpop.f32.mrb[0].mxu0
    %v1563 = vadd.f32 %v1402, %v1562
    %v1564 = vpop.f32.mrb[0].mxu0
    %v1565 = vadd.f32 %v1404, %v1564
    %1566 = vmatprep.mubr.f32.mxu0 %v270
    %1567 = vmatmul.mubr.f32.gmra.mrb[0].mxu0 %v269
    %v1568 = vpop.f32.mrb[0].mxu0
    %v1569 = vadd.f32 %v1408, %v1568
    %v1570 = vpop.f32.mrb[0].mxu0
    %v1571 = vadd.f32 %v1410, %v1570
    %1572 = vmatprep.mubr.f32.mxu0 %v294
    %1573 = vmatmul.mubr.f32.gmra.mrb[0].mxu0 %v293
    %v1574 = vpop.f32.mrb[0].mxu0
    %v1575 = vadd.f32 %v1414, %v1574
    %v1576 = vpop.f32.mrb[0].mxu0
    %v1577 = vadd.f32 %v1416, %v1576
    %1578 = vmatprep.mubr.f32.mxu0 %v318
    %1579 = vmatmul.mubr.f32.gmra.mrb[0].mxu0 %v317
    %v1580 = vpop.f32.mrb[0].mxu0
    %v1581 = vadd.f32 %v1420, %v1580
    %v1582 = vpop.f32.mrb[0].mxu0
    %v1583 = vadd.f32 %v1422, %v1582
    %1584 = vmatprep.mubr.f32.mxu0 %v342
    %1585 = vmatmul.mubr.f32.gmra.mrb[0].mxu0 %v341
    %v1586 = vpop.f32.mrb[0].mxu0
    %v1587 = vadd.f32 %v1426, %v1586
    %v1588 = vpop.f32.mrb[0].mxu0
    %v1589 = vadd.f32 %v1428, %v1588
    %1590 = vmatprep.mubr.f32.mxu0 %v366
    %1591 = vmatmul.mubr.f32.gmra.mrb[0].mxu0 %v365
    %v1592 = vpop.f32.mrb[0].mxu0
    %v1593 = vadd.f32 %v1432, %v1592
    %v1594 = vpop.f32.mrb[0].mxu0
    %v1595 = vadd.f32 %v1434, %v1594
    %1596 = vmatprep.mubr.f32.mxu0 %v390
    %1597 = vmatmul.mubr.f32.gmra.mrb[0].mxu0 %v389
    %v1598 = vpop.f32.mrb[0].mxu0
    %v1599 = vadd.f32 %v1438, %v1598
    %v1600 = vpop.f32.mrb[0].mxu0
    %v1601 = vadd.f32 %v1440, %v1600
    %1602 = vmatprep.mubr.f32.mxu0 %v414
    %1603 = vmatmul.mubr.f32.gmra.mrb[0].mxu0 %v413
    %v1604 = vpop.f32.mrb[0].mxu0
    %v1605 = vadd.f32 %v1444, %v1604
    %v1606 = vpop.f32.mrb[0].mxu0
    %v1607 = vadd.f32 %v1446, %v1606
    %1608 = vmatprep.mubr.f32.mxu0 %v438
    %1609 = vmatmul.mubr.f32.gmra.mrb[0].mxu0 %v437
    %v1610 = vpop.f32.mrb[0].mxu0
    %v1611 = vadd.f32 %v1450, %v1610
    %v1612 = vpop.f32.mrb[0].mxu0
    %v1613 = vadd.f32 %v1452, %v1612
    %1614 = vmatprep.mubr.f32.mxu0 %v462
    %1615 = vmatmul.mubr.f32.gmra.mrb[0].mxu0 %v461
    %v1616 = vpop.f32.mrb[0].mxu0
    %v1617 = vadd.f32 %v1456, %v1616
    %v1618 = vpop.f32.mrb[0].mxu0
    %v1619 = vadd.f32 %v1458, %v1618
    %1620 = vmatprep.mubr.f32.mxu0 %v486
    %1621 = vmatmul.mubr.f32.gmra.mrb[0].mxu0 %v485
    %v1622 = vpop.f32.mrb[0].mxu0
    %v1623 = vadd.f32 %v1462, %v1622
    %v1624 = vpop.f32.mrb[0].mxu0
    %v1625 = vadd.f32 %v1464, %v1624
    %1626 = vmatprep.mubr.f32.mxu0 %v510
    %1627 = vmatmul.mubr.f32.gmra.mrb[0].mxu0 %v509
    %v1628 = vpop.f32.mrb[0].mxu0
    %v1629 = vadd.f32 %v1468, %v1628
    %v1630 = vpop.f32.mrb[0].mxu0
    %v1631 = vadd.f32 %v1470, %v1630
    %1632 = vdwg.mxu0
    %1633 = vmatprep.subr.mxu0 %v660
    %1634 = vmatpush1.msra.mxu0 %v659
    %1635 = vmatprep.subr.mxu0 %v662
    %1636 = vmatpush1.msra.mxu0 %v661
    %1637 = vmatprep.subr.mxu0 %v664
    %1638 = vmatpush1.msra.mxu0 %v663
    %1639 = vmatprep.subr.mxu0 %v666
    %1640 = vmatpush1.msra.mxu0 %v665
    %1641 = vmatprep.subr.mxu0 %v668
    %1642 = vmatpush1.msra.mxu0 %v667
    %1643 = vmatprep.subr.mxu0 %v670
    %1644 = vmatpush1.msra.mxu0 %v669
    %1645 = vmatprep.subr.mxu0 %v672
    %1646 = vmatpush1.msra.mxu0 %v671
    %1647 = vmatprep.subr.mxu0 %v674
    %1648 = vmatpush1.msra.mxu0 %v673
    %1649 = vmatprep.subr.mxu0 %v676
    %1650 = vmatpush1.msra.mxu0 %v675
    %1651 = vmatprep.subr.mxu0 %v678
    %1652 = vmatpush1.msra.mxu0 %v677
    %1653 = vmatprep.subr.mxu0 %v680
    %1654 = vmatpush1.msra.mxu0 %v679
    %1655 = vmatprep.subr.mxu0 %v682
    %1656 = vmatpush1.msra.mxu0 %v681
    %1657 = vmatprep.subr.mxu0 %v684
    %1658 = vmatpush1.msra.mxu0 %v683
    %1659 = vmatprep.subr.mxu0 %v686
    %1660 = vmatpush1.msra.mxu0 %v685
    %1661 = vmatprep.subr.mxu0 %v688
    %1662 = vmatpush1.msra.mxu0 %v687
    %1663 = vmatprep.subr.mxu0 %v690
    %1664 = vmatpush1.msra.mxu0 %v689
    %1665 = vmatprep.subr.mxu0 %v692
    %1666 = vmatpush1.msra.mxu0 %v691
    %1667 = vmatprep.subr.mxu0 %v694
    %1668 = vmatpush1.msra.mxu0 %v693
    %1669 = vmatprep.subr.mxu0 %v696
    %1670 = vmatpush1.msra.mxu0 %v695
    %1671 = vmatprep.subr.mxu0 %v698
    %1672 = vmatpush1.msra.mxu0 %v697
    %1673 = vmatprep.subr.mxu0 %v700
    %1674 = vmatpush1.msra.mxu0 %v699
    %1675 = vmatprep.subr.mxu0 %v702
    %1676 = vmatpush1.msra.mxu0 %v701
    %1677 = vmatprep.subr.mxu0 %v704
    %1678 = vmatpush1.msra.mxu0 %v703
    %1679 = vmatprep.subr.mxu0 %v706
    %1680 = vmatpush1.msra.mxu0 %v705
    %1681 = vmatprep.subr.mxu0 %v708
    %1682 = vmatpush1.msra.mxu0 %v707
    %1683 = vmatprep.subr.mxu0 %v710
    %1684 = vmatpush1.msra.mxu0 %v709
    %1685 = vmatprep.subr.mxu0 %v712
    %1686 = vmatpush1.msra.mxu0 %v711
    %1687 = vmatprep.subr.mxu0 %v714
    %1688 = vmatpush1.msra.mxu0 %v713
    %1689 = vmatprep.subr.mxu0 %v716
    %1690 = vmatpush1.msra.mxu0 %v715
    %1691 = vmatprep.subr.mxu0 %v718
    %1692 = vmatpush1.msra.mxu0 %v717
    %1693 = vmatprep.subr.mxu0 %v720
    %1694 = vmatpush1.msra.mxu0 %v719
    %1695 = vmatprep.subr.mxu0 %v722
    %1696 = vmatpush1.msra.mxu0 %v721
    %1697 = vmatprep.mubr.f32.mxu0 %v152
    %1698 = vmatmul.mubr.f32.gmra.mrb[0].mxu0 %v151
    %v1699 = vpop.f32.mrb[0].mxu0
    %v1700 = vadd.f32 %v1539, %v1699
    %v1701 = vpop.f32.mrb[0].mxu0
    %v1702 = vadd.f32 %v1541, %v1701
    %1703 = vmatprep.mubr.f32.mxu0 %v176
    %1704 = vmatmul.mubr.f32.gmra.mrb[0].mxu0 %v175
    %v1705 = vpop.f32.mrb[0].mxu0
    %v1706 = vadd.f32 %v1545, %v1705
    %v1707 = vpop.f32.mrb[0].mxu0
    %v1708 = vadd.f32 %v1547, %v1707
    %1709 = vmatprep.mubr.f32.mxu0 %v200
    %1710 = vmatmul.mubr.f32.gmra.mrb[0].mxu0 %v199
    %v1711 = vpop.f32.mrb[0].mxu0
    %v1712 = vadd.f32 %v1551, %v1711
    %v1713 = vpop.f32.mrb[0].mxu0
    %v1714 = vadd.f32 %v1553, %v1713
    %1715 = vmatprep.mubr.f32.mxu0 %v224
    %1716 = vmatmul.mubr.f32.gmra.mrb[0].mxu0 %v223
    %v1717 = vpop.f32.mrb[0].mxu0
    %v1718 = vadd.f32 %v1557, %v1717
    %v1719 = vpop.f32.mrb[0].mxu0
    %v1720 = vadd.f32 %v1559, %v1719
    %1721 = vmatprep.mubr.f32.mxu0 %v248
    %1722 = vmatmul.mubr.f32.gmra.mrb[0].mxu0 %v247
    %v1723 = vpop.f32.mrb[0].mxu0
    %v1724 = vadd.f32 %v1563, %v1723
    %v1725 = vpop.f32.mrb[0].mxu0
    %v1726 = vadd.f32 %v1565, %v1725
    %1727 = vmatprep.mubr.f32.mxu0 %v272
    %1728 = vmatmul.mubr.f32.gmra.mrb[0].mxu0 %v271
    %v1729 = vpop.f32.mrb[0].mxu0
    %v1730 = vadd.f32 %v1569, %v1729
    %v1731 = vpop.f32.mrb[0].mxu0
    %v1732 = vadd.f32 %v1571, %v1731
    %1733 = vmatprep.mubr.f32.mxu0 %v296
    %1734 = vmatmul.mubr.f32.gmra.mrb[0].mxu0 %v295
    %v1735 = vpop.f32.mrb[0].mxu0
    %v1736 = vadd.f32 %v1575, %v1735
    %v1737 = vpop.f32.mrb[0].mxu0
    %v1738 = vadd.f32 %v1577, %v1737
    %1739 = vmatprep.mubr.f32.mxu0 %v320
    %1740 = vmatmul.mubr.f32.gmra.mrb[0].mxu0 %v319
    %v1741 = vpop.f32.mrb[0].mxu0
    %v1742 = vadd.f32 %v1581, %v1741
    %v1743 = vpop.f32.mrb[0].mxu0
    %v1744 = vadd.f32 %v1583, %v1743
    %1745 = vmatprep.mubr.f32.mxu0 %v344
    %1746 = vmatmul.mubr.f32.gmra.mrb[0].mxu0 %v343
    %v1747 = vpop.f32.mrb[0].mxu0
    %v1748 = vadd.f32 %v1587, %v1747
    %v1749 = vpop.f32.mrb[0].mxu0
    %v1750 = vadd.f32 %v1589, %v1749
    %1751 = vmatprep.mubr.f32.mxu0 %v368
    %1752 = vmatmul.mubr.f32.gmra.mrb[0].mxu0 %v367
    %v1753 = vpop.f32.mrb[0].mxu0
    %v1754 = vadd.f32 %v1593, %v1753
    %v1755 = vpop.f32.mrb[0].mxu0
    %v1756 = vadd.f32 %v1595, %v1755
    %1757 = vmatprep.mubr.f32.mxu0 %v392
    %1758 = vmatmul.mubr.f32.gmra.mrb[0].mxu0 %v391
    %v1759 = vpop.f32.mrb[0].mxu0
    %v1760 = vadd.f32 %v1599, %v1759
    %v1761 = vpop.f32.mrb[0].mxu0
    %v1762 = vadd.f32 %v1601, %v1761
    %1763 = vmatprep.mubr.f32.mxu0 %v416
    %1764 = vmatmul.mubr.f32.gmra.mrb[0].mxu0 %v415
    %v1765 = vpop.f32.mrb[0].mxu0
    %v1766 = vadd.f32 %v1605, %v1765
    %v1767 = vpop.f32.mrb[0].mxu0
    %v1768 = vadd.f32 %v1607, %v1767
    %1769 = vmatprep.mubr.f32.mxu0 %v440
    %1770 = vmatmul.mubr.f32.gmra.mrb[0].mxu0 %v439
    %v1771 = vpop.f32.mrb[0].mxu0
    %v1772 = vadd.f32 %v1611, %v1771
    %v1773 = vpop.f32.mrb[0].mxu0
    %v1774 = vadd.f32 %v1613, %v1773
    %1775 = vmatprep.mubr.f32.mxu0 %v464
    %1776 = vmatmul.mubr.f32.gmra.mrb[0].mxu0 %v463
    %v1777 = vpop.f32.mrb[0].mxu0
    %v1778 = vadd.f32 %v1617, %v1777
    %v1779 = vpop.f32.mrb[0].mxu0
    %v1780 = vadd.f32 %v1619, %v1779
    %1781 = vmatprep.mubr.f32.mxu0 %v488
    %1782 = vmatmul.mubr.f32.gmra.mrb[0].mxu0 %v487
    %v1783 = vpop.f32.mrb[0].mxu0
    %v1784 = vadd.f32 %v1623, %v1783
    %v1785 = vpop.f32.mrb[0].mxu0
    %v1786 = vadd.f32 %v1625, %v1785
    %1787 = vmatprep.mubr.f32.mxu0 %v512
    %1788 = vmatmul.mubr.f32.gmra.mrb[0].mxu0 %v511
    %v1789 = vpop.f32.mrb[0].mxu0
    %v1790 = vadd.f32 %v1629, %v1789
    %v1791 = vpop.f32.mrb[0].mxu0
    %v1792 = vadd.f32 %v1631, %v1791
    %1793 = vdwg.mxu0
    %1794 = vmatprep.subr.mxu0 %v724
    %1795 = vmatpush1.msra.mxu0 %v723
    %1796 = vmatprep.subr.mxu0 %v726
    %1797 = vmatpush1.msra.mxu0 %v725
    %1798 = vmatprep.subr.mxu0 %v728
    %1799 = vmatpush1.msra.mxu0 %v727
    %1800 = vmatprep.subr.mxu0 %v730
    %1801 = vmatpush1.msra.mxu0 %v729
    %1802 = vmatprep.subr.mxu0 %v732
    %1803 = vmatpush1.msra.mxu0 %v731
    %1804 = vmatprep.subr.mxu0 %v734
    %1805 = vmatpush1.msra.mxu0 %v733
    %1806 = vmatprep.subr.mxu0 %v736
    %1807 = vmatpush1.msra.mxu0 %v735
    %1808 = vmatprep.subr.mxu0 %v738
    %1809 = vmatpush1.msra.mxu0 %v737
    %1810 = vmatprep.subr.mxu0 %v740
    %1811 = vmatpush1.msra.mxu0 %v739
    %1812 = vmatprep.subr.mxu0 %v742
    %1813 = vmatpush1.msra.mxu0 %v741
    %1814 = vmatprep.subr.mxu0 %v744
    %1815 = vmatpush1.msra.mxu0 %v743
    %1816 = vmatprep.subr.mxu0 %v746
    %1817 = vmatpush1.msra.mxu0 %v745
    %1818 = vmatprep.subr.mxu0 %v748
    %1819 = vmatpush1.msra.mxu0 %v747
    %1820 = vmatprep.subr.mxu0 %v750
    %1821 = vmatpush1.msra.mxu0 %v749
    %1822 = vmatprep.subr.mxu0 %v752
    %1823 = vmatpush1.msra.mxu0 %v751
    %1824 = vmatprep.subr.mxu0 %v754
    %1825 = vmatpush1.msra.mxu0 %v753
    %1826 = vmatprep.subr.mxu0 %v756
    %1827 = vmatpush1.msra.mxu0 %v755
    %1828 = vmatprep.subr.mxu0 %v758
    %1829 = vmatpush1.msra.mxu0 %v757
    %1830 = vmatprep.subr.mxu0 %v760
    %1831 = vmatpush1.msra.mxu0 %v759
    %1832 = vmatprep.subr.mxu0 %v762
    %1833 = vmatpush1.msra.mxu0 %v761
    %1834 = vmatprep.subr.mxu0 %v764
    %1835 = vmatpush1.msra.mxu0 %v763
    %1836 = vmatprep.subr.mxu0 %v766
    %1837 = vmatpush1.msra.mxu0 %v765
    %1838 = vmatprep.subr.mxu0 %v768
    %1839 = vmatpush1.msra.mxu0 %v767
    %1840 = vmatprep.subr.mxu0 %v770
    %1841 = vmatpush1.msra.mxu0 %v769
    %1842 = vmatprep.subr.mxu0 %v772
    %1843 = vmatpush1.msra.mxu0 %v771
    %1844 = vmatprep.subr.mxu0 %v774
    %1845 = vmatpush1.msra.mxu0 %v773
    %1846 = vmatprep.subr.mxu0 %v776
    %1847 = vmatpush1.msra.mxu0 %v775
    %1848 = vmatprep.subr.mxu0 %v778
    %1849 = vmatpush1.msra.mxu0 %v777
    %1850 = vmatprep.subr.mxu0 %v780
    %1851 = vmatpush1.msra.mxu0 %v779
    %1852 = vmatprep.subr.mxu0 %v782
    %1853 = vmatpush1.msra.mxu0 %v781
    %1854 = vmatprep.subr.mxu0 %v784
    %1855 = vmatpush1.msra.mxu0 %v783
    %1856 = vmatprep.subr.mxu0 %v786
    %1857 = vmatpush1.msra.mxu0 %v785
    %1858 = vmatprep.mubr.f32.mxu0 %v154
    %1859 = vmatmul.mubr.f32.gmra.mrb[0].mxu0 %v153
    %v1860 = vpop.f32.mrb[0].mxu0
    %v1861 = vadd.f32 %v1700, %v1860
    %v1862 = vpop.f32.mrb[0].mxu0
    %v1863 = vadd.f32 %v1702, %v1862
    %1864 = vmatprep.mubr.f32.mxu0 %v178
    %1865 = vmatmul.mubr.f32.gmra.mrb[0].mxu0 %v177
    %v1866 = vpop.f32.mrb[0].mxu0
    %v1867 = vadd.f32 %v1706, %v1866
    %v1868 = vpop.f32.mrb[0].mxu0
    %v1869 = vadd.f32 %v1708, %v1868
    %1870 = vmatprep.mubr.f32.mxu0 %v202
    %1871 = vmatmul.mubr.f32.gmra.mrb[0].mxu0 %v201
    %v1872 = vpop.f32.mrb[0].mxu0
    %v1873 = vadd.f32 %v1712, %v1872
    %v1874 = vpop.f32.mrb[0].mxu0
    %v1875 = vadd.f32 %v1714, %v1874
    %1876 = vmatprep.mubr.f32.mxu0 %v226
    %1877 = vmatmul.mubr.f32.gmra.mrb[0].mxu0 %v225
    %v1878 = vpop.f32.mrb[0].mxu0
    %v1879 = vadd.f32 %v1718, %v1878
    %v1880 = vpop.f32.mrb[0].mxu0
    %v1881 = vadd.f32 %v1720, %v1880
    %1882 = vmatprep.mubr.f32.mxu0 %v250
    %1883 = vmatmul.mubr.f32.gmra.mrb[0].mxu0 %v249
    %v1884 = vpop.f32.mrb[0].mxu0
    %v1885 = vadd.f32 %v1724, %v1884
    %v1886 = vpop.f32.mrb[0].mxu0
    %v1887 = vadd.f32 %v1726, %v1886
    %1888 = vmatprep.mubr.f32.mxu0 %v274
    %1889 = vmatmul.mubr.f32.gmra.mrb[0].mxu0 %v273
    %v1890 = vpop.f32.mrb[0].mxu0
    %v1891 = vadd.f32 %v1730, %v1890
    %v1892 = vpop.f32.mrb[0].mxu0
    %v1893 = vadd.f32 %v1732, %v1892
    %1894 = vmatprep.mubr.f32.mxu0 %v298
    %1895 = vmatmul.mubr.f32.gmra.mrb[0].mxu0 %v297
    %v1896 = vpop.f32.mrb[0].mxu0
    %v1897 = vadd.f32 %v1736, %v1896
    %v1898 = vpop.f32.mrb[0].mxu0
    %v1899 = vadd.f32 %v1738, %v1898
    %1900 = vmatprep.mubr.f32.mxu0 %v322
    %1901 = vmatmul.mubr.f32.gmra.mrb[0].mxu0 %v321
    %v1902 = vpop.f32.mrb[0].mxu0
    %v1903 = vadd.f32 %v1742, %v1902
    %v1904 = vpop.f32.mrb[0].mxu0
    %v1905 = vadd.f32 %v1744, %v1904
    %1906 = vmatprep.mubr.f32.mxu0 %v346
    %1907 = vmatmul.mubr.f32.gmra.mrb[0].mxu0 %v345
    %v1908 = vpop.f32.mrb[0].mxu0
    %v1909 = vadd.f32 %v1748, %v1908
    %v1910 = vpop.f32.mrb[0].mxu0
    %v1911 = vadd.f32 %v1750, %v1910
    %1912 = vmatprep.mubr.f32.mxu0 %v370
    %1913 = vmatmul.mubr.f32.gmra.mrb[0].mxu0 %v369
    %v1914 = vpop.f32.mrb[0].mxu0
    %v1915 = vadd.f32 %v1754, %v1914
    %v1916 = vpop.f32.mrb[0].mxu0
    %v1917 = vadd.f32 %v1756, %v1916
    %1918 = vmatprep.mubr.f32.mxu0 %v394
    %1919 = vmatmul.mubr.f32.gmra.mrb[0].mxu0 %v393
    %v1920 = vpop.f32.mrb[0].mxu0
    %v1921 = vadd.f32 %v1760, %v1920
    %v1922 = vpop.f32.mrb[0].mxu0
    %v1923 = vadd.f32 %v1762, %v1922
    %1924 = vmatprep.mubr.f32.mxu0 %v418
    %1925 = vmatmul.mubr.f32.gmra.mrb[0].mxu0 %v417
    %v1926 = vpop.f32.mrb[0].mxu0
    %v1927 = vadd.f32 %v1766, %v1926
    %v1928 = vpop.f32.mrb[0].mxu0
    %v1929 = vadd.f32 %v1768, %v1928
    %1930 = vmatprep.mubr.f32.mxu0 %v442
    %1931 = vmatmul.mubr.f32.gmra.mrb[0].mxu0 %v441
    %v1932 = vpop.f32.mrb[0].mxu0
    %v1933 = vadd.f32 %v1772, %v1932
    %v1934 = vpop.f32.mrb[0].mxu0
    %v1935 = vadd.f32 %v1774, %v1934
    %1936 = vmatprep.mubr.f32.mxu0 %v466
    %1937 = vmatmul.mubr.f32.gmra.mrb[0].mxu0 %v465
    %v1938 = vpop.f32.mrb[0].mxu0
    %v1939 = vadd.f32 %v1778, %v1938
    %v1940 = vpop.f32.mrb[0].mxu0
    %v1941 = vadd.f32 %v1780, %v1940
    %1942 = vmatprep.mubr.f32.mxu0 %v490
    %1943 = vmatmul.mubr.f32.gmra.mrb[0].mxu0 %v489
    %v1944 = vpop.f32.mrb[0].mxu0
    %v1945 = vadd.f32 %v1784, %v1944
    %v1946 = vpop.f32.mrb[0].mxu0
    %v1947 = vadd.f32 %v1786, %v1946
    %1948 = vmatprep.mubr.f32.mxu0 %v514
    %1949 = vmatmul.mubr.f32.gmra.mrb[0].mxu0 %v513
    %v1950 = vpop.f32.mrb[0].mxu0
    %v1951 = vadd.f32 %v1790, %v1950
    %v1952 = vpop.f32.mrb[0].mxu0
    %v1953 = vadd.f32 %v1792, %v1952
    %1954 = vdwg.mxu0
    %1955 = vmatprep.subr.mxu0 %v788
    %1956 = vmatpush1.msra.mxu0 %v787
    %1957 = vmatprep.subr.mxu0 %v790
    %1958 = vmatpush1.msra.mxu0 %v789
    %1959 = vmatprep.subr.mxu0 %v792
    %1960 = vmatpush1.msra.mxu0 %v791
    %1961 = vmatprep.subr.mxu0 %v794
    %1962 = vmatpush1.msra.mxu0 %v793
    %1963 = vmatprep.subr.mxu0 %v796
    %1964 = vmatpush1.msra.mxu0 %v795
    %1965 = vmatprep.subr.mxu0 %v798
    %1966 = vmatpush1.msra.mxu0 %v797
    %1967 = vmatprep.subr.mxu0 %v800
    %1968 = vmatpush1.msra.mxu0 %v799
    %1969 = vmatprep.subr.mxu0 %v802
    %1970 = vmatpush1.msra.mxu0 %v801
    %1971 = vmatprep.subr.mxu0 %v804
    %1972 = vmatpush1.msra.mxu0 %v803
    %1973 = vmatprep.subr.mxu0 %v806
    %1974 = vmatpush1.msra.mxu0 %v805
    %1975 = vmatprep.subr.mxu0 %v808
    %1976 = vmatpush1.msra.mxu0 %v807
    %1977 = vmatprep.subr.mxu0 %v810
    %1978 = vmatpush1.msra.mxu0 %v809
    %1979 = vmatprep.subr.mxu0 %v812
    %1980 = vmatpush1.msra.mxu0 %v811
    %1981 = vmatprep.subr.mxu0 %v814
    %1982 = vmatpush1.msra.mxu0 %v813
    %1983 = vmatprep.subr.mxu0 %v816
    %1984 = vmatpush1.msra.mxu0 %v815
    %1985 = vmatprep.subr.mxu0 %v818
    %1986 = vmatpush1.msra.mxu0 %v817
    %1987 = vmatprep.subr.mxu0 %v820
    %1988 = vmatpush1.msra.mxu0 %v819
    %1989 = vmatprep.subr.mxu0 %v822
    %1990 = vmatpush1.msra.mxu0 %v821
    %1991 = vmatprep.subr.mxu0 %v824
    %1992 = vmatpush1.msra.mxu0 %v823
    %1993 = vmatprep.subr.mxu0 %v826
    %1994 = vmatpush1.msra.mxu0 %v825
    %1995 = vmatprep.subr.mxu0 %v828
    %1996 = vmatpush1.msra.mxu0 %v827
    %1997 = vmatprep.subr.mxu0 %v830
    %1998 = vmatpush1.msra.mxu0 %v829
    %1999 = vmatprep.subr.mxu0 %v832
    %2000 = vmatpush1.msra.mxu0 %v831
    %2001 = vmatprep.subr.mxu0 %v834
    %2002 = vmatpush1.msra.mxu0 %v833
    %2003 = vmatprep.subr.mxu0 %v836
    %2004 = vmatpush1.msra.mxu0 %v835
    %2005 = vmatprep.subr.mxu0 %v838
    %2006 = vmatpush1.msra.mxu0 %v837
    %2007 = vmatprep.subr.mxu0 %v840
    %2008 = vmatpush1.msra.mxu0 %v839
    %2009 = vmatprep.subr.mxu0 %v842
    %2010 = vmatpush1.msra.mxu0 %v841
    %2011 = vmatprep.subr.mxu0 %v844
    %2012 = vmatpush1.msra.mxu0 %v843
    %2013 = vmatprep.subr.mxu0 %v846
    %2014 = vmatpush1.msra.mxu0 %v845
    %2015 = vmatprep.subr.mxu0 %v848
    %2016 = vmatpush1.msra.mxu0 %v847
    %2017 = vmatprep.subr.mxu0 %v850
    %2018 = vmatpush1.msra.mxu0 %v849
    %2019 = vmatprep.mubr.f32.mxu0 %v156
    %2020 = vmatmul.mubr.f32.gmra.mrb[0].mxu0 %v155
    %v2021 = vpop.f32.mrb[0].mxu0
    %v2022 = vadd.f32 %v1861, %v2021
    %v2023 = vpop.f32.mrb[0].mxu0
    %v2024 = vadd.f32 %v1863, %v2023
    %2025 = vmatprep.mubr.f32.mxu0 %v180
    %2026 = vmatmul.mubr.f32.gmra.mrb[0].mxu0 %v179
    %v2027 = vpop.f32.mrb[0].mxu0
    %v2028 = vadd.f32 %v1867, %v2027
    %v2029 = vpop.f32.mrb[0].mxu0
    %v2030 = vadd.f32 %v1869, %v2029
    %2031 = vmatprep.mubr.f32.mxu0 %v204
    %2032 = vmatmul.mubr.f32.gmra.mrb[0].mxu0 %v203
    %v2033 = vpop.f32.mrb[0].mxu0
    %v2034 = vadd.f32 %v1873, %v2033
    %v2035 = vpop.f32.mrb[0].mxu0
    %v2036 = vadd.f32 %v1875, %v2035
    %2037 = vmatprep.mubr.f32.mxu0 %v228
    %2038 = vmatmul.mubr.f32.gmra.mrb[0].mxu0 %v227
    %v2039 = vpop.f32.mrb[0].mxu0
    %v2040 = vadd.f32 %v1879, %v2039
    %v2041 = vpop.f32.mrb[0].mxu0
    %v2042 = vadd.f32 %v1881, %v2041
    %2043 = vmatprep.mubr.f32.mxu0 %v252
    %2044 = vmatmul.mubr.f32.gmra.mrb[0].mxu0 %v251
    %v2045 = vpop.f32.mrb[0].mxu0
    %v2046 = vadd.f32 %v1885, %v2045
    %v2047 = vpop.f32.mrb[0].mxu0
    %v2048 = vadd.f32 %v1887, %v2047
    %2049 = vmatprep.mubr.f32.mxu0 %v276
    %2050 = vmatmul.mubr.f32.gmra.mrb[0].mxu0 %v275
    %v2051 = vpop.f32.mrb[0].mxu0
    %v2052 = vadd.f32 %v1891, %v2051
    %v2053 = vpop.f32.mrb[0].mxu0
    %v2054 = vadd.f32 %v1893, %v2053
    %2055 = vmatprep.mubr.f32.mxu0 %v300
    %2056 = vmatmul.mubr.f32.gmra.mrb[0].mxu0 %v299
    %v2057 = vpop.f32.mrb[0].mxu0
    %v2058 = vadd.f32 %v1897, %v2057
    %v2059 = vpop.f32.mrb[0].mxu0
    %v2060 = vadd.f32 %v1899, %v2059
    %2061 = vmatprep.mubr.f32.mxu0 %v324
    %2062 = vmatmul.mubr.f32.gmra.mrb[0].mxu0 %v323
    %v2063 = vpop.f32.mrb[0].mxu0
    %v2064 = vadd.f32 %v1903, %v2063
    %v2065 = vpop.f32.mrb[0].mxu0
    %v2066 = vadd.f32 %v1905, %v2065
    %2067 = vmatprep.mubr.f32.mxu0 %v348
    %2068 = vmatmul.mubr.f32.gmra.mrb[0].mxu0 %v347
    %v2069 = vpop.f32.mrb[0].mxu0
    %v2070 = vadd.f32 %v1909, %v2069
    %v2071 = vpop.f32.mrb[0].mxu0
    %v2072 = vadd.f32 %v1911, %v2071
    %2073 = vmatprep.mubr.f32.mxu0 %v372
    %2074 = vmatmul.mubr.f32.gmra.mrb[0].mxu0 %v371
    %v2075 = vpop.f32.mrb[0].mxu0
    %v2076 = vadd.f32 %v1915, %v2075
    %v2077 = vpop.f32.mrb[0].mxu0
    %v2078 = vadd.f32 %v1917, %v2077
    %2079 = vmatprep.mubr.f32.mxu0 %v396
    %2080 = vmatmul.mubr.f32.gmra.mrb[0].mxu0 %v395
    %v2081 = vpop.f32.mrb[0].mxu0
    %v2082 = vadd.f32 %v1921, %v2081
    %v2083 = vpop.f32.mrb[0].mxu0
    %v2084 = vadd.f32 %v1923, %v2083
    %2085 = vmatprep.mubr.f32.mxu0 %v420
    %2086 = vmatmul.mubr.f32.gmra.mrb[0].mxu0 %v419
    %v2087 = vpop.f32.mrb[0].mxu0
    %v2088 = vadd.f32 %v1927, %v2087
    %v2089 = vpop.f32.mrb[0].mxu0
    %v2090 = vadd.f32 %v1929, %v2089
    %2091 = vmatprep.mubr.f32.mxu0 %v444
    %2092 = vmatmul.mubr.f32.gmra.mrb[0].mxu0 %v443
    %v2093 = vpop.f32.mrb[0].mxu0
    %v2094 = vadd.f32 %v1933, %v2093
    %v2095 = vpop.f32.mrb[0].mxu0
    %v2096 = vadd.f32 %v1935, %v2095
    %2097 = vmatprep.mubr.f32.mxu0 %v468
    %2098 = vmatmul.mubr.f32.gmra.mrb[0].mxu0 %v467
    %v2099 = vpop.f32.mrb[0].mxu0
    %v2100 = vadd.f32 %v1939, %v2099
    %v2101 = vpop.f32.mrb[0].mxu0
    %v2102 = vadd.f32 %v1941, %v2101
    %2103 = vmatprep.mubr.f32.mxu0 %v492
    %2104 = vmatmul.mubr.f32.gmra.mrb[0].mxu0 %v491
    %v2105 = vpop.f32.mrb[0].mxu0
    %v2106 = vadd.f32 %v1945, %v2105
    %v2107 = vpop.f32.mrb[0].mxu0
    %v2108 = vadd.f32 %v1947, %v2107
    %2109 = vmatprep.mubr.f32.mxu0 %v516
    %2110 = vmatmul.mubr.f32.gmra.mrb[0].mxu0 %v515
    %v2111 = vpop.f32.mrb[0].mxu0
    %v2112 = vadd.f32 %v1951, %v2111
    %v2113 = vpop.f32.mrb[0].mxu0
    %v2114 = vadd.f32 %v1953, %v2113
    %2115 = vdwg.mxu0
    %2116 = vmatprep.subr.mxu0 %v852
    %2117 = vmatpush1.msra.mxu0 %v851
    %2118 = vmatprep.subr.mxu0 %v854
    %2119 = vmatpush1.msra.mxu0 %v853
    %2120 = vmatprep.subr.mxu0 %v856
    %2121 = vmatpush1.msra.mxu0 %v855
    %2122 = vmatprep.subr.mxu0 %v858
    %2123 = vmatpush1.msra.mxu0 %v857
    %2124 = vmatprep.subr.mxu0 %v860
    %2125 = vmatpush1.msra.mxu0 %v859
    %2126 = vmatprep.subr.mxu0 %v862
    %2127 = vmatpush1.msra.mxu0 %v861
    %2128 = vmatprep.subr.mxu0 %v864
    %2129 = vmatpush1.msra.mxu0 %v863
    %2130 = vmatprep.subr.mxu0 %v866
    %2131 = vmatpush1.msra.mxu0 %v865
    %2132 = vmatprep.subr.mxu0 %v868
    %2133 = vmatpush1.msra.mxu0 %v867
    %2134 = vmatprep.subr.mxu0 %v870
    %2135 = vmatpush1.msra.mxu0 %v869
    %2136 = vmatprep.subr.mxu0 %v872
    %2137 = vmatpush1.msra.mxu0 %v871
    %2138 = vmatprep.subr.mxu0 %v874
    %2139 = vmatpush1.msra.mxu0 %v873
    %2140 = vmatprep.subr.mxu0 %v876
    %2141 = vmatpush1.msra.mxu0 %v875
    %2142 = vmatprep.subr.mxu0 %v878
    %2143 = vmatpush1.msra.mxu0 %v877
    %2144 = vmatprep.subr.mxu0 %v880
    %2145 = vmatpush1.msra.mxu0 %v879
    %2146 = vmatprep.subr.mxu0 %v882
    %2147 = vmatpush1.msra.mxu0 %v881
    %2148 = vmatprep.subr.mxu0 %v884
    %2149 = vmatpush1.msra.mxu0 %v883
    %2150 = vmatprep.subr.mxu0 %v886
    %2151 = vmatpush1.msra.mxu0 %v885
    %2152 = vmatprep.subr.mxu0 %v888
    %2153 = vmatpush1.msra.mxu0 %v887
    %2154 = vmatprep.subr.mxu0 %v890
    %2155 = vmatpush1.msra.mxu0 %v889
    %2156 = vmatprep.subr.mxu0 %v892
    %2157 = vmatpush1.msra.mxu0 %v891
    %2158 = vmatprep.subr.mxu0 %v894
    %2159 = vmatpush1.msra.mxu0 %v893
    %2160 = vmatprep.subr.mxu0 %v896
    %2161 = vmatpush1.msra.mxu0 %v895
    %2162 = vmatprep.subr.mxu0 %v898
    %2163 = vmatpush1.msra.mxu0 %v897
    %2164 = vmatprep.subr.mxu0 %v900
    %2165 = vmatpush1.msra.mxu0 %v899
    %2166 = vmatprep.subr.mxu0 %v902
    %2167 = vmatpush1.msra.mxu0 %v901
    %2168 = vmatprep.subr.mxu0 %v904
    %2169 = vmatpush1.msra.mxu0 %v903
    %2170 = vmatprep.subr.mxu0 %v906
    %2171 = vmatpush1.msra.mxu0 %v905
    %2172 = vmatprep.subr.mxu0 %v908
    %2173 = vmatpush1.msra.mxu0 %v907
    %2174 = vmatprep.subr.mxu0 %v910
    %2175 = vmatpush1.msra.mxu0 %v909
    %2176 = vmatprep.subr.mxu0 %v912
    %2177 = vmatpush1.msra.mxu0 %v911
    %2178 = vmatprep.subr.mxu0 %v914
    %2179 = vmatpush1.msra.mxu0 %v913
    %2180 = vmatprep.mubr.f32.mxu0 %v158
    %2181 = vmatmul.mubr.f32.gmra.mrb[0].mxu0 %v157
    %v2182 = vpop.f32.mrb[0].mxu0
    %v2183 = vadd.f32 %v2022, %v2182
    %v2184 = vpop.f32.mrb[0].mxu0
    %v2185 = vadd.f32 %v2024, %v2184
    %2186 = vmatprep.mubr.f32.mxu0 %v182
    %2187 = vmatmul.mubr.f32.gmra.mrb[0].mxu0 %v181
    %v2188 = vpop.f32.mrb[0].mxu0
    %v2189 = vadd.f32 %v2028, %v2188
    %v2190 = vpop.f32.mrb[0].mxu0
    %v2191 = vadd.f32 %v2030, %v2190
    %2192 = vmatprep.mubr.f32.mxu0 %v206
    %2193 = vmatmul.mubr.f32.gmra.mrb[0].mxu0 %v205
    %v2194 = vpop.f32.mrb[0].mxu0
    %v2195 = vadd.f32 %v2034, %v2194
    %v2196 = vpop.f32.mrb[0].mxu0
    %v2197 = vadd.f32 %v2036, %v2196
    %2198 = vmatprep.mubr.f32.mxu0 %v230
    %2199 = vmatmul.mubr.f32.gmra.mrb[0].mxu0 %v229
    %v2200 = vpop.f32.mrb[0].mxu0
    %v2201 = vadd.f32 %v2040, %v2200
    %v2202 = vpop.f32.mrb[0].mxu0
    %v2203 = vadd.f32 %v2042, %v2202
    %2204 = vmatprep.mubr.f32.mxu0 %v254
    %2205 = vmatmul.mubr.f32.gmra.mrb[0].mxu0 %v253
    %v2206 = vpop.f32.mrb[0].mxu0
    %v2207 = vadd.f32 %v2046, %v2206
    %v2208 = vpop.f32.mrb[0].mxu0
    %v2209 = vadd.f32 %v2048, %v2208
    %2210 = vmatprep.mubr.f32.mxu0 %v278
    %2211 = vmatmul.mubr.f32.gmra.mrb[0].mxu0 %v277
    %v2212 = vpop.f32.mrb[0].mxu0
    %v2213 = vadd.f32 %v2052, %v2212
    %v2214 = vpop.f32.mrb[0].mxu0
    %v2215 = vadd.f32 %v2054, %v2214
    %2216 = vmatprep.mubr.f32.mxu0 %v302
    %2217 = vmatmul.mubr.f32.gmra.mrb[0].mxu0 %v301
    %v2218 = vpop.f32.mrb[0].mxu0
    %v2219 = vadd.f32 %v2058, %v2218
    %v2220 = vpop.f32.mrb[0].mxu0
    %v2221 = vadd.f32 %v2060, %v2220
    %2222 = vmatprep.mubr.f32.mxu0 %v326
    %2223 = vmatmul.mubr.f32.gmra.mrb[0].mxu0 %v325
    %v2224 = vpop.f32.mrb[0].mxu0
    %v2225 = vadd.f32 %v2064, %v2224
    %v2226 = vpop.f32.mrb[0].mxu0
    %v2227 = vadd.f32 %v2066, %v2226
    %2228 = vmatprep.mubr.f32.mxu0 %v350
    %2229 = vmatmul.mubr.f32.gmra.mrb[0].mxu0 %v349
    %v2230 = vpop.f32.mrb[0].mxu0
    %v2231 = vadd.f32 %v2070, %v2230
    %v2232 = vpop.f32.mrb[0].mxu0
    %v2233 = vadd.f32 %v2072, %v2232
    %2234 = vmatprep.mubr.f32.mxu0 %v374
    %2235 = vmatmul.mubr.f32.gmra.mrb[0].mxu0 %v373
    %v2236 = vpop.f32.mrb[0].mxu0
    %v2237 = vadd.f32 %v2076, %v2236
    %v2238 = vpop.f32.mrb[0].mxu0
    %v2239 = vadd.f32 %v2078, %v2238
    %2240 = vmatprep.mubr.f32.mxu0 %v398
    %2241 = vmatmul.mubr.f32.gmra.mrb[0].mxu0 %v397
    %v2242 = vpop.f32.mrb[0].mxu0
    %v2243 = vadd.f32 %v2082, %v2242
    %v2244 = vpop.f32.mrb[0].mxu0
    %v2245 = vadd.f32 %v2084, %v2244
    %2246 = vmatprep.mubr.f32.mxu0 %v422
    %2247 = vmatmul.mubr.f32.gmra.mrb[0].mxu0 %v421
    %v2248 = vpop.f32.mrb[0].mxu0
    %v2249 = vadd.f32 %v2088, %v2248
    %v2250 = vpop.f32.mrb[0].mxu0
    %v2251 = vadd.f32 %v2090, %v2250
    %2252 = vmatprep.mubr.f32.mxu0 %v446
    %2253 = vmatmul.mubr.f32.gmra.mrb[0].mxu0 %v445
    %v2254 = vpop.f32.mrb[0].mxu0
    %v2255 = vadd.f32 %v2094, %v2254
    %v2256 = vpop.f32.mrb[0].mxu0
    %v2257 = vadd.f32 %v2096, %v2256
    %2258 = vmatprep.mubr.f32.mxu0 %v470
    %2259 = vmatmul.mubr.f32.gmra.mrb[0].mxu0 %v469
    %v2260 = vpop.f32.mrb[0].mxu0
    %v2261 = vadd.f32 %v2100, %v2260
    %v2262 = vpop.f32.mrb[0].mxu0
    %v2263 = vadd.f32 %v2102, %v2262
    %2264 = vmatprep.mubr.f32.mxu0 %v494
    %2265 = vmatmul.mubr.f32.gmra.mrb[0].mxu0 %v493
    %v2266 = vpop.f32.mrb[0].mxu0
    %v2267 = vadd.f32 %v2106, %v2266
    %v2268 = vpop.f32.mrb[0].mxu0
    %v2269 = vadd.f32 %v2108, %v2268
    %2270 = vmatprep.mubr.f32.mxu0 %v518
    %2271 = vmatmul.mubr.f32.gmra.mrb[0].mxu0 %v517
    %v2272 = vpop.f32.mrb[0].mxu0
    %v2273 = vadd.f32 %v2112, %v2272
    %v2274 = vpop.f32.mrb[0].mxu0
    %v2275 = vadd.f32 %v2114, %v2274
    %2276 = vdwg.mxu0
    %2277 = vmatprep.subr.mxu0 %v916
    %2278 = vmatpush1.msra.mxu0 %v915
    %2279 = vmatprep.subr.mxu0 %v918
    %2280 = vmatpush1.msra.mxu0 %v917
    %2281 = vmatprep.subr.mxu0 %v920
    %2282 = vmatpush1.msra.mxu0 %v919
    %2283 = vmatprep.subr.mxu0 %v922
    %2284 = vmatpush1.msra.mxu0 %v921
    %2285 = vmatprep.subr.mxu0 %v924
    %2286 = vmatpush1.msra.mxu0 %v923
    %2287 = vmatprep.subr.mxu0 %v926
    %2288 = vmatpush1.msra.mxu0 %v925
    %2289 = vmatprep.subr.mxu0 %v928
    %2290 = vmatpush1.msra.mxu0 %v927
    %2291 = vmatprep.subr.mxu0 %v930
    %2292 = vmatpush1.msra.mxu0 %v929
    %2293 = vmatprep.subr.mxu0 %v932
    %2294 = vmatpush1.msra.mxu0 %v931
    %2295 = vmatprep.subr.mxu0 %v934
    %2296 = vmatpush1.msra.mxu0 %v933
    %2297 = vmatprep.subr.mxu0 %v936
    %2298 = vmatpush1.msra.mxu0 %v935
    %2299 = vmatprep.subr.mxu0 %v938
    %2300 = vmatpush1.msra.mxu0 %v937
    %2301 = vmatprep.subr.mxu0 %v940
    %2302 = vmatpush1.msra.mxu0 %v939
    %2303 = vmatprep.subr.mxu0 %v942
    %2304 = vmatpush1.msra.mxu0 %v941
    %2305 = vmatprep.subr.mxu0 %v944
    %2306 = vmatpush1.msra.mxu0 %v943
    %2307 = vmatprep.subr.mxu0 %v946
    %2308 = vmatpush1.msra.mxu0 %v945
    %2309 = vmatprep.subr.mxu0 %v948
    %2310 = vmatpush1.msra.mxu0 %v947
    %2311 = vmatprep.subr.mxu0 %v950
    %2312 = vmatpush1.msra.mxu0 %v949
    %2313 = vmatprep.subr.mxu0 %v952
    %2314 = vmatpush1.msra.mxu0 %v951
    %2315 = vmatprep.subr.mxu0 %v954
    %2316 = vmatpush1.msra.mxu0 %v953
    %2317 = vmatprep.subr.mxu0 %v956
    %2318 = vmatpush1.msra.mxu0 %v955
    %2319 = vmatprep.subr.mxu0 %v958
    %2320 = vmatpush1.msra.mxu0 %v957
    %2321 = vmatprep.subr.mxu0 %v960
    %2322 = vmatpush1.msra.mxu0 %v959
    %2323 = vmatprep.subr.mxu0 %v962
    %2324 = vmatpush1.msra.mxu0 %v961
    %2325 = vmatprep.subr.mxu0 %v964
    %2326 = vmatpush1.msra.mxu0 %v963
    %2327 = vmatprep.subr.mxu0 %v966
    %2328 = vmatpush1.msra.mxu0 %v965
    %2329 = vmatprep.subr.mxu0 %v968
    %2330 = vmatpush1.msra.mxu0 %v967
    %2331 = vmatprep.subr.mxu0 %v970
    %2332 = vmatpush1.msra.mxu0 %v969
    %2333 = vmatprep.subr.mxu0 %v972
    %2334 = vmatpush1.msra.mxu0 %v971
    %2335 = vmatprep.subr.mxu0 %v974
    %2336 = vmatpush1.msra.mxu0 %v973
    %2337 = vmatprep.subr.mxu0 %v976
    %2338 = vmatpush1.msra.mxu0 %v975
    %2339 = vmatprep.subr.mxu0 %v978
    %2340 = vmatpush1.msra.mxu0 %v977
    %2341 = vmatprep.mubr.f32.mxu0 %v160
    %2342 = vmatmul.mubr.f32.gmra.mrb[0].mxu0 %v159
    %v2343 = vpop.f32.mrb[0].mxu0
    %v2344 = vadd.f32 %v2183, %v2343
    %v2345 = vpop.f32.mrb[0].mxu0
    %v2346 = vadd.f32 %v2185, %v2345
    %2347 = vmatprep.mubr.f32.mxu0 %v184
    %2348 = vmatmul.mubr.f32.gmra.mrb[0].mxu0 %v183
    %v2349 = vpop.f32.mrb[0].mxu0
    %v2350 = vadd.f32 %v2189, %v2349
    %v2351 = vpop.f32.mrb[0].mxu0
    %v2352 = vadd.f32 %v2191, %v2351
    %2353 = vmatprep.mubr.f32.mxu0 %v208
    %2354 = vmatmul.mubr.f32.gmra.mrb[0].mxu0 %v207
    %v2355 = vpop.f32.mrb[0].mxu0
    %v2356 = vadd.f32 %v2195, %v2355
    %v2357 = vpop.f32.mrb[0].mxu0
    %v2358 = vadd.f32 %v2197, %v2357
    %2359 = vmatprep.mubr.f32.mxu0 %v232
    %2360 = vmatmul.mubr.f32.gmra.mrb[0].mxu0 %v231
    %v2361 = vpop.f32.mrb[0].mxu0
    %v2362 = vadd.f32 %v2201, %v2361
    %v2363 = vpop.f32.mrb[0].mxu0
    %v2364 = vadd.f32 %v2203, %v2363
    %2365 = vmatprep.mubr.f32.mxu0 %v256
    %2366 = vmatmul.mubr.f32.gmra.mrb[0].mxu0 %v255
    %v2367 = vpop.f32.mrb[0].mxu0
    %v2368 = vadd.f32 %v2207, %v2367
    %v2369 = vpop.f32.mrb[0].mxu0
    %v2370 = vadd.f32 %v2209, %v2369
    %2371 = vmatprep.mubr.f32.mxu0 %v280
    %2372 = vmatmul.mubr.f32.gmra.mrb[0].mxu0 %v279
    %v2373 = vpop.f32.mrb[0].mxu0
    %v2374 = vadd.f32 %v2213, %v2373
    %v2375 = vpop.f32.mrb[0].mxu0
    %v2376 = vadd.f32 %v2215, %v2375
    %2377 = vmatprep.mubr.f32.mxu0 %v304
    %2378 = vmatmul.mubr.f32.gmra.mrb[0].mxu0 %v303
    %v2379 = vpop.f32.mrb[0].mxu0
    %v2380 = vadd.f32 %v2219, %v2379
    %v2381 = vpop.f32.mrb[0].mxu0
    %v2382 = vadd.f32 %v2221, %v2381
    %2383 = vmatprep.mubr.f32.mxu0 %v328
    %2384 = vmatmul.mubr.f32.gmra.mrb[0].mxu0 %v327
    %v2385 = vpop.f32.mrb[0].mxu0
    %v2386 = vadd.f32 %v2225, %v2385
    %v2387 = vpop.f32.mrb[0].mxu0
    %v2388 = vadd.f32 %v2227, %v2387
    %2389 = vmatprep.mubr.f32.mxu0 %v352
    %2390 = vmatmul.mubr.f32.gmra.mrb[0].mxu0 %v351
    %v2391 = vpop.f32.mrb[0].mxu0
    %v2392 = vadd.f32 %v2231, %v2391
    %v2393 = vpop.f32.mrb[0].mxu0
    %v2394 = vadd.f32 %v2233, %v2393
    %2395 = vmatprep.mubr.f32.mxu0 %v376
    %2396 = vmatmul.mubr.f32.gmra.mrb[0].mxu0 %v375
    %v2397 = vpop.f32.mrb[0].mxu0
    %v2398 = vadd.f32 %v2237, %v2397
    %v2399 = vpop.f32.mrb[0].mxu0
    %v2400 = vadd.f32 %v2239, %v2399
    %2401 = vmatprep.mubr.f32.mxu0 %v400
    %2402 = vmatmul.mubr.f32.gmra.mrb[0].mxu0 %v399
    %v2403 = vpop.f32.mrb[0].mxu0
    %v2404 = vadd.f32 %v2243, %v2403
    %v2405 = vpop.f32.mrb[0].mxu0
    %v2406 = vadd.f32 %v2245, %v2405
    %2407 = vmatprep.mubr.f32.mxu0 %v424
    %2408 = vmatmul.mubr.f32.gmra.mrb[0].mxu0 %v423
    %v2409 = vpop.f32.mrb[0].mxu0
    %v2410 = vadd.f32 %v2249, %v2409
    %v2411 = vpop.f32.mrb[0].mxu0
    %v2412 = vadd.f32 %v2251, %v2411
    %2413 = vmatprep.mubr.f32.mxu0 %v448
    %2414 = vmatmul.mubr.f32.gmra.mrb[0].mxu0 %v447
    %v2415 = vpop.f32.mrb[0].mxu0
    %v2416 = vadd.f32 %v2255, %v2415
    %v2417 = vpop.f32.mrb[0].mxu0
    %v2418 = vadd.f32 %v2257, %v2417
    %2419 = vmatprep.mubr.f32.mxu0 %v472
    %2420 = vmatmul.mubr.f32.gmra.mrb[0].mxu0 %v471
    %v2421 = vpop.f32.mrb[0].mxu0
    %v2422 = vadd.f32 %v2261, %v2421
    %v2423 = vpop.f32.mrb[0].mxu0
    %v2424 = vadd.f32 %v2263, %v2423
    %2425 = vmatprep.mubr.f32.mxu0 %v496
    %2426 = vmatmul.mubr.f32.gmra.mrb[0].mxu0 %v495
    %v2427 = vpop.f32.mrb[0].mxu0
    %v2428 = vadd.f32 %v2267, %v2427
    %v2429 = vpop.f32.mrb[0].mxu0
    %v2430 = vadd.f32 %v2269, %v2429
    %2431 = vmatprep.mubr.f32.mxu0 %v520
    %2432 = vmatmul.mubr.f32.gmra.mrb[0].mxu0 %v519
    %v2433 = vpop.f32.mrb[0].mxu0
    %v2434 = vadd.f32 %v2273, %v2433
    %v2435 = vpop.f32.mrb[0].mxu0
    %v2436 = vadd.f32 %v2275, %v2435
    %2437 = vdwg.mxu0
    %2438 = vmatprep.subr.mxu0 %v980
    %2439 = vmatpush1.msra.mxu0 %v979
    %2440 = vmatprep.subr.mxu0 %v982
    %2441 = vmatpush1.msra.mxu0 %v981
    %2442 = vmatprep.subr.mxu0 %v984
    %2443 = vmatpush1.msra.mxu0 %v983
    %2444 = vmatprep.subr.mxu0 %v986
    %2445 = vmatpush1.msra.mxu0 %v985
    %2446 = vmatprep.subr.mxu0 %v988
    %2447 = vmatpush1.msra.mxu0 %v987
    %2448 = vmatprep.subr.mxu0 %v990
    %2449 = vmatpush1.msra.mxu0 %v989
    %2450 = vmatprep.subr.mxu0 %v992
    %2451 = vmatpush1.msra.mxu0 %v991
    %2452 = vmatprep.subr.mxu0 %v994
    %2453 = vmatpush1.msra.mxu0 %v993
    %2454 = vmatprep.subr.mxu0 %v996
    %2455 = vmatpush1.msra.mxu0 %v995
    %2456 = vmatprep.subr.mxu0 %v998
    %2457 = vmatpush1.msra.mxu0 %v997
    %2458 = vmatprep.subr.mxu0 %v1000
    %2459 = vmatpush1.msra.mxu0 %v999
    %2460 = vmatprep.subr.mxu0 %v1002
    %2461 = vmatpush1.msra.mxu0 %v1001
    %2462 = vmatprep.subr.mxu0 %v1004
    %2463 = vmatpush1.msra.mxu0 %v1003
    %2464 = vmatprep.subr.mxu0 %v1006
    %2465 = vmatpush1.msra.mxu0 %v1005
    %2466 = vmatprep.subr.mxu0 %v1008
    %2467 = vmatpush1.msra.mxu0 %v1007
    %2468 = vmatprep.subr.mxu0 %v1010
    %2469 = vmatpush1.msra.mxu0 %v1009
    %2470 = vmatprep.subr.mxu0 %v1012
    %2471 = vmatpush1.msra.mxu0 %v1011
    %2472 = vmatprep.subr.mxu0 %v1014
    %2473 = vmatpush1.msra.mxu0 %v1013
    %2474 = vmatprep.subr.mxu0 %v1016
    %2475 = vmatpush1.msra.mxu0 %v1015
    %2476 = vmatprep.subr.mxu0 %v1018
    %2477 = vmatpush1.msra.mxu0 %v1017
    %2478 = vmatprep.subr.mxu0 %v1020
    %2479 = vmatpush1.msra.mxu0 %v1019
    %2480 = vmatprep.subr.mxu0 %v1022
    %2481 = vmatpush1.msra.mxu0 %v1021
    %2482 = vmatprep.subr.mxu0 %v1024
    %2483 = vmatpush1.msra.mxu0 %v1023
    %2484 = vmatprep.subr.mxu0 %v1026
    %2485 = vmatpush1.msra.mxu0 %v1025
    %2486 = vmatprep.subr.mxu0 %v1028
    %2487 = vmatpush1.msra.mxu0 %v1027
    %2488 = vmatprep.subr.mxu0 %v1030
    %2489 = vmatpush1.msra.mxu0 %v1029
    %2490 = vmatprep.subr.mxu0 %v1032
    %2491 = vmatpush1.msra.mxu0 %v1031
    %2492 = vmatprep.subr.mxu0 %v1034
    %2493 = vmatpush1.msra.mxu0 %v1033
    %2494 = vmatprep.subr.mxu0 %v1036
    %2495 = vmatpush1.msra.mxu0 %v1035
    %2496 = vmatprep.subr.mxu0 %v1038
    %2497 = vmatpush1.msra.mxu0 %v1037
    %2498 = vmatprep.subr.mxu0 %v1040
    %2499 = vmatpush1.msra.mxu0 %v1039
    %2500 = vmatprep.subr.mxu0 %v1042
    %2501 = vmatpush1.msra.mxu0 %v1041
    %2502 = vmatprep.mubr.f32.mxu0 %v162
    %2503 = vmatmul.mubr.f32.gmra.mrb[0].mxu0 %v161
    %v2504 = vpop.f32.mrb[0].mxu0
    %v2505 = vadd.f32 %v2344, %v2504
    %v2506 = vpop.f32.mrb[0].mxu0
    %v2507 = vadd.f32 %v2346, %v2506
    %2508 = vmatprep.mubr.f32.mxu0 %v186
    %2509 = vmatmul.mubr.f32.gmra.mrb[0].mxu0 %v185
    %v2510 = vpop.f32.mrb[0].mxu0
    %v2511 = vadd.f32 %v2350, %v2510
    %v2512 = vpop.f32.mrb[0].mxu0
    %v2513 = vadd.f32 %v2352, %v2512
    %2514 = vmatprep.mubr.f32.mxu0 %v210
    %2515 = vmatmul.mubr.f32.gmra.mrb[0].mxu0 %v209
    %v2516 = vpop.f32.mrb[0].mxu0
    %v2517 = vadd.f32 %v2356, %v2516
    %v2518 = vpop.f32.mrb[0].mxu0
    %v2519 = vadd.f32 %v2358, %v2518
    %2520 = vmatprep.mubr.f32.mxu0 %v234
    %2521 = vmatmul.mubr.f32.gmra.mrb[0].mxu0 %v233
    %v2522 = vpop.f32.mrb[0].mxu0
    %v2523 = vadd.f32 %v2362, %v2522
    %v2524 = vpop.f32.mrb[0].mxu0
    %v2525 = vadd.f32 %v2364, %v2524
    %2526 = vmatprep.mubr.f32.mxu0 %v258
    %2527 = vmatmul.mubr.f32.gmra.mrb[0].mxu0 %v257
    %v2528 = vpop.f32.mrb[0].mxu0
    %v2529 = vadd.f32 %v2368, %v2528
    %v2530 = vpop.f32.mrb[0].mxu0
    %v2531 = vadd.f32 %v2370, %v2530
    %2532 = vmatprep.mubr.f32.mxu0 %v282
    %2533 = vmatmul.mubr.f32.gmra.mrb[0].mxu0 %v281
    %v2534 = vpop.f32.mrb[0].mxu0
    %v2535 = vadd.f32 %v2374, %v2534
    %v2536 = vpop.f32.mrb[0].mxu0
    %v2537 = vadd.f32 %v2376, %v2536
    %2538 = vmatprep.mubr.f32.mxu0 %v306
    %2539 = vmatmul.mubr.f32.gmra.mrb[0].mxu0 %v305
    %v2540 = vpop.f32.mrb[0].mxu0
    %v2541 = vadd.f32 %v2380, %v2540
    %v2542 = vpop.f32.mrb[0].mxu0
    %v2543 = vadd.f32 %v2382, %v2542
    %2544 = vmatprep.mubr.f32.mxu0 %v330
    %2545 = vmatmul.mubr.f32.gmra.mrb[0].mxu0 %v329
    %v2546 = vpop.f32.mrb[0].mxu0
    %v2547 = vadd.f32 %v2386, %v2546
    %v2548 = vpop.f32.mrb[0].mxu0
    %v2549 = vadd.f32 %v2388, %v2548
    %2550 = vmatprep.mubr.f32.mxu0 %v354
    %2551 = vmatmul.mubr.f32.gmra.mrb[0].mxu0 %v353
    %v2552 = vpop.f32.mrb[0].mxu0
    %v2553 = vadd.f32 %v2392, %v2552
    %v2554 = vpop.f32.mrb[0].mxu0
    %v2555 = vadd.f32 %v2394, %v2554
    %2556 = vmatprep.mubr.f32.mxu0 %v378
    %2557 = vmatmul.mubr.f32.gmra.mrb[0].mxu0 %v377
    %v2558 = vpop.f32.mrb[0].mxu0
    %v2559 = vadd.f32 %v2398, %v2558
    %v2560 = vpop.f32.mrb[0].mxu0
    %v2561 = vadd.f32 %v2400, %v2560
    %2562 = vmatprep.mubr.f32.mxu0 %v402
    %2563 = vmatmul.mubr.f32.gmra.mrb[0].mxu0 %v401
    %v2564 = vpop.f32.mrb[0].mxu0
    %v2565 = vadd.f32 %v2404, %v2564
    %v2566 = vpop.f32.mrb[0].mxu0
    %v2567 = vadd.f32 %v2406, %v2566
    %2568 = vmatprep.mubr.f32.mxu0 %v426
    %2569 = vmatmul.mubr.f32.gmra.mrb[0].mxu0 %v425
    %v2570 = vpop.f32.mrb[0].mxu0
    %v2571 = vadd.f32 %v2410, %v2570
    %v2572 = vpop.f32.mrb[0].mxu0
    %v2573 = vadd.f32 %v2412, %v2572
    %2574 = vmatprep.mubr.f32.mxu0 %v450
    %2575 = vmatmul.mubr.f32.gmra.mrb[0].mxu0 %v449
    %v2576 = vpop.f32.mrb[0].mxu0
    %v2577 = vadd.f32 %v2416, %v2576
    %v2578 = vpop.f32.mrb[0].mxu0
    %v2579 = vadd.f32 %v2418, %v2578
    %2580 = vmatprep.mubr.f32.mxu0 %v474
    %2581 = vmatmul.mubr.f32.gmra.mrb[0].mxu0 %v473
    %v2582 = vpop.f32.mrb[0].mxu0
    %v2583 = vadd.f32 %v2422, %v2582
    %v2584 = vpop.f32.mrb[0].mxu0
    %v2585 = vadd.f32 %v2424, %v2584
    %2586 = vmatprep.mubr.f32.mxu0 %v498
    %2587 = vmatmul.mubr.f32.gmra.mrb[0].mxu0 %v497
    %v2588 = vpop.f32.mrb[0].mxu0
    %v2589 = vadd.f32 %v2428, %v2588
    %v2590 = vpop.f32.mrb[0].mxu0
    %v2591 = vadd.f32 %v2430, %v2590
    %2592 = vmatprep.mubr.f32.mxu0 %v522
    %2593 = vmatmul.mubr.f32.gmra.mrb[0].mxu0 %v521
    %v2594 = vpop.f32.mrb[0].mxu0
    %v2595 = vadd.f32 %v2434, %v2594
    %v2596 = vpop.f32.mrb[0].mxu0
    %v2597 = vadd.f32 %v2436, %v2596
    %2598 = vdwg.mxu0
    %2599 = vmatprep.subr.mxu0 %v1044
    %2600 = vmatpush1.msra.mxu0 %v1043
    %2601 = vmatprep.subr.mxu0 %v1046
    %2602 = vmatpush1.msra.mxu0 %v1045
    %2603 = vmatprep.subr.mxu0 %v1048
    %2604 = vmatpush1.msra.mxu0 %v1047
    %2605 = vmatprep.subr.mxu0 %v1050
    %2606 = vmatpush1.msra.mxu0 %v1049
    %2607 = vmatprep.subr.mxu0 %v1052
    %2608 = vmatpush1.msra.mxu0 %v1051
    %2609 = vmatprep.subr.mxu0 %v1054
    %2610 = vmatpush1.msra.mxu0 %v1053
    %2611 = vmatprep.subr.mxu0 %v1056
    %2612 = vmatpush1.msra.mxu0 %v1055
    %2613 = vmatprep.subr.mxu0 %v1058
    %2614 = vmatpush1.msra.mxu0 %v1057
    %2615 = vmatprep.subr.mxu0 %v1060
    %2616 = vmatpush1.msra.mxu0 %v1059
    %2617 = vmatprep.subr.mxu0 %v1062
    %2618 = vmatpush1.msra.mxu0 %v1061
    %2619 = vmatprep.subr.mxu0 %v1064
    %2620 = vmatpush1.msra.mxu0 %v1063
    %2621 = vmatprep.subr.mxu0 %v1066
    %2622 = vmatpush1.msra.mxu0 %v1065
    %2623 = vmatprep.subr.mxu0 %v1068
    %2624 = vmatpush1.msra.mxu0 %v1067
    %2625 = vmatprep.subr.mxu0 %v1070
    %2626 = vmatpush1.msra.mxu0 %v1069
    %2627 = vmatprep.subr.mxu0 %v1072
    %2628 = vmatpush1.msra.mxu0 %v1071
    %2629 = vmatprep.subr.mxu0 %v1074
    %2630 = vmatpush1.msra.mxu0 %v1073
    %2631 = vmatprep.subr.mxu0 %v1076
    %2632 = vmatpush1.msra.mxu0 %v1075
    %2633 = vmatprep.subr.mxu0 %v1078
    %2634 = vmatpush1.msra.mxu0 %v1077
    %2635 = vmatprep.subr.mxu0 %v1080
    %2636 = vmatpush1.msra.mxu0 %v1079
    %2637 = vmatprep.subr.mxu0 %v1082
    %2638 = vmatpush1.msra.mxu0 %v1081
    %2639 = vmatprep.subr.mxu0 %v1084
    %2640 = vmatpush1.msra.mxu0 %v1083
    %2641 = vmatprep.subr.mxu0 %v1086
    %2642 = vmatpush1.msra.mxu0 %v1085
    %2643 = vmatprep.subr.mxu0 %v1088
    %2644 = vmatpush1.msra.mxu0 %v1087
    %2645 = vmatprep.subr.mxu0 %v1090
    %2646 = vmatpush1.msra.mxu0 %v1089
    %2647 = vmatprep.subr.mxu0 %v1092
    %2648 = vmatpush1.msra.mxu0 %v1091
    %2649 = vmatprep.subr.mxu0 %v1094
    %2650 = vmatpush1.msra.mxu0 %v1093
    %2651 = vmatprep.subr.mxu0 %v1096
    %2652 = vmatpush1.msra.mxu0 %v1095
    %2653 = vmatprep.subr.mxu0 %v1098
    %2654 = vmatpush1.msra.mxu0 %v1097
    %2655 = vmatprep.subr.mxu0 %v1100
    %2656 = vmatpush1.msra.mxu0 %v1099
    %2657 = vmatprep.subr.mxu0 %v1102
    %2658 = vmatpush1.msra.mxu0 %v1101
    %2659 = vmatprep.subr.mxu0 %v1104
    %2660 = vmatpush1.msra.mxu0 %v1103
    %2661 = vmatprep.subr.mxu0 %v1106
    %2662 = vmatpush1.msra.mxu0 %v1105
    %2663 = vmatprep.mubr.f32.mxu0 %v164
    %2664 = vmatmul.mubr.f32.gmra.mrb[0].mxu0 %v163
    %v2665 = vpop.f32.mrb[0].mxu0
    %v2666 = vadd.f32 %v2505, %v2665
    %v2667 = vpop.f32.mrb[0].mxu0
    %v2668 = vadd.f32 %v2507, %v2667
    %2669 = vmatprep.mubr.f32.mxu0 %v188
    %2670 = vmatmul.mubr.f32.gmra.mrb[0].mxu0 %v187
    %v2671 = vpop.f32.mrb[0].mxu0
    %v2672 = vadd.f32 %v2511, %v2671
    %v2673 = vpop.f32.mrb[0].mxu0
    %v2674 = vadd.f32 %v2513, %v2673
    %2675 = vmatprep.mubr.f32.mxu0 %v212
    %2676 = vmatmul.mubr.f32.gmra.mrb[0].mxu0 %v211
    %v2677 = vpop.f32.mrb[0].mxu0
    %v2678 = vadd.f32 %v2517, %v2677
    %v2679 = vpop.f32.mrb[0].mxu0
    %v2680 = vadd.f32 %v2519, %v2679
    %2681 = vmatprep.mubr.f32.mxu0 %v236
    %2682 = vmatmul.mubr.f32.gmra.mrb[0].mxu0 %v235
    %v2683 = vpop.f32.mrb[0].mxu0
    %v2684 = vadd.f32 %v2523, %v2683
    %v2685 = vpop.f32.mrb[0].mxu0
    %v2686 = vadd.f32 %v2525, %v2685
    %2687 = vmatprep.mubr.f32.mxu0 %v260
    %2688 = vmatmul.mubr.f32.gmra.mrb[0].mxu0 %v259
    %v2689 = vpop.f32.mrb[0].mxu0
    %v2690 = vadd.f32 %v2529, %v2689
    %v2691 = vpop.f32.mrb[0].mxu0
    %v2692 = vadd.f32 %v2531, %v2691
    %2693 = vmatprep.mubr.f32.mxu0 %v284
    %2694 = vmatmul.mubr.f32.gmra.mrb[0].mxu0 %v283
    %v2695 = vpop.f32.mrb[0].mxu0
    %v2696 = vadd.f32 %v2535, %v2695
    %v2697 = vpop.f32.mrb[0].mxu0
    %v2698 = vadd.f32 %v2537, %v2697
    %2699 = vmatprep.mubr.f32.mxu0 %v308
    %2700 = vmatmul.mubr.f32.gmra.mrb[0].mxu0 %v307
    %v2701 = vpop.f32.mrb[0].mxu0
    %v2702 = vadd.f32 %v2541, %v2701
    %v2703 = vpop.f32.mrb[0].mxu0
    %v2704 = vadd.f32 %v2543, %v2703
    %2705 = vmatprep.mubr.f32.mxu0 %v332
    %2706 = vmatmul.mubr.f32.gmra.mrb[0].mxu0 %v331
    %v2707 = vpop.f32.mrb[0].mxu0
    %v2708 = vadd.f32 %v2547, %v2707
    %v2709 = vpop.f32.mrb[0].mxu0
    %v2710 = vadd.f32 %v2549, %v2709
    %2711 = vmatprep.mubr.f32.mxu0 %v356
    %2712 = vmatmul.mubr.f32.gmra.mrb[0].mxu0 %v355
    %v2713 = vpop.f32.mrb[0].mxu0
    %v2714 = vadd.f32 %v2553, %v2713
    %v2715 = vpop.f32.mrb[0].mxu0
    %v2716 = vadd.f32 %v2555, %v2715
    %2717 = vmatprep.mubr.f32.mxu0 %v380
    %2718 = vmatmul.mubr.f32.gmra.mrb[0].mxu0 %v379
    %v2719 = vpop.f32.mrb[0].mxu0
    %v2720 = vadd.f32 %v2559, %v2719
    %v2721 = vpop.f32.mrb[0].mxu0
    %v2722 = vadd.f32 %v2561, %v2721
    %2723 = vmatprep.mubr.f32.mxu0 %v404
    %2724 = vmatmul.mubr.f32.gmra.mrb[0].mxu0 %v403
    %v2725 = vpop.f32.mrb[0].mxu0
    %v2726 = vadd.f32 %v2565, %v2725
    %v2727 = vpop.f32.mrb[0].mxu0
    %v2728 = vadd.f32 %v2567, %v2727
    %2729 = vmatprep.mubr.f32.mxu0 %v428
    %2730 = vmatmul.mubr.f32.gmra.mrb[0].mxu0 %v427
    %v2731 = vpop.f32.mrb[0].mxu0
    %v2732 = vadd.f32 %v2571, %v2731
    %v2733 = vpop.f32.mrb[0].mxu0
    %v2734 = vadd.f32 %v2573, %v2733
    %2735 = vmatprep.mubr.f32.mxu0 %v452
    %2736 = vmatmul.mubr.f32.gmra.mrb[0].mxu0 %v451
    %v2737 = vpop.f32.mrb[0].mxu0
    %v2738 = vadd.f32 %v2577, %v2737
    %v2739 = vpop.f32.mrb[0].mxu0
    %v2740 = vadd.f32 %v2579, %v2739
    %2741 = vmatprep.mubr.f32.mxu0 %v476
    %2742 = vmatmul.mubr.f32.gmra.mrb[0].mxu0 %v475
    %v2743 = vpop.f32.mrb[0].mxu0
    %v2744 = vadd.f32 %v2583, %v2743
    %v2745 = vpop.f32.mrb[0].mxu0
    %v2746 = vadd.f32 %v2585, %v2745
    %2747 = vmatprep.mubr.f32.mxu0 %v500
    %2748 = vmatmul.mubr.f32.gmra.mrb[0].mxu0 %v499
    %v2749 = vpop.f32.mrb[0].mxu0
    %v2750 = vadd.f32 %v2589, %v2749
    %v2751 = vpop.f32.mrb[0].mxu0
    %v2752 = vadd.f32 %v2591, %v2751
    %2753 = vmatprep.mubr.f32.mxu0 %v524
    %2754 = vmatmul.mubr.f32.gmra.mrb[0].mxu0 %v523
    %v2755 = vpop.f32.mrb[0].mxu0
    %v2756 = vadd.f32 %v2595, %v2755
    %v2757 = vpop.f32.mrb[0].mxu0
    %v2758 = vadd.f32 %v2597, %v2757
    %2759 = vdwg.mxu0
    %2760 = vmatprep.subr.mxu0 %v1108
    %2761 = vmatpush1.msra.mxu0 %v1107
    %2762 = vmatprep.subr.mxu0 %v1110
    %2763 = vmatpush1.msra.mxu0 %v1109
    %2764 = vmatprep.subr.mxu0 %v1112
    %2765 = vmatpush1.msra.mxu0 %v1111
    %2766 = vmatprep.subr.mxu0 %v1114
    %2767 = vmatpush1.msra.mxu0 %v1113
    %2768 = vmatprep.subr.mxu0 %v1116
    %2769 = vmatpush1.msra.mxu0 %v1115
    %2770 = vmatprep.subr.mxu0 %v1118
    %2771 = vmatpush1.msra.mxu0 %v1117
    %2772 = vmatprep.subr.mxu0 %v1120
    %2773 = vmatpush1.msra.mxu0 %v1119
    %2774 = vmatprep.subr.mxu0 %v1122
    %2775 = vmatpush1.msra.mxu0 %v1121
    %2776 = vmatprep.subr.mxu0 %v1124
    %2777 = vmatpush1.msra.mxu0 %v1123
    %2778 = vmatprep.subr.mxu0 %v1126
    %2779 = vmatpush1.msra.mxu0 %v1125
    %2780 = vmatprep.subr.mxu0 %v1128
    %2781 = vmatpush1.msra.mxu0 %v1127
    %2782 = vmatprep.subr.mxu0 %v1130
    %2783 = vmatpush1.msra.mxu0 %v1129
    %2784 = vmatprep.subr.mxu0 %v1132
    %2785 = vmatpush1.msra.mxu0 %v1131
    %2786 = vmatprep.subr.mxu0 %v1134
    %2787 = vmatpush1.msra.mxu0 %v1133
    %2788 = vmatprep.subr.mxu0 %v1136
    %2789 = vmatpush1.msra.mxu0 %v1135
    %2790 = vmatprep.subr.mxu0 %v1138
    %2791 = vmatpush1.msra.mxu0 %v1137
    %2792 = vmatprep.subr.mxu0 %v1140
    %2793 = vmatpush1.msra.mxu0 %v1139
    %2794 = vmatprep.subr.mxu0 %v1142
    %2795 = vmatpush1.msra.mxu0 %v1141
    %2796 = vmatprep.subr.mxu0 %v1144
    %2797 = vmatpush1.msra.mxu0 %v1143
    %2798 = vmatprep.subr.mxu0 %v1146
    %2799 = vmatpush1.msra.mxu0 %v1145
    %2800 = vmatprep.subr.mxu0 %v1148
    %2801 = vmatpush1.msra.mxu0 %v1147
    %2802 = vmatprep.subr.mxu0 %v1150
    %2803 = vmatpush1.msra.mxu0 %v1149
    %2804 = vmatprep.subr.mxu0 %v1152
    %2805 = vmatpush1.msra.mxu0 %v1151
    %2806 = vmatprep.subr.mxu0 %v1154
    %2807 = vmatpush1.msra.mxu0 %v1153
    %2808 = vmatprep.subr.mxu0 %v1156
    %2809 = vmatpush1.msra.mxu0 %v1155
    %2810 = vmatprep.subr.mxu0 %v1158
    %2811 = vmatpush1.msra.mxu0 %v1157
    %2812 = vmatprep.subr.mxu0 %v1160
    %2813 = vmatpush1.msra.mxu0 %v1159
    %2814 = vmatprep.subr.mxu0 %v1162
    %2815 = vmatpush1.msra.mxu0 %v1161
    %2816 = vmatprep.subr.mxu0 %v1164
    %2817 = vmatpush1.msra.mxu0 %v1163
    %2818 = vmatprep.subr.mxu0 %v1166
    %2819 = vmatpush1.msra.mxu0 %v1165
    %2820 = vmatprep.subr.mxu0 %v1168
    %2821 = vmatpush1.msra.mxu0 %v1167
    %2822 = vmatprep.subr.mxu0 %v1170
    %2823 = vmatpush1.msra.mxu0 %v1169
    %2824 = vmatprep.mubr.f32.mxu0 %v166
    %2825 = vmatmul.mubr.f32.gmra.mrb[0].mxu0 %v165
    %v2826 = vpop.f32.mrb[0].mxu0
    %v2827 = vadd.f32 %v2666, %v2826
    %v2828 = vpop.f32.mrb[0].mxu0
    %v2829 = vadd.f32 %v2668, %v2828
    %2830 = vmatprep.mubr.f32.mxu0 %v190
    %2831 = vmatmul.mubr.f32.gmra.mrb[0].mxu0 %v189
    %v2832 = vpop.f32.mrb[0].mxu0
    %v2833 = vadd.f32 %v2672, %v2832
    %v2834 = vpop.f32.mrb[0].mxu0
    %v2835 = vadd.f32 %v2674, %v2834
    %2836 = vmatprep.mubr.f32.mxu0 %v214
    %2837 = vmatmul.mubr.f32.gmra.mrb[0].mxu0 %v213
    %v2838 = vpop.f32.mrb[0].mxu0
    %v2839 = vadd.f32 %v2678, %v2838
    %v2840 = vpop.f32.mrb[0].mxu0
    %v2841 = vadd.f32 %v2680, %v2840
    %2842 = vmatprep.mubr.f32.mxu0 %v238
    %2843 = vmatmul.mubr.f32.gmra.mrb[0].mxu0 %v237
    %v2844 = vpop.f32.mrb[0].mxu0
    %v2845 = vadd.f32 %v2684, %v2844
    %v2846 = vpop.f32.mrb[0].mxu0
    %v2847 = vadd.f32 %v2686, %v2846
    %2848 = vmatprep.mubr.f32.mxu0 %v262
    %2849 = vmatmul.mubr.f32.gmra.mrb[0].mxu0 %v261
    %v2850 = vpop.f32.mrb[0].mxu0
    %v2851 = vadd.f32 %v2690, %v2850
    %v2852 = vpop.f32.mrb[0].mxu0
    %v2853 = vadd.f32 %v2692, %v2852
    %2854 = vmatprep.mubr.f32.mxu0 %v286
    %2855 = vmatmul.mubr.f32.gmra.mrb[0].mxu0 %v285
    %v2856 = vpop.f32.mrb[0].mxu0
    %v2857 = vadd.f32 %v2696, %v2856
    %v2858 = vpop.f32.mrb[0].mxu0
    %v2859 = vadd.f32 %v2698, %v2858
    %2860 = vmatprep.mubr.f32.mxu0 %v310
    %2861 = vmatmul.mubr.f32.gmra.mrb[0].mxu0 %v309
    %v2862 = vpop.f32.mrb[0].mxu0
    %v2863 = vadd.f32 %v2702, %v2862
    %v2864 = vpop.f32.mrb[0].mxu0
    %v2865 = vadd.f32 %v2704, %v2864
    %2866 = vmatprep.mubr.f32.mxu0 %v334
    %2867 = vmatmul.mubr.f32.gmra.mrb[0].mxu0 %v333
    %v2868 = vpop.f32.mrb[0].mxu0
    %v2869 = vadd.f32 %v2708, %v2868
    %v2870 = vpop.f32.mrb[0].mxu0
    %v2871 = vadd.f32 %v2710, %v2870
    %2872 = vmatprep.mubr.f32.mxu0 %v358
    %2873 = vmatmul.mubr.f32.gmra.mrb[0].mxu0 %v357
    %v2874 = vpop.f32.mrb[0].mxu0
    %v2875 = vadd.f32 %v2714, %v2874
    %v2876 = vpop.f32.mrb[0].mxu0
    %v2877 = vadd.f32 %v2716, %v2876
    %2878 = vmatprep.mubr.f32.mxu0 %v382
    %2879 = vmatmul.mubr.f32.gmra.mrb[0].mxu0 %v381
    %v2880 = vpop.f32.mrb[0].mxu0
    %v2881 = vadd.f32 %v2720, %v2880
    %v2882 = vpop.f32.mrb[0].mxu0
    %v2883 = vadd.f32 %v2722, %v2882
    %2884 = vmatprep.mubr.f32.mxu0 %v406
    %2885 = vmatmul.mubr.f32.gmra.mrb[0].mxu0 %v405
    %v2886 = vpop.f32.mrb[0].mxu0
    %v2887 = vadd.f32 %v2726, %v2886
    %v2888 = vpop.f32.mrb[0].mxu0
    %v2889 = vadd.f32 %v2728, %v2888
    %2890 = vmatprep.mubr.f32.mxu0 %v430
    %2891 = vmatmul.mubr.f32.gmra.mrb[0].mxu0 %v429
    %v2892 = vpop.f32.mrb[0].mxu0
    %v2893 = vadd.f32 %v2732, %v2892
    %v2894 = vpop.f32.mrb[0].mxu0
    %v2895 = vadd.f32 %v2734, %v2894
    %2896 = vmatprep.mubr.f32.mxu0 %v454
    %2897 = vmatmul.mubr.f32.gmra.mrb[0].mxu0 %v453
    %v2898 = vpop.f32.mrb[0].mxu0
    %v2899 = vadd.f32 %v2738, %v2898
    %v2900 = vpop.f32.mrb[0].mxu0
    %v2901 = vadd.f32 %v2740, %v2900
    %2902 = vmatprep.mubr.f32.mxu0 %v478
    %2903 = vmatmul.mubr.f32.gmra.mrb[0].mxu0 %v477
    %v2904 = vpop.f32.mrb[0].mxu0
    %v2905 = vadd.f32 %v2744, %v2904
    %v2906 = vpop.f32.mrb[0].mxu0
    %v2907 = vadd.f32 %v2746, %v2906
    %2908 = vmatprep.mubr.f32.mxu0 %v502
    %2909 = vmatmul.mubr.f32.gmra.mrb[0].mxu0 %v501
    %v2910 = vpop.f32.mrb[0].mxu0
    %v2911 = vadd.f32 %v2750, %v2910
    %v2912 = vpop.f32.mrb[0].mxu0
    %v2913 = vadd.f32 %v2752, %v2912
    %2914 = vmatprep.mubr.f32.mxu0 %v526
    %2915 = vmatmul.mubr.f32.gmra.mrb[0].mxu0 %v525
    %v2916 = vpop.f32.mrb[0].mxu0
    %v2917 = vadd.f32 %v2756, %v2916
    %v2918 = vpop.f32.mrb[0].mxu0
    %v2919 = vadd.f32 %v2758, %v2918
    %2920 = vdwg.mxu0
    %2921 = vmatprep.subr.mxu0 %v1172
    %2922 = vmatpush1.msra.mxu0 %v1171
    %2923 = vmatprep.subr.mxu0 %v1174
    %2924 = vmatpush1.msra.mxu0 %v1173
    %2925 = vmatprep.subr.mxu0 %v1176
    %2926 = vmatpush1.msra.mxu0 %v1175
    %2927 = vmatprep.subr.mxu0 %v1178
    %2928 = vmatpush1.msra.mxu0 %v1177
    %2929 = vmatprep.subr.mxu0 %v1180
    %2930 = vmatpush1.msra.mxu0 %v1179
    %2931 = vmatprep.subr.mxu0 %v1182
    %2932 = vmatpush1.msra.mxu0 %v1181
    %2933 = vmatprep.subr.mxu0 %v1184
    %2934 = vmatpush1.msra.mxu0 %v1183
    %2935 = vmatprep.subr.mxu0 %v1186
    %2936 = vmatpush1.msra.mxu0 %v1185
    %2937 = vmatprep.subr.mxu0 %v1188
    %2938 = vmatpush1.msra.mxu0 %v1187
    %2939 = vmatprep.subr.mxu0 %v1190
    %2940 = vmatpush1.msra.mxu0 %v1189
    %2941 = vmatprep.subr.mxu0 %v1192
    %2942 = vmatpush1.msra.mxu0 %v1191
    %2943 = vmatprep.subr.mxu0 %v1194
    %2944 = vmatpush1.msra.mxu0 %v1193
    %2945 = vmatprep.subr.mxu0 %v1196
    %2946 = vmatpush1.msra.mxu0 %v1195
    %2947 = vmatprep.subr.mxu0 %v1198
    %2948 = vmatpush1.msra.mxu0 %v1197
    %2949 = vmatprep.subr.mxu0 %v1200
    %2950 = vmatpush1.msra.mxu0 %v1199
    %2951 = vmatprep.subr.mxu0 %v1202
    %2952 = vmatpush1.msra.mxu0 %v1201
    %2953 = vmatprep.subr.mxu0 %v1204
    %2954 = vmatpush1.msra.mxu0 %v1203
    %2955 = vmatprep.subr.mxu0 %v1206
    %2956 = vmatpush1.msra.mxu0 %v1205
    %2957 = vmatprep.subr.mxu0 %v1208
    %2958 = vmatpush1.msra.mxu0 %v1207
    %2959 = vmatprep.subr.mxu0 %v1210
    %2960 = vmatpush1.msra.mxu0 %v1209
    %2961 = vmatprep.subr.mxu0 %v1212
    %2962 = vmatpush1.msra.mxu0 %v1211
    %2963 = vmatprep.subr.mxu0 %v1214
    %2964 = vmatpush1.msra.mxu0 %v1213
    %2965 = vmatprep.subr.mxu0 %v1216
    %2966 = vmatpush1.msra.mxu0 %v1215
    %2967 = vmatprep.subr.mxu0 %v1218
    %2968 = vmatpush1.msra.mxu0 %v1217
    %2969 = vmatprep.subr.mxu0 %v1220
    %2970 = vmatpush1.msra.mxu0 %v1219
    %2971 = vmatprep.subr.mxu0 %v1222
    %2972 = vmatpush1.msra.mxu0 %v1221
    %2973 = vmatprep.subr.mxu0 %v1224
    %2974 = vmatpush1.msra.mxu0 %v1223
    %2975 = vmatprep.subr.mxu0 %v1226
    %2976 = vmatpush1.msra.mxu0 %v1225
    %2977 = vmatprep.subr.mxu0 %v1228
    %2978 = vmatpush1.msra.mxu0 %v1227
    %2979 = vmatprep.subr.mxu0 %v1230
    %2980 = vmatpush1.msra.mxu0 %v1229
    %2981 = vmatprep.subr.mxu0 %v1232
    %2982 = vmatpush1.msra.mxu0 %v1231
    %2983 = vmatprep.subr.mxu0 %v1234
    %2984 = vmatpush1.msra.mxu0 %v1233
    %2985 = vmatprep.mubr.f32.mxu0 %v168
    %2986 = vmatmul.mubr.f32.gmra.mrb[0].mxu0 %v167
    %v2987 = vpop.f32.mrb[0].mxu0
    %v2988 = vadd.f32 %v2827, %v2987
    %v2989 = vpop.f32.mrb[0].mxu0
    %v2990 = vadd.f32 %v2829, %v2989
    %2991 = vmatprep.mubr.f32.mxu0 %v192
    %2992 = vmatmul.mubr.f32.gmra.mrb[0].mxu0 %v191
    %v2993 = vpop.f32.mrb[0].mxu0
    %v2994 = vadd.f32 %v2833, %v2993
    %v2995 = vpop.f32.mrb[0].mxu0
    %v2996 = vadd.f32 %v2835, %v2995
    %2997 = vmatprep.mubr.f32.mxu0 %v216
    %2998 = vmatmul.mubr.f32.gmra.mrb[0].mxu0 %v215
    %v2999 = vpop.f32.mrb[0].mxu0
    %v3000 = vadd.f32 %v2839, %v2999
    %v3001 = vpop.f32.mrb[0].mxu0
    %v3002 = vadd.f32 %v2841, %v3001
    %3003 = vmatprep.mubr.f32.mxu0 %v240
    %3004 = vmatmul.mubr.f32.gmra.mrb[0].mxu0 %v239
    %v3005 = vpop.f32.mrb[0].mxu0
    %v3006 = vadd.f32 %v2845, %v3005
    %v3007 = vpop.f32.mrb[0].mxu0
    %v3008 = vadd.f32 %v2847, %v3007
    %3009 = vmatprep.mubr.f32.mxu0 %v264
    %3010 = vmatmul.mubr.f32.gmra.mrb[0].mxu0 %v263
    %v3011 = vpop.f32.mrb[0].mxu0
    %v3012 = vadd.f32 %v2851, %v3011
    %v3013 = vpop.f32.mrb[0].mxu0
    %v3014 = vadd.f32 %v2853, %v3013
    %3015 = vmatprep.mubr.f32.mxu0 %v288
    %3016 = vmatmul.mubr.f32.gmra.mrb[0].mxu0 %v287
    %v3017 = vpop.f32.mrb[0].mxu0
    %v3018 = vadd.f32 %v2857, %v3017
    %v3019 = vpop.f32.mrb[0].mxu0
    %v3020 = vadd.f32 %v2859, %v3019
    %3021 = vmatprep.mubr.f32.mxu0 %v312
    %3022 = vmatmul.mubr.f32.gmra.mrb[0].mxu0 %v311
    %v3023 = vpop.f32.mrb[0].mxu0
    %v3024 = vadd.f32 %v2863, %v3023
    %v3025 = vpop.f32.mrb[0].mxu0
    %v3026 = vadd.f32 %v2865, %v3025
    %3027 = vmatprep.mubr.f32.mxu0 %v336
    %3028 = vmatmul.mubr.f32.gmra.mrb[0].mxu0 %v335
    %v3029 = vpop.f32.mrb[0].mxu0
    %v3030 = vadd.f32 %v2869, %v3029
    %v3031 = vpop.f32.mrb[0].mxu0
    %v3032 = vadd.f32 %v2871, %v3031
    %3033 = vmatprep.mubr.f32.mxu0 %v360
    %3034 = vmatmul.mubr.f32.gmra.mrb[0].mxu0 %v359
    %v3035 = vpop.f32.mrb[0].mxu0
    %v3036 = vadd.f32 %v2875, %v3035
    %v3037 = vpop.f32.mrb[0].mxu0
    %v3038 = vadd.f32 %v2877, %v3037
    %3039 = vmatprep.mubr.f32.mxu0 %v384
    %3040 = vmatmul.mubr.f32.gmra.mrb[0].mxu0 %v383
    %v3041 = vpop.f32.mrb[0].mxu0
    %v3042 = vadd.f32 %v2881, %v3041
    %v3043 = vpop.f32.mrb[0].mxu0
    %v3044 = vadd.f32 %v2883, %v3043
    %3045 = vmatprep.mubr.f32.mxu0 %v408
    %3046 = vmatmul.mubr.f32.gmra.mrb[0].mxu0 %v407
    %v3047 = vpop.f32.mrb[0].mxu0
    %v3048 = vadd.f32 %v2887, %v3047
    %v3049 = vpop.f32.mrb[0].mxu0
    %v3050 = vadd.f32 %v2889, %v3049
    %3051 = vmatprep.mubr.f32.mxu0 %v432
    %3052 = vmatmul.mubr.f32.gmra.mrb[0].mxu0 %v431
    %v3053 = vpop.f32.mrb[0].mxu0
    %v3054 = vadd.f32 %v2893, %v3053
    %v3055 = vpop.f32.mrb[0].mxu0
    %v3056 = vadd.f32 %v2895, %v3055
    %3057 = vmatprep.mubr.f32.mxu0 %v456
    %3058 = vmatmul.mubr.f32.gmra.mrb[0].mxu0 %v455
    %v3059 = vpop.f32.mrb[0].mxu0
    %v3060 = vadd.f32 %v2899, %v3059
    %v3061 = vpop.f32.mrb[0].mxu0
    %v3062 = vadd.f32 %v2901, %v3061
    %3063 = vmatprep.mubr.f32.mxu0 %v480
    %3064 = vmatmul.mubr.f32.gmra.mrb[0].mxu0 %v479
    %v3065 = vpop.f32.mrb[0].mxu0
    %v3066 = vadd.f32 %v2905, %v3065
    %v3067 = vpop.f32.mrb[0].mxu0
    %v3068 = vadd.f32 %v2907, %v3067
    %3069 = vmatprep.mubr.f32.mxu0 %v504
    %3070 = vmatmul.mubr.f32.gmra.mrb[0].mxu0 %v503
    %v3071 = vpop.f32.mrb[0].mxu0
    %v3072 = vadd.f32 %v2911, %v3071
    %v3073 = vpop.f32.mrb[0].mxu0
    %v3074 = vadd.f32 %v2913, %v3073
    %3075 = vmatprep.mubr.f32.mxu0 %v528
    %3076 = vmatmul.mubr.f32.gmra.mrb[0].mxu0 %v527
    %v3077 = vpop.f32.mrb[0].mxu0
    %v3078 = vadd.f32 %v2917, %v3077
    %v3079 = vpop.f32.mrb[0].mxu0
    %v3080 = vadd.f32 %v2919, %v3079
    %3081 = vdwg.mxu0
    %3082 = vmatprep.subr.mxu0 %v1236
    %3083 = vmatpush1.msra.mxu0 %v1235
    %3084 = vmatprep.subr.mxu0 %v1238
    %3085 = vmatpush1.msra.mxu0 %v1237
    %3086 = vmatprep.subr.mxu0 %v1240
    %3087 = vmatpush1.msra.mxu0 %v1239
    %3088 = vmatprep.subr.mxu0 %v1242
    %3089 = vmatpush1.msra.mxu0 %v1241
    %3090 = vmatprep.subr.mxu0 %v1244
    %3091 = vmatpush1.msra.mxu0 %v1243
    %3092 = vmatprep.subr.mxu0 %v1246
    %3093 = vmatpush1.msra.mxu0 %v1245
    %3094 = vmatprep.subr.mxu0 %v1248
    %3095 = vmatpush1.msra.mxu0 %v1247
    %3096 = vmatprep.subr.mxu0 %v1250
    %3097 = vmatpush1.msra.mxu0 %v1249
    %3098 = vmatprep.subr.mxu0 %v1252
    %3099 = vmatpush1.msra.mxu0 %v1251
    %3100 = vmatprep.subr.mxu0 %v1254
    %3101 = vmatpush1.msra.mxu0 %v1253
    %3102 = vmatprep.subr.mxu0 %v1256
    %3103 = vmatpush1.msra.mxu0 %v1255
    %3104 = vmatprep.subr.mxu0 %v1258
    %3105 = vmatpush1.msra.mxu0 %v1257
    %3106 = vmatprep.subr.mxu0 %v1260
    %3107 = vmatpush1.msra.mxu0 %v1259
    %3108 = vmatprep.subr.mxu0 %v1262
    %3109 = vmatpush1.msra.mxu0 %v1261
    %3110 = vmatprep.subr.mxu0 %v1264
    %3111 = vmatpush1.msra.mxu0 %v1263
    %3112 = vmatprep.subr.mxu0 %v1266
    %3113 = vmatpush1.msra.mxu0 %v1265
    %3114 = vmatprep.subr.mxu0 %v1268
    %3115 = vmatpush1.msra.mxu0 %v1267
    %3116 = vmatprep.subr.mxu0 %v1270
    %3117 = vmatpush1.msra.mxu0 %v1269
    %3118 = vmatprep.subr.mxu0 %v1272
    %3119 = vmatpush1.msra.mxu0 %v1271
    %3120 = vmatprep.subr.mxu0 %v1274
    %3121 = vmatpush1.msra.mxu0 %v1273
    %3122 = vmatprep.subr.mxu0 %v1276
    %3123 = vmatpush1.msra.mxu0 %v1275
    %3124 = vmatprep.subr.mxu0 %v1278
    %3125 = vmatpush1.msra.mxu0 %v1277
    %3126 = vmatprep.subr.mxu0 %v1280
    %3127 = vmatpush1.msra.mxu0 %v1279
    %3128 = vmatprep.subr.mxu0 %v1282
    %3129 = vmatpush1.msra.mxu0 %v1281
    %3130 = vmatprep.subr.mxu0 %v1284
    %3131 = vmatpush1.msra.mxu0 %v1283
    %3132 = vmatprep.subr.mxu0 %v1286
    %3133 = vmatpush1.msra.mxu0 %v1285
    %3134 = vmatprep.subr.mxu0 %v1288
    %3135 = vmatpush1.msra.mxu0 %v1287
    %3136 = vmatprep.subr.mxu0 %v1290
    %3137 = vmatpush1.msra.mxu0 %v1289
    %3138 = vmatprep.subr.mxu0 %v1292
    %3139 = vmatpush1.msra.mxu0 %v1291
    %3140 = vmatprep.subr.mxu0 %v1294
    %3141 = vmatpush1.msra.mxu0 %v1293
    %3142 = vmatprep.subr.mxu0 %v1296
    %3143 = vmatpush1.msra.mxu0 %v1295
    %3144 = vmatprep.subr.mxu0 %v1298
    %3145 = vmatpush1.msra.mxu0 %v1297
    %3146 = vmatprep.mubr.f32.mxu0 %v170
    %3147 = vmatmul.mubr.f32.gmra.mrb[0].mxu0 %v169
    %v3148 = vpop.f32.mrb[0].mxu0
    %v3149 = vadd.f32 %v2988, %v3148
    %v3150 = vpop.f32.mrb[0].mxu0
    %v3151 = vadd.f32 %v2990, %v3150
    %3152 = vmatprep.mubr.f32.mxu0 %v194
    %3153 = vmatmul.mubr.f32.gmra.mrb[0].mxu0 %v193
    %v3154 = vpop.f32.mrb[0].mxu0
    %v3155 = vadd.f32 %v2994, %v3154
    %v3156 = vpop.f32.mrb[0].mxu0
    %v3157 = vadd.f32 %v2996, %v3156
    %3158 = vmatprep.mubr.f32.mxu0 %v218
    %3159 = vmatmul.mubr.f32.gmra.mrb[0].mxu0 %v217
    %v3160 = vpop.f32.mrb[0].mxu0
    %v3161 = vadd.f32 %v3000, %v3160
    %v3162 = vpop.f32.mrb[0].mxu0
    %v3163 = vadd.f32 %v3002, %v3162
    %3164 = vmatprep.mubr.f32.mxu0 %v242
    %3165 = vmatmul.mubr.f32.gmra.mrb[0].mxu0 %v241
    %v3166 = vpop.f32.mrb[0].mxu0
    %v3167 = vadd.f32 %v3006, %v3166
    %v3168 = vpop.f32.mrb[0].mxu0
    %v3169 = vadd.f32 %v3008, %v3168
    %3170 = vmatprep.mubr.f32.mxu0 %v266
    %3171 = vmatmul.mubr.f32.gmra.mrb[0].mxu0 %v265
    %v3172 = vpop.f32.mrb[0].mxu0
    %v3173 = vadd.f32 %v3012, %v3172
    %v3174 = vpop.f32.mrb[0].mxu0
    %v3175 = vadd.f32 %v3014, %v3174
    %3176 = vmatprep.mubr.f32.mxu0 %v290
    %3177 = vmatmul.mubr.f32.gmra.mrb[0].mxu0 %v289
    %v3178 = vpop.f32.mrb[0].mxu0
    %v3179 = vadd.f32 %v3018, %v3178
    %v3180 = vpop.f32.mrb[0].mxu0
    %v3181 = vadd.f32 %v3020, %v3180
    %3182 = vmatprep.mubr.f32.mxu0 %v314
    %3183 = vmatmul.mubr.f32.gmra.mrb[0].mxu0 %v313
    %v3184 = vpop.f32.mrb[0].mxu0
    %v3185 = vadd.f32 %v3024, %v3184
    %v3186 = vpop.f32.mrb[0].mxu0
    %v3187 = vadd.f32 %v3026, %v3186
    %3188 = vmatprep.mubr.f32.mxu0 %v338
    %3189 = vmatmul.mubr.f32.gmra.mrb[0].mxu0 %v337
    %v3190 = vpop.f32.mrb[0].mxu0
    %v3191 = vadd.f32 %v3030, %v3190
    %v3192 = vpop.f32.mrb[0].mxu0
    %v3193 = vadd.f32 %v3032, %v3192
    %3194 = vmatprep.mubr.f32.mxu0 %v362
    %3195 = vmatmul.mubr.f32.gmra.mrb[0].mxu0 %v361
    %v3196 = vpop.f32.mrb[0].mxu0
    %v3197 = vadd.f32 %v3036, %v3196
    %v3198 = vpop.f32.mrb[0].mxu0
    %v3199 = vadd.f32 %v3038, %v3198
    %3200 = vmatprep.mubr.f32.mxu0 %v386
    %3201 = vmatmul.mubr.f32.gmra.mrb[0].mxu0 %v385
    %v3202 = vpop.f32.mrb[0].mxu0
    %v3203 = vadd.f32 %v3042, %v3202
    %v3204 = vpop.f32.mrb[0].mxu0
    %v3205 = vadd.f32 %v3044, %v3204
    %3206 = vmatprep.mubr.f32.mxu0 %v410
    %3207 = vmatmul.mubr.f32.gmra.mrb[0].mxu0 %v409
    %v3208 = vpop.f32.mrb[0].mxu0
    %v3209 = vadd.f32 %v3048, %v3208
    %v3210 = vpop.f32.mrb[0].mxu0
    %v3211 = vadd.f32 %v3050, %v3210
    %3212 = vmatprep.mubr.f32.mxu0 %v434
    %3213 = vmatmul.mubr.f32.gmra.mrb[0].mxu0 %v433
    %v3214 = vpop.f32.mrb[0].mxu0
    %v3215 = vadd.f32 %v3054, %v3214
    %v3216 = vpop.f32.mrb[0].mxu0
    %v3217 = vadd.f32 %v3056, %v3216
    %3218 = vmatprep.mubr.f32.mxu0 %v458
    %3219 = vmatmul.mubr.f32.gmra.mrb[0].mxu0 %v457
    %v3220 = vpop.f32.mrb[0].mxu0
    %v3221 = vadd.f32 %v3060, %v3220
    %v3222 = vpop.f32.mrb[0].mxu0
    %v3223 = vadd.f32 %v3062, %v3222
    %3224 = vmatprep.mubr.f32.mxu0 %v482
    %3225 = vmatmul.mubr.f32.gmra.mrb[0].mxu0 %v481
    %v3226 = vpop.f32.mrb[0].mxu0
    %v3227 = vadd.f32 %v3066, %v3226
    %v3228 = vpop.f32.mrb[0].mxu0
    %v3229 = vadd.f32 %v3068, %v3228
    %3230 = vmatprep.mubr.f32.mxu0 %v506
    %3231 = vmatmul.mubr.f32.gmra.mrb[0].mxu0 %v505
    %v3232 = vpop.f32.mrb[0].mxu0
    %v3233 = vadd.f32 %v3072, %v3232
    %v3234 = vpop.f32.mrb[0].mxu0
    %v3235 = vadd.f32 %v3074, %v3234
    %3236 = vmatprep.mubr.f32.mxu0 %v530
    %3237 = vmatmul.mubr.f32.gmra.mrb[0].mxu0 %v529
    %v3238 = vpop.f32.mrb[0].mxu0
    %v3239 = vadd.f32 %v3078, %v3238
    %v3240 = vpop.f32.mrb[0].mxu0
    %v3241 = vadd.f32 %v3080, %v3240
    %3242 = vdwg.mxu0
    %v3243 = vmax.f32 %v3149, 0.0
    %v3244 = vmax.f32 %v3151, 0.0
    %v3245 = vmax.f32 %v3155, 0.0
    %v3246 = vmax.f32 %v3157, 0.0
    %v3247 = vmax.f32 %v3161, 0.0
    %v3248 = vmax.f32 %v3163, 0.0
    %v3249 = vmax.f32 %v3167, 0.0
    %v3250 = vmax.f32 %v3169, 0.0
    %v3251 = vmax.f32 %v3173, 0.0
    %v3252 = vmax.f32 %v3175, 0.0
    %v3253 = vmax.f32 %v3179, 0.0
    %v3254 = vmax.f32 %v3181, 0.0
    %v3255 = vmax.f32 %v3185, 0.0
    %v3256 = vmax.f32 %v3187, 0.0
    %v3257 = vmax.f32 %v3191, 0.0
    %v3258 = vmax.f32 %v3193, 0.0
    %v3259 = vmax.f32 %v3197, 0.0
    %v3260 = vmax.f32 %v3199, 0.0
    %v3261 = vmax.f32 %v3203, 0.0
    %v3262 = vmax.f32 %v3205, 0.0
    %v3263 = vmax.f32 %v3209, 0.0
    %v3264 = vmax.f32 %v3211, 0.0
    %v3265 = vmax.f32 %v3215, 0.0
    %v3266 = vmax.f32 %v3217, 0.0
    %v3267 = vmax.f32 %v3221, 0.0
    %v3268 = vmax.f32 %v3223, 0.0
    %v3269 = vmax.f32 %v3227, 0.0
    %v3270 = vmax.f32 %v3229, 0.0
    %v3271 = vmax.f32 %v3233, 0.0
    %v3272 = vmax.f32 %v3235, 0.0
    %v3273 = vmax.f32 %v3239, 0.0
    %v3274 = vmax.f32 %v3241, 0.0
    %v3275 = vld [vmem:[#allocation8] sm:$0xff]
    %v3276 = vld [vmem:[#allocation8 + $0x8] sm:$0xff]
    %v3277 = vld [vmem:[#allocation8 + $0x10] sm:$0xff]
    %v3278 = vld [vmem:[#allocation8 + $0x18] sm:$0xff]
    %v3279 = vld [vmem:[#allocation8 + $0x20] sm:$0xff]
    %v3280 = vld [vmem:[#allocation8 + $0x28] sm:$0xff]
    %v3281 = vld [vmem:[#allocation8 + $0x30] sm:$0xff]
    %v3282 = vld [vmem:[#allocation8 + $0x38] sm:$0xff]
    %v3283 = vld [vmem:[#allocation8 + $0x40] sm:$0xff]
    %v3284 = vld [vmem:[#allocation8 + $0x48] sm:$0xff]
    %v3285 = vld [vmem:[#allocation8 + $0x50] sm:$0xff]
    %v3286 = vld [vmem:[#allocation8 + $0x58] sm:$0xff]
    %v3287 = vld [vmem:[#allocation8 + $0x60] sm:$0xff]
    %v3288 = vld [vmem:[#allocation8 + $0x68] sm:$0xff]
    %v3289 = vld [vmem:[#allocation8 + $0x70] sm:$0xff]
    %v3290 = vld [vmem:[#allocation8 + $0x78] sm:$0xff]
    %v3291 = vld [vmem:[#allocation8 + $0x80] sm:$0xff]
    %v3292 = vld [vmem:[#allocation8 + $0x88] sm:$0xff]
    %v3293 = vld [vmem:[#allocation8 + $0x90] sm:$0xff]
    %v3294 = vld [vmem:[#allocation8 + $0x98] sm:$0xff]
    %v3295 = vld [vmem:[#allocation8 + $0xa0] sm:$0xff]
    %v3296 = vld [vmem:[#allocation8 + $0xa8] sm:$0xff]
    %v3297 = vld [vmem:[#allocation8 + $0xb0] sm:$0xff]
    %v3298 = vld [vmem:[#allocation8 + $0xb8] sm:$0xff]
    %v3299 = vld [vmem:[#allocation8 + $0xc0] sm:$0xff]
    %v3300 = vld [vmem:[#allocation8 + $0xc8] sm:$0xff]
    %v3301 = vld [vmem:[#allocation8 + $0xd0] sm:$0xff]
    %v3302 = vld [vmem:[#allocation8 + $0xd8] sm:$0xff]
    %v3303 = vld [vmem:[#allocation8 + $0xe0] sm:$0xff]
    %v3304 = vld [vmem:[#allocation8 + $0xe8] sm:$0xff]
    %v3305 = vld [vmem:[#allocation8 + $0xf0] sm:$0xff]
    %v3306 = vld [vmem:[#allocation8 + $0xf8] sm:$0xff]
    %v3307 = vld [vmem:[#allocation8 + $0x100] sm:$0xff]
    %v3308 = vld [vmem:[#allocation8 + $0x108] sm:$0xff]
    %v3309 = vld [vmem:[#allocation8 + $0x110] sm:$0xff]
    %v3310 = vld [vmem:[#allocation8 + $0x118] sm:$0xff]
    %v3311 = vld [vmem:[#allocation8 + $0x120] sm:$0xff]
    %v3312 = vld [vmem:[#allocation8 + $0x128] sm:$0xff]
    %v3313 = vld [vmem:[#allocation8 + $0x130] sm:$0xff]
    %v3314 = vld [vmem:[#allocation8 + $0x138] sm:$0xff]
    %v3315 = vld [vmem:[#allocation8 + $0x140] sm:$0xff]
    %v3316 = vld [vmem:[#allocation8 + $0x148] sm:$0xff]
    %v3317 = vld [vmem:[#allocation8 + $0x150] sm:$0xff]
    %v3318 = vld [vmem:[#allocation8 + $0x158] sm:$0xff]
    %v3319 = vld [vmem:[#allocation8 + $0x160] sm:$0xff]
    %v3320 = vld [vmem:[#allocation8 + $0x168] sm:$0xff]
    %v3321 = vld [vmem:[#allocation8 + $0x170] sm:$0xff]
    %v3322 = vld [vmem:[#allocation8 + $0x178] sm:$0xff]
    %v3323 = vld [vmem:[#allocation8 + $0x180] sm:$0xff]
    %v3324 = vld [vmem:[#allocation8 + $0x188] sm:$0xff]
    %v3325 = vld [vmem:[#allocation8 + $0x190] sm:$0xff]
    %v3326 = vld [vmem:[#allocation8 + $0x198] sm:$0xff]
    %v3327 = vld [vmem:[#allocation8 + $0x1a0] sm:$0xff]
    %v3328 = vld [vmem:[#allocation8 + $0x1a8] sm:$0xff]
    %v3329 = vld [vmem:[#allocation8 + $0x1b0] sm:$0xff]
    %v3330 = vld [vmem:[#allocation8 + $0x1b8] sm:$0xff]
    %v3331 = vld [vmem:[#allocation8 + $0x1c0] sm:$0xff]
    %v3332 = vld [vmem:[#allocation8 + $0x1c8] sm:$0xff]
    %v3333 = vld [vmem:[#allocation8 + $0x1d0] sm:$0xff]
    %v3334 = vld [vmem:[#allocation8 + $0x1d8] sm:$0xff]
    %v3335 = vld [vmem:[#allocation8 + $0x1e0] sm:$0xff]
    %v3336 = vld [vmem:[#allocation8 + $0x1e8] sm:$0xff]
    %v3337 = vld [vmem:[#allocation8 + $0x1f0] sm:$0xff]
    %v3338 = vld [vmem:[#allocation8 + $0x1f8] sm:$0xff]
    %v3339 = vld [vmem:[#allocation10] sm:$0x3]
    %v3341 = vlaneseq
    %v3342 = vshrl.u32 %v3341, 7
    %v3343 = vsub.s32 0, %v3342
    %v3344 = vrot.slane %v3339, %v3343
    %v3345 = vlaneseq
    %v3346 = vshrl.u32 %v3345, 7
    %v3347 = vsub.s32 1, %v3346
    %v3348 = vrot.slane %v3339, %v3347
    %3351 = vmatprep.subr.mxu0 %v3276
    %3352 = vmatpush1.msra.mxu0 %v3275
    %3353 = vmatprep.subr.mxu0 %v3278
    %3354 = vmatpush1.msra.mxu0 %v3277
    %3355 = vmatprep.subr.mxu0 %v3280
    %3356 = vmatpush1.msra.mxu0 %v3279
    %3357 = vmatprep.subr.mxu0 %v3282
    %3358 = vmatpush1.msra.mxu0 %v3281
    %3359 = vmatprep.subr.mxu0 %v3284
    %3360 = vmatpush1.msra.mxu0 %v3283
    %3361 = vmatprep.subr.mxu0 %v3286
    %3362 = vmatpush1.msra.mxu0 %v3285
    %3363 = vmatprep.subr.mxu0 %v3288
    %3364 = vmatpush1.msra.mxu0 %v3287
    %3365 = vmatprep.subr.mxu0 %v3290
    %3366 = vmatpush1.msra.mxu0 %v3289
    %3367 = vmatprep.subr.mxu0 %v3292
    %3368 = vmatpush1.msra.mxu0 %v3291
    %3369 = vmatprep.subr.mxu0 %v3294
    %3370 = vmatpush1.msra.mxu0 %v3293
    %3371 = vmatprep.subr.mxu0 %v3296
    %3372 = vmatpush1.msra.mxu0 %v3295
    %3373 = vmatprep.subr.mxu0 %v3298
    %3374 = vmatpush1.msra.mxu0 %v3297
    %3375 = vmatprep.subr.mxu0 %v3300
    %3376 = vmatpush1.msra.mxu0 %v3299
    %3377 = vmatprep.subr.mxu0 %v3302
    %3378 = vmatpush1.msra.mxu0 %v3301
    %3379 = vmatprep.subr.mxu0 %v3304
    %3380 = vmatpush1.msra.mxu0 %v3303
    %3381 = vmatprep.subr.mxu0 %v3306
    %3382 = vmatpush1.msra.mxu0 %v3305
    %3383 = vmatprep.subr.mxu0 %v3308
    %3384 = vmatpush1.msra.mxu0 %v3307
    %3385 = vmatprep.subr.mxu0 %v3310
    %3386 = vmatpush1.msra.mxu0 %v3309
    %3387 = vmatprep.subr.mxu0 %v3312
    %3388 = vmatpush1.msra.mxu0 %v3311
    %3389 = vmatprep.subr.mxu0 %v3314
    %3390 = vmatpush1.msra.mxu0 %v3313
    %3391 = vmatprep.subr.mxu0 %v3316
    %3392 = vmatpush1.msra.mxu0 %v3315
    %3393 = vmatprep.subr.mxu0 %v3318
    %3394 = vmatpush1.msra.mxu0 %v3317
    %3395 = vmatprep.subr.mxu0 %v3320
    %3396 = vmatpush1.msra.mxu0 %v3319
    %3397 = vmatprep.subr.mxu0 %v3322
    %3398 = vmatpush1.msra.mxu0 %v3321
    %3399 = vmatprep.subr.mxu0 %v3324
    %3400 = vmatpush1.msra.mxu0 %v3323
    %3401 = vmatprep.subr.mxu0 %v3326
    %3402 = vmatpush1.msra.mxu0 %v3325
    %3403 = vmatprep.subr.mxu0 %v3328
    %3404 = vmatpush1.msra.mxu0 %v3327
    %3405 = vmatprep.subr.mxu0 %v3330
    %3406 = vmatpush1.msra.mxu0 %v3329
    %3407 = vmatprep.subr.mxu0 %v3332
    %3408 = vmatpush1.msra.mxu0 %v3331
    %3409 = vmatprep.subr.mxu0 %v3334
    %3410 = vmatpush1.msra.mxu0 %v3333
    %3411 = vmatprep.subr.mxu0 %v3336
    %3412 = vmatpush1.msra.mxu0 %v3335
    %3413 = vmatprep.subr.mxu0 %v3338
    %3414 = vmatpush1.msra.mxu0 %v3337
    %3415 = vmatprep.mubr.f32.mxu0 %v3244
    %3416 = vmatmul.mubr.f32.gmra.mrb[0].mxu0 %v3243
    %v3417 = vpop.f32.mrb[0].mxu0
    %v3418 = vadd.f32 %v3344, %v3417
    %v3419 = vpop.f32.mrb[0].mxu0
    %v3420 = vadd.f32 %v3348, %v3419
    %3421 = vmatprep.mubr.f32.mxu0 %v3246
    %3422 = vmatmul.mubr.f32.gmra.mrb[0].mxu0 %v3245
    %v3423 = vpop.f32.mrb[0].mxu0
    %v3424 = vadd.f32 %v3344, %v3423
    %v3425 = vpop.f32.mrb[0].mxu0
    %v3426 = vadd.f32 %v3348, %v3425
    %3427 = vmatprep.mubr.f32.mxu0 %v3248
    %3428 = vmatmul.mubr.f32.gmra.mrb[0].mxu0 %v3247
    %v3429 = vpop.f32.mrb[0].mxu0
    %v3430 = vadd.f32 %v3344, %v3429
    %v3431 = vpop.f32.mrb[0].mxu0
    %v3432 = vadd.f32 %v3348, %v3431
    %3433 = vmatprep.mubr.f32.mxu0 %v3250
    %3434 = vmatmul.mubr.f32.gmra.mrb[0].mxu0 %v3249
    %v3435 = vpop.f32.mrb[0].mxu0
    %v3436 = vadd.f32 %v3344, %v3435
    %v3437 = vpop.f32.mrb[0].mxu0
    %v3438 = vadd.f32 %v3348, %v3437
    %3439 = vmatprep.mubr.f32.mxu0 %v3252
    %3440 = vmatmul.mubr.f32.gmra.mrb[0].mxu0 %v3251
    %v3441 = vpop.f32.mrb[0].mxu0
    %v3442 = vadd.f32 %v3344, %v3441
    %v3443 = vpop.f32.mrb[0].mxu0
    %v3444 = vadd.f32 %v3348, %v3443
    %3445 = vmatprep.mubr.f32.mxu0 %v3254
    %3446 = vmatmul.mubr.f32.gmra.mrb[0].mxu0 %v3253
    %v3447 = vpop.f32.mrb[0].mxu0
    %v3448 = vadd.f32 %v3344, %v3447
    %v3449 = vpop.f32.mrb[0].mxu0
    %v3450 = vadd.f32 %v3348, %v3449
    %3451 = vmatprep.mubr.f32.mxu0 %v3256
    %3452 = vmatmul.mubr.f32.gmra.mrb[0].mxu0 %v3255
    %v3453 = vpop.f32.mrb[0].mxu0
    %v3454 = vadd.f32 %v3344, %v3453
    %v3455 = vpop.f32.mrb[0].mxu0
    %v3456 = vadd.f32 %v3348, %v3455
    %3457 = vmatprep.mubr.f32.mxu0 %v3258
    %3458 = vmatmul.mubr.f32.gmra.mrb[0].mxu0 %v3257
    %v3459 = vpop.f32.mrb[0].mxu0
    %v3460 = vadd.f32 %v3344, %v3459
    %v3461 = vpop.f32.mrb[0].mxu0
    %v3462 = vadd.f32 %v3348, %v3461
    %3463 = vmatprep.mubr.f32.mxu0 %v3260
    %3464 = vmatmul.mubr.f32.gmra.mrb[0].mxu0 %v3259
    %v3465 = vpop.f32.mrb[0].mxu0
    %v3466 = vadd.f32 %v3344, %v3465
    %v3467 = vpop.f32.mrb[0].mxu0
    %v3468 = vadd.f32 %v3348, %v3467
    %3469 = vmatprep.mubr.f32.mxu0 %v3262
    %3470 = vmatmul.mubr.f32.gmra.mrb[0].mxu0 %v3261
    %v3471 = vpop.f32.mrb[0].mxu0
    %v3472 = vadd.f32 %v3344, %v3471
    %v3473 = vpop.f32.mrb[0].mxu0
    %v3474 = vadd.f32 %v3348, %v3473
    %3475 = vmatprep.mubr.f32.mxu0 %v3264
    %3476 = vmatmul.mubr.f32.gmra.mrb[0].mxu0 %v3263
    %v3477 = vpop.f32.mrb[0].mxu0
    %v3478 = vadd.f32 %v3344, %v3477
    %v3479 = vpop.f32.mrb[0].mxu0
    %v3480 = vadd.f32 %v3348, %v3479
    %3481 = vmatprep.mubr.f32.mxu0 %v3266
    %3482 = vmatmul.mubr.f32.gmra.mrb[0].mxu0 %v3265
    %v3483 = vpop.f32.mrb[0].mxu0
    %v3484 = vadd.f32 %v3344, %v3483
    %v3485 = vpop.f32.mrb[0].mxu0
    %v3486 = vadd.f32 %v3348, %v3485
    %3487 = vmatprep.mubr.f32.mxu0 %v3268
    %3488 = vmatmul.mubr.f32.gmra.mrb[0].mxu0 %v3267
    %v3489 = vpop.f32.mrb[0].mxu0
    %v3490 = vadd.f32 %v3344, %v3489
    %v3491 = vpop.f32.mrb[0].mxu0
    %v3492 = vadd.f32 %v3348, %v3491
    %3493 = vmatprep.mubr.f32.mxu0 %v3270
    %3494 = vmatmul.mubr.f32.gmra.mrb[0].mxu0 %v3269
    %v3495 = vpop.f32.mrb[0].mxu0
    %v3496 = vadd.f32 %v3344, %v3495
    %v3497 = vpop.f32.mrb[0].mxu0
    %v3498 = vadd.f32 %v3348, %v3497
    %3499 = vmatprep.mubr.f32.mxu0 %v3272
    %3500 = vmatmul.mubr.f32.gmra.mrb[0].mxu0 %v3271
    %v3501 = vpop.f32.mrb[0].mxu0
    %v3502 = vadd.f32 %v3344, %v3501
    %v3503 = vpop.f32.mrb[0].mxu0
    %v3504 = vadd.f32 %v3348, %v3503
    %3505 = vmatprep.mubr.f32.mxu0 %v3274
    %3506 = vmatmul.mubr.f32.gmra.mrb[0].mxu0 %v3273
    %v3507 = vpop.f32.mrb[0].mxu0
    %v3508 = vadd.f32 %v3344, %v3507
    %v3509 = vpop.f32.mrb[0].mxu0
    %v3510 = vadd.f32 %v3348, %v3509
    %3511 = vdwg.mxu0
    %v3512 = vmax.f32 %v3418, 0.0
    %v3513 = vmax.f32 %v3420, 0.0
    %v3514 = vmax.f32 %v3424, 0.0
    %v3515 = vmax.f32 %v3426, 0.0
    %v3516 = vmax.f32 %v3430, 0.0
    %v3517 = vmax.f32 %v3432, 0.0
    %v3518 = vmax.f32 %v3436, 0.0
    %v3519 = vmax.f32 %v3438, 0.0
    %v3520 = vmax.f32 %v3442, 0.0
    %v3521 = vmax.f32 %v3444, 0.0
    %v3522 = vmax.f32 %v3448, 0.0
    %v3523 = vmax.f32 %v3450, 0.0
    %v3524 = vmax.f32 %v3454, 0.0
    %v3525 = vmax.f32 %v3456, 0.0
    %v3526 = vmax.f32 %v3460, 0.0
    %v3527 = vmax.f32 %v3462, 0.0
    %v3528 = vmax.f32 %v3466, 0.0
    %v3529 = vmax.f32 %v3468, 0.0
    %v3530 = vmax.f32 %v3472, 0.0
    %v3531 = vmax.f32 %v3474, 0.0
    %v3532 = vmax.f32 %v3478, 0.0
    %v3533 = vmax.f32 %v3480, 0.0
    %v3534 = vmax.f32 %v3484, 0.0
    %v3535 = vmax.f32 %v3486, 0.0
    %v3536 = vmax.f32 %v3490, 0.0
    %v3537 = vmax.f32 %v3492, 0.0
    %v3538 = vmax.f32 %v3496, 0.0
    %v3539 = vmax.f32 %v3498, 0.0
    %v3540 = vmax.f32 %v3502, 0.0
    %v3541 = vmax.f32 %v3504, 0.0
    %v3542 = vmax.f32 %v3508, 0.0
    %v3543 = vmax.f32 %v3510, 0.0
    %v3544 = vld [vmem:[#allocation11] sm:$0xff]
    %v3545 = vld [vmem:[#allocation11 + $0x8] sm:$0xff]
    %v3546 = vld [vmem:[#allocation11 + $0x10] sm:$0xff]
    %v3547 = vld [vmem:[#allocation11 + $0x18] sm:$0xff]
    %v3548 = vld [vmem:[#allocation11 + $0x20] sm:$0xff]
    %v3549 = vld [vmem:[#allocation11 + $0x28] sm:$0xff]
    %v3550 = vld [vmem:[#allocation11 + $0x30] sm:$0xff]
    %v3551 = vld [vmem:[#allocation11 + $0x38] sm:$0xff]
    %v3552 = vld [vmem:[#allocation11 + $0x40] sm:$0xff]
    %v3553 = vld [vmem:[#allocation11 + $0x48] sm:$0xff]
    %v3554 = vld [vmem:[#allocation11 + $0x50] sm:$0xff]
    %v3555 = vld [vmem:[#allocation11 + $0x58] sm:$0xff]
    %v3556 = vld [vmem:[#allocation11 + $0x60] sm:$0xff]
    %v3557 = vld [vmem:[#allocation11 + $0x68] sm:$0xff]
    %v3558 = vld [vmem:[#allocation11 + $0x70] sm:$0xff]
    %v3559 = vld [vmem:[#allocation11 + $0x78] sm:$0xff]
    %v3560 = vld [vmem:[#allocation11 + $0x80] sm:$0xff]
    %v3561 = vld [vmem:[#allocation11 + $0x88] sm:$0xff]
    %v3562 = vld [vmem:[#allocation11 + $0x90] sm:$0xff]
    %v3563 = vld [vmem:[#allocation11 + $0x98] sm:$0xff]
    %v3564 = vld [vmem:[#allocation11 + $0xa0] sm:$0xff]
    %v3565 = vld [vmem:[#allocation11 + $0xa8] sm:$0xff]
    %v3566 = vld [vmem:[#allocation11 + $0xb0] sm:$0xff]
    %v3567 = vld [vmem:[#allocation11 + $0xb8] sm:$0xff]
    %v3568 = vld [vmem:[#allocation11 + $0xc0] sm:$0xff]
    %v3569 = vld [vmem:[#allocation11 + $0xc8] sm:$0xff]
    %v3570 = vld [vmem:[#allocation11 + $0xd0] sm:$0xff]
    %v3571 = vld [vmem:[#allocation11 + $0xd8] sm:$0xff]
    %v3572 = vld [vmem:[#allocation11 + $0xe0] sm:$0xff]
    %v3573 = vld [vmem:[#allocation11 + $0xe8] sm:$0xff]
    %v3574 = vld [vmem:[#allocation11 + $0xf0] sm:$0xff]
    %v3575 = vld [vmem:[#allocation11 + $0xf8] sm:$0xff]
    %v3576 = vld [vmem:[#allocation11 + $0x100] sm:$0xff]
    %v3577 = vld [vmem:[#allocation11 + $0x108] sm:$0xff]
    %v3578 = vld [vmem:[#allocation11 + $0x110] sm:$0xff]
    %v3579 = vld [vmem:[#allocation11 + $0x118] sm:$0xff]
    %v3580 = vld [vmem:[#allocation11 + $0x120] sm:$0xff]
    %v3581 = vld [vmem:[#allocation11 + $0x128] sm:$0xff]
    %v3582 = vld [vmem:[#allocation11 + $0x130] sm:$0xff]
    %v3583 = vld [vmem:[#allocation11 + $0x138] sm:$0xff]
    %v3584 = vld [vmem:[#allocation11 + $0x140] sm:$0xff]
    %v3585 = vld [vmem:[#allocation11 + $0x148] sm:$0xff]
    %v3586 = vld [vmem:[#allocation11 + $0x150] sm:$0xff]
    %v3587 = vld [vmem:[#allocation11 + $0x158] sm:$0xff]
    %v3588 = vld [vmem:[#allocation11 + $0x160] sm:$0xff]
    %v3589 = vld [vmem:[#allocation11 + $0x168] sm:$0xff]
    %v3590 = vld [vmem:[#allocation11 + $0x170] sm:$0xff]
    %v3591 = vld [vmem:[#allocation11 + $0x178] sm:$0xff]
    %v3592 = vld [vmem:[#allocation11 + $0x180] sm:$0xff]
    %v3593 = vld [vmem:[#allocation11 + $0x188] sm:$0xff]
    %v3594 = vld [vmem:[#allocation11 + $0x190] sm:$0xff]
    %v3595 = vld [vmem:[#allocation11 + $0x198] sm:$0xff]
    %v3596 = vld [vmem:[#allocation11 + $0x1a0] sm:$0xff]
    %v3597 = vld [vmem:[#allocation11 + $0x1a8] sm:$0xff]
    %v3598 = vld [vmem:[#allocation11 + $0x1b0] sm:$0xff]
    %v3599 = vld [vmem:[#allocation11 + $0x1b8] sm:$0xff]
    %v3600 = vld [vmem:[#allocation11 + $0x1c0] sm:$0xff]
    %v3601 = vld [vmem:[#allocation11 + $0x1c8] sm:$0xff]
    %v3602 = vld [vmem:[#allocation11 + $0x1d0] sm:$0xff]
    %v3603 = vld [vmem:[#allocation11 + $0x1d8] sm:$0xff]
    %v3604 = vld [vmem:[#allocation11 + $0x1e0] sm:$0xff]
    %v3605 = vld [vmem:[#allocation11 + $0x1e8] sm:$0xff]
    %v3606 = vld [vmem:[#allocation11 + $0x1f0] sm:$0xff]
    %v3607 = vld [vmem:[#allocation11 + $0x1f8] sm:$0xff]
    %v3608 = vld [vmem:[#allocation13] sm:$0x3]
    %v3610 = vlaneseq
    %v3611 = vshrl.u32 %v3610, 7
    %v3612 = vsub.s32 0, %v3611
    %v3613 = vrot.slane %v3608, %v3612
    %v3614 = vlaneseq
    %v3615 = vshrl.u32 %v3614, 7
    %v3616 = vsub.s32 1, %v3615
    %v3617 = vrot.slane %v3608, %v3616
    %3620 = vmatprep.subr.mxu0 %v3545
    %3621 = vmatpush1.msra.mxu0 %v3544
    %3622 = vmatprep.subr.mxu0 %v3547
    %3623 = vmatpush1.msra.mxu0 %v3546
    %3624 = vmatprep.subr.mxu0 %v3549
    %3625 = vmatpush1.msra.mxu0 %v3548
    %3626 = vmatprep.subr.mxu0 %v3551
    %3627 = vmatpush1.msra.mxu0 %v3550
    %3628 = vmatprep.subr.mxu0 %v3553
    %3629 = vmatpush1.msra.mxu0 %v3552
    %3630 = vmatprep.subr.mxu0 %v3555
    %3631 = vmatpush1.msra.mxu0 %v3554
    %3632 = vmatprep.subr.mxu0 %v3557
    %3633 = vmatpush1.msra.mxu0 %v3556
    %3634 = vmatprep.subr.mxu0 %v3559
    %3635 = vmatpush1.msra.mxu0 %v3558
    %3636 = vmatprep.subr.mxu0 %v3561
    %3637 = vmatpush1.msra.mxu0 %v3560
    %3638 = vmatprep.subr.mxu0 %v3563
    %3639 = vmatpush1.msra.mxu0 %v3562
    %3640 = vmatprep.subr.mxu0 %v3565
    %3641 = vmatpush1.msra.mxu0 %v3564
    %3642 = vmatprep.subr.mxu0 %v3567
    %3643 = vmatpush1.msra.mxu0 %v3566
    %3644 = vmatprep.subr.mxu0 %v3569
    %3645 = vmatpush1.msra.mxu0 %v3568
    %3646 = vmatprep.subr.mxu0 %v3571
    %3647 = vmatpush1.msra.mxu0 %v3570
    %3648 = vmatprep.subr.mxu0 %v3573
    %3649 = vmatpush1.msra.mxu0 %v3572
    %3650 = vmatprep.subr.mxu0 %v3575
    %3651 = vmatpush1.msra.mxu0 %v3574
    %3652 = vmatprep.subr.mxu0 %v3577
    %3653 = vmatpush1.msra.mxu0 %v3576
    %3654 = vmatprep.subr.mxu0 %v3579
    %3655 = vmatpush1.msra.mxu0 %v3578
    %3656 = vmatprep.subr.mxu0 %v3581
    %3657 = vmatpush1.msra.mxu0 %v3580
    %3658 = vmatprep.subr.mxu0 %v3583
    %3659 = vmatpush1.msra.mxu0 %v3582
    %3660 = vmatprep.subr.mxu0 %v3585
    %3661 = vmatpush1.msra.mxu0 %v3584
    %3662 = vmatprep.subr.mxu0 %v3587
    %3663 = vmatpush1.msra.mxu0 %v3586
    %3664 = vmatprep.subr.mxu0 %v3589
    %3665 = vmatpush1.msra.mxu0 %v3588
    %3666 = vmatprep.subr.mxu0 %v3591
    %3667 = vmatpush1.msra.mxu0 %v3590
    %3668 = vmatprep.subr.mxu0 %v3593
    %3669 = vmatpush1.msra.mxu0 %v3592
    %3670 = vmatprep.subr.mxu0 %v3595
    %3671 = vmatpush1.msra.mxu0 %v3594
    %3672 = vmatprep.subr.mxu0 %v3597
    %3673 = vmatpush1.msra.mxu0 %v3596
    %3674 = vmatprep.subr.mxu0 %v3599
    %3675 = vmatpush1.msra.mxu0 %v3598
    %3676 = vmatprep.subr.mxu0 %v3601
    %3677 = vmatpush1.msra.mxu0 %v3600
    %3678 = vmatprep.subr.mxu0 %v3603
    %3679 = vmatpush1.msra.mxu0 %v3602
    %3680 = vmatprep.subr.mxu0 %v3605
    %3681 = vmatpush1.msra.mxu0 %v3604
    %3682 = vmatprep.subr.mxu0 %v3607
    %3683 = vmatpush1.msra.mxu0 %v3606
    %3684 = vmatprep.mubr.f32.mxu0 %v3513
    %3685 = vmatmul.mubr.f32.gmra.mrb[0].mxu0 %v3512
    %v3686 = vpop.f32.mrb[0].mxu0
    %v3687 = vadd.f32 %v3613, %v3686
    %v3688 = vpop.f32.mrb[0].mxu0
    %v3689 = vadd.f32 %v3617, %v3688
    %3690 = vmatprep.mubr.f32.mxu0 %v3515
    %3691 = vmatmul.mubr.f32.gmra.mrb[0].mxu0 %v3514
    %v3692 = vpop.f32.mrb[0].mxu0
    %v3693 = vadd.f32 %v3613, %v3692
    %v3694 = vpop.f32.mrb[0].mxu0
    %v3695 = vadd.f32 %v3617, %v3694
    %3696 = vmatprep.mubr.f32.mxu0 %v3517
    %3697 = vmatmul.mubr.f32.gmra.mrb[0].mxu0 %v3516
    %v3698 = vpop.f32.mrb[0].mxu0
    %v3699 = vadd.f32 %v3613, %v3698
    %v3700 = vpop.f32.mrb[0].mxu0
    %v3701 = vadd.f32 %v3617, %v3700
    %3702 = vmatprep.mubr.f32.mxu0 %v3519
    %3703 = vmatmul.mubr.f32.gmra.mrb[0].mxu0 %v3518
    %v3704 = vpop.f32.mrb[0].mxu0
    %v3705 = vadd.f32 %v3613, %v3704
    %v3706 = vpop.f32.mrb[0].mxu0
    %v3707 = vadd.f32 %v3617, %v3706
    %3708 = vmatprep.mubr.f32.mxu0 %v3521
    %3709 = vmatmul.mubr.f32.gmra.mrb[0].mxu0 %v3520
    %v3710 = vpop.f32.mrb[0].mxu0
    %v3711 = vadd.f32 %v3613, %v3710
    %v3712 = vpop.f32.mrb[0].mxu0
    %v3713 = vadd.f32 %v3617, %v3712
    %3714 = vmatprep.mubr.f32.mxu0 %v3523
    %3715 = vmatmul.mubr.f32.gmra.mrb[0].mxu0 %v3522
    %v3716 = vpop.f32.mrb[0].mxu0
    %v3717 = vadd.f32 %v3613, %v3716
    %v3718 = vpop.f32.mrb[0].mxu0
    %v3719 = vadd.f32 %v3617, %v3718
    %3720 = vmatprep.mubr.f32.mxu0 %v3525
    %3721 = vmatmul.mubr.f32.gmra.mrb[0].mxu0 %v3524
    %v3722 = vpop.f32.mrb[0].mxu0
    %v3723 = vadd.f32 %v3613, %v3722
    %v3724 = vpop.f32.mrb[0].mxu0
    %v3725 = vadd.f32 %v3617, %v3724
    %3726 = vmatprep.mubr.f32.mxu0 %v3527
    %3727 = vmatmul.mubr.f32.gmra.mrb[0].mxu0 %v3526
    %v3728 = vpop.f32.mrb[0].mxu0
    %v3729 = vadd.f32 %v3613, %v3728
    %v3730 = vpop.f32.mrb[0].mxu0
    %v3731 = vadd.f32 %v3617, %v3730
    %3732 = vmatprep.mubr.f32.mxu0 %v3529
    %3733 = vmatmul.mubr.f32.gmra.mrb[0].mxu0 %v3528
    %v3734 = vpop.f32.mrb[0].mxu0
    %v3735 = vadd.f32 %v3613, %v3734
    %v3736 = vpop.f32.mrb[0].mxu0
    %v3737 = vadd.f32 %v3617, %v3736
    %3738 = vmatprep.mubr.f32.mxu0 %v3531
    %3739 = vmatmul.mubr.f32.gmra.mrb[0].mxu0 %v3530
    %v3740 = vpop.f32.mrb[0].mxu0
    %v3741 = vadd.f32 %v3613, %v3740
    %v3742 = vpop.f32.mrb[0].mxu0
    %v3743 = vadd.f32 %v3617, %v3742
    %3744 = vmatprep.mubr.f32.mxu0 %v3533
    %3745 = vmatmul.mubr.f32.gmra.mrb[0].mxu0 %v3532
    %v3746 = vpop.f32.mrb[0].mxu0
    %v3747 = vadd.f32 %v3613, %v3746
    %v3748 = vpop.f32.mrb[0].mxu0
    %v3749 = vadd.f32 %v3617, %v3748
    %3750 = vmatprep.mubr.f32.mxu0 %v3535
    %3751 = vmatmul.mubr.f32.gmra.mrb[0].mxu0 %v3534
    %v3752 = vpop.f32.mrb[0].mxu0
    %v3753 = vadd.f32 %v3613, %v3752
    %v3754 = vpop.f32.mrb[0].mxu0
    %v3755 = vadd.f32 %v3617, %v3754
    %3756 = vmatprep.mubr.f32.mxu0 %v3537
    %3757 = vmatmul.mubr.f32.gmra.mrb[0].mxu0 %v3536
    %v3758 = vpop.f32.mrb[0].mxu0
    %v3759 = vadd.f32 %v3613, %v3758
    %v3760 = vpop.f32.mrb[0].mxu0
    %v3761 = vadd.f32 %v3617, %v3760
    %3762 = vmatprep.mubr.f32.mxu0 %v3539
    %3763 = vmatmul.mubr.f32.gmra.mrb[0].mxu0 %v3538
    %v3764 = vpop.f32.mrb[0].mxu0
    %v3765 = vadd.f32 %v3613, %v3764
    %v3766 = vpop.f32.mrb[0].mxu0
    %v3767 = vadd.f32 %v3617, %v3766
    %3768 = vmatprep.mubr.f32.mxu0 %v3541
    %3769 = vmatmul.mubr.f32.gmra.mrb[0].mxu0 %v3540
    %v3770 = vpop.f32.mrb[0].mxu0
    %v3771 = vadd.f32 %v3613, %v3770
    %v3772 = vpop.f32.mrb[0].mxu0
    %v3773 = vadd.f32 %v3617, %v3772
    %3774 = vmatprep.mubr.f32.mxu0 %v3543
    %3775 = vmatmul.mubr.f32.gmra.mrb[0].mxu0 %v3542
    %v3776 = vpop.f32.mrb[0].mxu0
    %v3777 = vadd.f32 %v3613, %v3776
    %v3778 = vpop.f32.mrb[0].mxu0
    %v3779 = vadd.f32 %v3617, %v3778
    %3780 = vdwg.mxu0
    %v3781 = vmax.f32 %v3687, 0.0
    %v3782 = vmax.f32 %v3689, 0.0
    %v3783 = vmax.f32 %v3693, 0.0
    %v3784 = vmax.f32 %v3695, 0.0
    %v3785 = vmax.f32 %v3699, 0.0
    %v3786 = vmax.f32 %v3701, 0.0
    %v3787 = vmax.f32 %v3705, 0.0
    %v3788 = vmax.f32 %v3707, 0.0
    %v3789 = vmax.f32 %v3711, 0.0
    %v3790 = vmax.f32 %v3713, 0.0
    %v3791 = vmax.f32 %v3717, 0.0
    %v3792 = vmax.f32 %v3719, 0.0
    %v3793 = vmax.f32 %v3723, 0.0
    %v3794 = vmax.f32 %v3725, 0.0
    %v3795 = vmax.f32 %v3729, 0.0
    %v3796 = vmax.f32 %v3731, 0.0
    %v3797 = vmax.f32 %v3735, 0.0
    %v3798 = vmax.f32 %v3737, 0.0
    %v3799 = vmax.f32 %v3741, 0.0
    %v3800 = vmax.f32 %v3743, 0.0
    %v3801 = vmax.f32 %v3747, 0.0
    %v3802 = vmax.f32 %v3749, 0.0
    %v3803 = vmax.f32 %v3753, 0.0
    %v3804 = vmax.f32 %v3755, 0.0
    %v3805 = vmax.f32 %v3759, 0.0
    %v3806 = vmax.f32 %v3761, 0.0
    %v3807 = vmax.f32 %v3765, 0.0
    %v3808 = vmax.f32 %v3767, 0.0
    %v3809 = vmax.f32 %v3771, 0.0
    %v3810 = vmax.f32 %v3773, 0.0
    %v3811 = vmax.f32 %v3777, 0.0
    %v3812 = vmax.f32 %v3779, 0.0
    %v3813 = vld [vmem:[#allocation14] sm:$0xff]
    %v3814 = vld [vmem:[#allocation14 + $0x8] sm:$0xff]
    %v3815 = vld [vmem:[#allocation14 + $0x10] sm:$0xff]
    %v3816 = vld [vmem:[#allocation14 + $0x18] sm:$0xff]
    %v3817 = vld [vmem:[#allocation14 + $0x20] sm:$0xff]
    %v3818 = vld [vmem:[#allocation14 + $0x28] sm:$0xff]
    %v3819 = vld [vmem:[#allocation14 + $0x30] sm:$0xff]
    %v3820 = vld [vmem:[#allocation14 + $0x38] sm:$0xff]
    %v3821 = vld [vmem:[#allocation14 + $0x40] sm:$0xff]
    %v3822 = vld [vmem:[#allocation14 + $0x48] sm:$0xff]
    %v3823 = vld [vmem:[#allocation14 + $0x50] sm:$0xff]
    %v3824 = vld [vmem:[#allocation14 + $0x58] sm:$0xff]
    %v3825 = vld [vmem:[#allocation14 + $0x60] sm:$0xff]
    %v3826 = vld [vmem:[#allocation14 + $0x68] sm:$0xff]
    %v3827 = vld [vmem:[#allocation14 + $0x70] sm:$0xff]
    %v3828 = vld [vmem:[#allocation14 + $0x78] sm:$0xff]
    %v3829 = vld [vmem:[#allocation14 + $0x80] sm:$0xff]
    %v3830 = vld [vmem:[#allocation14 + $0x88] sm:$0xff]
    %v3831 = vld [vmem:[#allocation14 + $0x90] sm:$0xff]
    %v3832 = vld [vmem:[#allocation14 + $0x98] sm:$0xff]
    %v3833 = vld [vmem:[#allocation14 + $0xa0] sm:$0xff]
    %v3834 = vld [vmem:[#allocation14 + $0xa8] sm:$0xff]
    %v3835 = vld [vmem:[#allocation14 + $0xb0] sm:$0xff]
    %v3836 = vld [vmem:[#allocation14 + $0xb8] sm:$0xff]
    %v3837 = vld [vmem:[#allocation14 + $0xc0] sm:$0xff]
    %v3838 = vld [vmem:[#allocation14 + $0xc8] sm:$0xff]
    %v3839 = vld [vmem:[#allocation14 + $0xd0] sm:$0xff]
    %v3840 = vld [vmem:[#allocation14 + $0xd8] sm:$0xff]
    %v3841 = vld [vmem:[#allocation14 + $0xe0] sm:$0xff]
    %v3842 = vld [vmem:[#allocation14 + $0xe8] sm:$0xff]
    %v3843 = vld [vmem:[#allocation14 + $0xf0] sm:$0xff]
    %v3844 = vld [vmem:[#allocation14 + $0xf8] sm:$0xff]
    %v3845 = vld [vmem:[#allocation16] sm:$0x1]
    %v3847 = vlaneseq
    %v3848 = vshrl.u32 %v3847, 7
    %v3849 = vsub.s32 0, %v3848
    %v3850 = vrot.slane %v3845, %v3849
    %3852 = vmatprep.subr.mxu0 0.0
    %3853 = vmatpush1.msra.mxu0 %v3813
    %3854 = vmatprep.subr.mxu0 0.0
    %3855 = vmatpush1.msra.mxu0 %v3814
    %3856 = vmatprep.subr.mxu0 0.0
    %3857 = vmatpush1.msra.mxu0 %v3815
    %3858 = vmatprep.subr.mxu0 0.0
    %3859 = vmatpush1.msra.mxu0 %v3816
    %3860 = vmatprep.subr.mxu0 0.0
    %3861 = vmatpush1.msra.mxu0 %v3817
    %3862 = vmatprep.subr.mxu0 0.0
    %3863 = vmatpush1.msra.mxu0 %v3818
    %3864 = vmatprep.subr.mxu0 0.0
    %3865 = vmatpush1.msra.mxu0 %v3819
    %3866 = vmatprep.subr.mxu0 0.0
    %3867 = vmatpush1.msra.mxu0 %v3820
    %3868 = vmatprep.subr.mxu0 0.0
    %3869 = vmatpush1.msra.mxu0 %v3821
    %3870 = vmatprep.subr.mxu0 0.0
    %3871 = vmatpush1.msra.mxu0 %v3822
    %3872 = vmatprep.subr.mxu0 0.0
    %3873 = vmatpush1.msra.mxu0 %v3823
    %3874 = vmatprep.subr.mxu0 0.0
    %3875 = vmatpush1.msra.mxu0 %v3824
    %3876 = vmatprep.subr.mxu0 0.0
    %3877 = vmatpush1.msra.mxu0 %v3825
    %3878 = vmatprep.subr.mxu0 0.0
    %3879 = vmatpush1.msra.mxu0 %v3826
    %3880 = vmatprep.subr.mxu0 0.0
    %3881 = vmatpush1.msra.mxu0 %v3827
    %3882 = vmatprep.subr.mxu0 0.0
    %3883 = vmatpush1.msra.mxu0 %v3828
    %3884 = vmatprep.subr.mxu0 0.0
    %3885 = vmatpush1.msra.mxu0 %v3829
    %3886 = vmatprep.subr.mxu0 0.0
    %3887 = vmatpush1.msra.mxu0 %v3830
    %3888 = vmatprep.subr.mxu0 0.0
    %3889 = vmatpush1.msra.mxu0 %v3831
    %3890 = vmatprep.subr.mxu0 0.0
    %3891 = vmatpush1.msra.mxu0 %v3832
    %3892 = vmatprep.subr.mxu0 0.0
    %3893 = vmatpush1.msra.mxu0 %v3833
    %3894 = vmatprep.subr.mxu0 0.0
    %3895 = vmatpush1.msra.mxu0 %v3834
    %3896 = vmatprep.subr.mxu0 0.0
    %3897 = vmatpush1.msra.mxu0 %v3835
    %3898 = vmatprep.subr.mxu0 0.0
    %3899 = vmatpush1.msra.mxu0 %v3836
    %3900 = vmatprep.subr.mxu0 0.0
    %3901 = vmatpush1.msra.mxu0 %v3837
    %3902 = vmatprep.subr.mxu0 0.0
    %3903 = vmatpush1.msra.mxu0 %v3838
    %3904 = vmatprep.subr.mxu0 0.0
    %3905 = vmatpush1.msra.mxu0 %v3839
    %3906 = vmatprep.subr.mxu0 0.0
    %3907 = vmatpush1.msra.mxu0 %v3840
    %3908 = vmatprep.subr.mxu0 0.0
    %3909 = vmatpush1.msra.mxu0 %v3841
    %3910 = vmatprep.subr.mxu0 0.0
    %3911 = vmatpush1.msra.mxu0 %v3842
    %3912 = vmatprep.subr.mxu0 0.0
    %3913 = vmatpush1.msra.mxu0 %v3843
    %3914 = vmatprep.subr.mxu0 0.0
    %3915 = vmatpush1.msra.mxu0 %v3844
    %3916 = vmatprep.mubr.f32.mxu0 %v3782
    %3917 = vmatmul.mubr.f32.gmra.mrb[0].mxu0 %v3781
    %v3918 = vpop.f32.mrb[0].mxu0
    %v3919 = vadd.f32 %v3850, %v3918
    %v3920 = vpop.f32.mrb[0].mxu0
    %3921 = vmatprep.mubr.f32.mxu0 %v3784
    %3922 = vmatmul.mubr.f32.gmra.mrb[0].mxu0 %v3783
    %v3923 = vpop.f32.mrb[0].mxu0
    %v3924 = vadd.f32 %v3850, %v3923
    %v3925 = vpop.f32.mrb[0].mxu0
    %3926 = vmatprep.mubr.f32.mxu0 %v3786
    %3927 = vmatmul.mubr.f32.gmra.mrb[0].mxu0 %v3785
    %v3928 = vpop.f32.mrb[0].mxu0
    %v3929 = vadd.f32 %v3850, %v3928
    %v3930 = vpop.f32.mrb[0].mxu0
    %3931 = vmatprep.mubr.f32.mxu0 %v3788
    %3932 = vmatmul.mubr.f32.gmra.mrb[0].mxu0 %v3787
    %v3933 = vpop.f32.mrb[0].mxu0
    %v3934 = vadd.f32 %v3850, %v3933
    %v3935 = vpop.f32.mrb[0].mxu0
    %3936 = vmatprep.mubr.f32.mxu0 %v3790
    %3937 = vmatmul.mubr.f32.gmra.mrb[0].mxu0 %v3789
    %v3938 = vpop.f32.mrb[0].mxu0
    %v3939 = vadd.f32 %v3850, %v3938
    %v3940 = vpop.f32.mrb[0].mxu0
    %3941 = vmatprep.mubr.f32.mxu0 %v3792
    %3942 = vmatmul.mubr.f32.gmra.mrb[0].mxu0 %v3791
    %v3943 = vpop.f32.mrb[0].mxu0
    %v3944 = vadd.f32 %v3850, %v3943
    %v3945 = vpop.f32.mrb[0].mxu0
    %3946 = vmatprep.mubr.f32.mxu0 %v3794
    %3947 = vmatmul.mubr.f32.gmra.mrb[0].mxu0 %v3793
    %v3948 = vpop.f32.mrb[0].mxu0
    %v3949 = vadd.f32 %v3850, %v3948
    %v3950 = vpop.f32.mrb[0].mxu0
    %3951 = vmatprep.mubr.f32.mxu0 %v3796
    %3952 = vmatmul.mubr.f32.gmra.mrb[0].mxu0 %v3795
    %v3953 = vpop.f32.mrb[0].mxu0
    %v3954 = vadd.f32 %v3850, %v3953
    %v3955 = vpop.f32.mrb[0].mxu0
    %3956 = vmatprep.mubr.f32.mxu0 %v3798
    %3957 = vmatmul.mubr.f32.gmra.mrb[0].mxu0 %v3797
    %v3958 = vpop.f32.mrb[0].mxu0
    %v3959 = vadd.f32 %v3850, %v3958
    %v3960 = vpop.f32.mrb[0].mxu0
    %3961 = vmatprep.mubr.f32.mxu0 %v3800
    %3962 = vmatmul.mubr.f32.gmra.mrb[0].mxu0 %v3799
    %v3963 = vpop.f32.mrb[0].mxu0
    %v3964 = vadd.f32 %v3850, %v3963
    %v3965 = vpop.f32.mrb[0].mxu0
    %3966 = vmatprep.mubr.f32.mxu0 %v3802
    %3967 = vmatmul.mubr.f32.gmra.mrb[0].mxu0 %v3801
    %v3968 = vpop.f32.mrb[0].mxu0
    %v3969 = vadd.f32 %v3850, %v3968
    %v3970 = vpop.f32.mrb[0].mxu0
    %3971 = vmatprep.mubr.f32.mxu0 %v3804
    %3972 = vmatmul.mubr.f32.gmra.mrb[0].mxu0 %v3803
    %v3973 = vpop.f32.mrb[0].mxu0
    %v3974 = vadd.f32 %v3850, %v3973
    %v3975 = vpop.f32.mrb[0].mxu0
    %3976 = vmatprep.mubr.f32.mxu0 %v3806
    %3977 = vmatmul.mubr.f32.gmra.mrb[0].mxu0 %v3805
    %v3978 = vpop.f32.mrb[0].mxu0
    %v3979 = vadd.f32 %v3850, %v3978
    %v3980 = vpop.f32.mrb[0].mxu0
    %3981 = vmatprep.mubr.f32.mxu0 %v3808
    %3982 = vmatmul.mubr.f32.gmra.mrb[0].mxu0 %v3807
    %v3983 = vpop.f32.mrb[0].mxu0
    %v3984 = vadd.f32 %v3850, %v3983
    %v3985 = vpop.f32.mrb[0].mxu0
    %3986 = vmatprep.mubr.f32.mxu0 %v3810
    %3987 = vmatmul.mubr.f32.gmra.mrb[0].mxu0 %v3809
    %v3988 = vpop.f32.mrb[0].mxu0
    %v3989 = vadd.f32 %v3850, %v3988
    %v3990 = vpop.f32.mrb[0].mxu0
    %3991 = vmatprep.mubr.f32.mxu0 %v3812
    %3992 = vmatmul.mubr.f32.gmra.mrb[0].mxu0 %v3811
    %v3993 = vpop.f32.mrb[0].mxu0
    %v3994 = vadd.f32 %v3850, %v3993
    %v3995 = vpop.f32.mrb[0].mxu0
    %3996 = vdwg.mxu0
    %3997 = vst [vmem:[#allocation17] sm:$0xff] %v3919
    %3998 = vst [vmem:[#allocation17 + $0x8] sm:$0xff] %v3924
    %3999 = vst [vmem:[#allocation17 + $0x10] sm:$0xff] %v3929
    %4000 = vst [vmem:[#allocation17 + $0x18] sm:$0xff] %v3934
    %4001 = vst [vmem:[#allocation17 + $0x20] sm:$0xff] %v3939
    %4002 = vst [vmem:[#allocation17 + $0x28] sm:$0xff] %v3944
    %4003 = vst [vmem:[#allocation17 + $0x30] sm:$0xff] %v3949
    %4004 = vst [vmem:[#allocation17 + $0x38] sm:$0xff] %v3954
    %4005 = vst [vmem:[#allocation17 + $0x40] sm:$0xff] %v3959
    %4006 = vst [vmem:[#allocation17 + $0x48] sm:$0xff] %v3964
    %4007 = vst [vmem:[#allocation17 + $0x50] sm:$0xff] %v3969
    %4008 = vst [vmem:[#allocation17 + $0x58] sm:$0xff] %v3974
    %4009 = vst [vmem:[#allocation17 + $0x60] sm:$0xff] %v3979
    %4010 = vst [vmem:[#allocation17 + $0x68] sm:$0xff] %v3984
    %4011 = vst [vmem:[#allocation17 + $0x70] sm:$0xff] %v3989
    %4012 = vst [vmem:[#allocation17 + $0x78] sm:$0xff] %v3994
    // Predicated region
    $region74: #{tpu_custom_call.1} parent=1 // pred_check
      _
    $region75: #{tpu_custom_call.1} parent=1 // pred_check_branch
      %4014 = sbr.rel (0) target = $region77
    $region76: #{tpu_custom_call.1} parent=1 // pred_region
      %s4016 = ssub.s32 2048, 2048
      %4017 = vsyncadd [#allocation4], %s4016
      %s4018 = sshll.u32 [#allocation17], 4
      %s4019 = int_to_ptr.vmem [resolvable:$true] %s4018
      %4024 = dma.vmem_to_hbm [thread:$0]  %s4019, 2048, %s9, [#allocation4], 128, 128, 8
    $region77: #{tpu_custom_call.1} parent=1 // pred_fallthru
      _
    // Predicated region
    $region78: #{tpu_custom_call.1} parent=1 // pred_check
      _
    $region79: #{tpu_custom_call.1} parent=1 // pred_check_branch
      %4026 = sbr.rel (0) target = $region81
    $region80: #{tpu_custom_call.1} parent=1 // pred_region
      %4027 = dma.done [#allocation4], 2048
    $region81: #{tpu_custom_call.1} parent=1 // pred_fallthru
      _
    %4028 = vsyncpa [#allocation3], 1
    %4029 = vsyncpa [#allocation6], 1
    %4030 = vsyncpa [#allocation9], 1
    %4031 = vsyncpa [#allocation12], 1
    %4032 = vsyncpa [#allocation15], 1
    %4033 = vsyncpa [#allocation4], 1

</llo_original>
